<compile_context>
chip_gen: v5e
topology: v5e:2x2
jax: 0.10.0
libtpu: 0.0.40
codegen_flags: <defaults>
</compile_context>

<pallas_src>
import functools

import jax
import jax.numpy as jnp
from jax.experimental import pallas as pl
from jax.experimental.pallas import tpu as pltpu


# ----------------------------------------------------------------------------
# Fused kernel: conv1 + ReLU + conv2 + ReLU + fc1 + ReLU + 4 output heads
# ----------------------------------------------------------------------------
def _qnet_kernel(p1_ref, w1_ref, b1_ref, w2_ref, b2_ref, wf_ref, bf1_ref,
                 wh_ref, bh_ref, out_ref, h1_ref):
    f32 = jnp.float32

    # Zero the padded tail of the conv1 activation scratch (rows 400..415);
    # conv2's padded spatial slots may read these rows (values are masked out
    # later by zero fc1 weights, but they must be finite).
    h1_ref[pl.ds(400, 16), :] = jnp.zeros((16, 128), f32)

    # ---- conv1 as matmul: (400, 256) @ (256, 128); lanes >= 16 are zero pad.
    # Row order of p1 / h1:  r = (oh%2*2 + ow%2)*100 + (oh//2)*10 + (ow//2)
    for row0, nrows in ((0, 208), (208, 192)):
        a = p1_ref[pl.ds(row0, nrows), :]                         # bf16
        acc = jnp.dot(a, w1_ref[...], preferred_element_type=f32)
        acc = jnp.maximum(acc + b1_ref[...], 0.0)                 # bias+ReLU f32
        h1_ref[pl.ds(row0, nrows), :] = acc

    # ---- conv2: 16 kernel offsets, each one contiguous 96-row slice of h1.
    # Output is produced transposed: rows = out-channels (32 real of 128),
    # lanes = spatial s = i*10 + j (81 real of 96).
    acc2 = jnp.zeros((128, 96), f32)
    for o in range(16):
        di, dj = o // 4, o % 4
        qi, ri = di // 2, di % 2
        qj, rj = dj // 2, dj % 2
        start = (ri * 2 + rj) * 100 + qi * 10 + qj
        h1s = h1_ref[pl.ds(start, 96), :].astype(jnp.bfloat16)    # (96, 128)
        acc2 = acc2 + jax.lax.dot_general(
            w2_ref[o], h1s,
            dimension_numbers=(((1,), (1,)), ((), ())),           # contract c_in
            preferred_element_type=f32)                           # (128, 96)
    h2t = jnp.maximum(acc2 + b2_ref[...], 0.0).astype(jnp.bfloat16)

    # ---- fc1: contract channels (rows) and spatial (lanes).  Padded / junk
    # spatial slots have exactly-zero weights in wf, so they contribute 0.
    fc1 = jnp.zeros((1, 256), f32)
    for c in range(32):
        fc1 = fc1 + jnp.dot(h2t[c:c + 1, :], wf_ref[c],
                            preferred_element_type=f32)           # (1,96)@(96,256)
    fc1 = jnp.maximum(fc1 + bf1_ref[...], 0.0).astype(jnp.bfloat16)

    # ---- all 4 output heads in one matmul; lanes 0..3 hold the real heads.
    heads = jnp.dot(fc1, wh_ref[...], preferred_element_type=f32) + bh_ref[...]
    out_ref[...] = heads


def _fused_heads(p1, kp):
    return pl.pallas_call(
        _qnet_kernel,
        out_shape=jax.ShapeDtypeStruct((1, 128), jnp.float32),
        in_specs=[pl.BlockSpec(memory_space=pltpu.MemorySpace.VMEM)] * 9,
        out_specs=pl.BlockSpec(memory_space=pltpu.MemorySpace.VMEM),
        scratch_shapes=[pltpu.VMEM((416, 128), jnp.float32)],
        cost_estimate=pl.CostEstimate(flops=78_000_000, transcendentals=0,
                                      bytes_accessed=3_000_000),
    )(p1, kp["w1"], kp["b1"], kp["w2"], kp["b2"],
      kp["wf"], kp["bf1"], kp["wh"], kp["bh"])


# ----------------------------------------------------------------------------
# Wrapper-side conv1 im2col: pure reshape / static slice / transpose (no gather)
# ----------------------------------------------------------------------------
def _conv1_patches(x):
    """x: (4, 84, 84) f32 -> conv1 patch matrix (400, 256) bf16.

    Row order:     r = (oh%2*2 + ow%2)*100 + (oh//2)*10 + (ow//2)
    Feature order: f = (bi*2 + bj)*64 + c*16 + r4*4 + s4  (kh=4*bi+r4, kw=4*bj+s4)
    """
    x4 = x.reshape(4, 21, 4, 21, 4).transpose(1, 3, 0, 2, 4).reshape(21, 21, 64)
    blocks = []
    for bi in (0, 1):
        for bj in (0, 1):
            blk = x4[bi:bi + 20, bj:bj + 20, :]                    # (20, 20, 64)
            blk = blk.reshape(10, 2, 10, 2, 64).transpose(1, 3, 0, 2, 4)
            blocks.append(blk.reshape(400, 64))
    return jnp.concatenate(blocks, axis=-1).astype(jnp.bfloat16)   # (400, 256)


def _all_heads(kparams, pre_processed_obs):
    assert pre_processed_obs.shape == (1, 4, 84, 84)  # batch must be 1 (reshape(-1))
    x = pre_processed_obs[0].astype(jnp.float32)
    p1 = _conv1_patches(x)
    return _fused_heads(p1, kparams)                               # (1, 128)


_all_heads_jit = jax.jit(_all_heads)


@functools.partial(jax.jit, static_argnames=("a_idx",))
def q_module_forward(kparams, pre_processed_obs, a_idx):
    heads = _all_heads(kparams, pre_processed_obs)
    idx = a_idx if a_idx in (0, 1, 2) else 3                       # static branch
    return heads[0, idx].reshape(1)


# ----------------------------------------------------------------------------
# Parameter init (mirrors Q_Module.element_init) + one-time kernel packing
# ----------------------------------------------------------------------------
def init_params(key, a_dim=4):
    ks = jax.random.split(key, 3 + a_dim)

    def xavier_uniform(k, shape):
        out_c, in_c, kh, kw = shape
        bound = (6.0 / (in_c * kh * kw + out_c * kh * kw)) ** 0.5
        return jax.random.uniform(k, shape, jnp.float32, -bound, bound)

    return {
        "conv1_w": xavier_uniform(ks[0], (16, 4, 8, 8)),
        "conv1_b": jnp.zeros((16,), jnp.float32),
        "conv2_w": xavier_uniform(ks[1], (32, 16, 4, 4)),
        "conv2_b": jnp.zeros((32,), jnp.float32),
        "fc1_w": jax.random.normal(ks[2], (256, 32 * 9 * 9), jnp.float32),
        "fc1_b": jnp.zeros((256,), jnp.float32),
        "out_w": [jax.random.normal(ks[3 + i], (1, 256), jnp.float32)
                  for i in range(a_dim)],
        "out_b": [jnp.zeros((1,), jnp.float32) for _ in range(a_dim)],
    }


def prepare_kernel_params(params):
    """One-time repack of PyTorch-layout weights into kernel layouts."""
    # conv1: (16,4,8,8) -> (256,128): feature order (bi,bj,c,r4,s4), padded lanes.
    w1 = params["conv1_w"].reshape(16, 4, 2, 4, 2, 4).transpose(2, 4, 1, 3, 5, 0)
    w1 = jnp.pad(w1.reshape(256, 16), ((0, 0), (0, 112))).astype(jnp.bfloat16)
    b1 = jnp.pad(params["conv1_b"], (0, 112)).reshape(1, 128).astype(jnp.float32)
    # conv2: (32,16,4,4) -> (16 offsets, 128 c_out, 128 c_in), zero padded.
    w2 = params["conv2_w"].transpose(2, 3, 0, 1).reshape(16, 32, 16)
    w2 = jnp.pad(w2, ((0, 0), (0, 96), (0, 112))).astype(jnp.bfloat16)
    b2 = jnp.pad(params["conv2_b"], (0, 96)).reshape(128, 1).astype(jnp.float32)
    # fc1: (256, 2592) -> (32 channels, 96 spatial slots, 256); junk slots = 0.
    wf = params["fc1_w"].T.reshape(32, 9, 9, 256)
    wf = jnp.pad(wf, ((0, 0), (0, 0), (0, 1), (0, 0))).reshape(32, 90, 256)
    wf = jnp.pad(wf, ((0, 0), (0, 6), (0, 0))).astype(jnp.bfloat16)
    bf1 = params["fc1_b"].reshape(1, 256).astype(jnp.float32)
    # 4 output heads stacked into one (256,128) matrix (lanes 0..3 real).
    wh = jnp.concatenate(params["out_w"], axis=0).T                 # (256, 4)
    wh = jnp.pad(wh, ((0, 0), (0, 124))).astype(jnp.bfloat16)
    bh = jnp.pad(jnp.concatenate(params["out_b"]), (0, 124)).reshape(1, 128)
    bh = bh.astype(jnp.float32)
    return {"w1": w1, "b1": b1, "w2": w2, "b2": b2,
            "wf": wf, "bf1": bf1, "wh": wh, "bh": bh}


# ----------------------------------------------------------------------------
# Plain-JAX float32 reference (for correctness check)
# ----------------------------------------------------------------------------
def reference_forward(params, obs):
    y = jax.lax.conv_general_dilated(
        obs.astype(jnp.float32), params["conv1_w"], (4, 4), "VALID",
        dimension_numbers=("NCHW", "OIHW", "NCHW"))
    y = jax.nn.relu(y + params["conv1_b"][None, :, None, None])
    y = jax.lax.conv_general_dilated(
        y, params["conv2_w"], (2, 2), "VALID",
        dimension_numbers=("NCHW", "OIHW", "NCHW"))
    y = jax.nn.relu(y + params["conv2_b"][None, :, None, None])
    feat = y.reshape(-1)                                            # (2592,)
    h = jax.nn.relu(params["fc1_w"] @ feat + params["fc1_b"])       # (256,)
    heads = [params["out_w"][a] @ h + params["out_b"][a] for a in range(4)]
    return jnp.concatenate(heads)                                   # (4,)


if __name__ == "__main__":
    key = jax.random.PRNGKey(0)
    pkey, xkey = jax.random.split(key)

    a_dim = 4
    params = init_params(pkey, a_dim=a_dim)
    kparams = prepare_kernel_params(params)

    # Input: batch=1, 4 stacked frames, 84x84 (required so the conv stack yields
    # the 32*9*9 feature vector expected by fc1).
    x = jax.random.uniform(xkey, (1, 4, 84, 84), jnp.float32)
    a_idx = 2

    action_value = q_module_forward(kparams, x, a_idx)
    action_value = jax.block_until_ready(action_value)
    assert action_value.shape == (1,)
    assert bool(jnp.isfinite(action_value).all())

    # Sanity check vs. float32 reference (kernel uses bf16 matmul inputs with
    # f32 accumulation -> loose, scale-aware tolerance).
    ref_heads = reference_forward(params, x)                        # (4,)
    kern_heads = jax.block_until_ready(_all_heads_jit(kparams, x))[0, :4]
    scale = 1.0 + float(jnp.max(jnp.abs(ref_heads)))
    max_diff = float(jnp.max(jnp.abs(kern_heads - ref_heads)))
    assert max_diff <= 0.1 * scale, (max_diff, scale)
    assert abs(float(action_value[0]) - float(ref_heads[a_idx])) <= 0.1 * scale

    print("KERNEL_OK")
</pallas_src>

<mosaic_0001>
module attributes {stable_mosaic.version = 11 : i64} {
  func.func @_qnet_kernel(%arg0: memref<400x256xbf16, #tpu.memory_space<vmem>>, %arg1: memref<256x128xbf16, #tpu.memory_space<vmem>>, %arg2: memref<1x128xf32, #tpu.memory_space<vmem>>, %arg3: memref<16x128x128xbf16, #tpu.memory_space<vmem>>, %arg4: memref<128x1xf32, #tpu.memory_space<vmem>>, %arg5: memref<32x96x256xbf16, #tpu.memory_space<vmem>>, %arg6: memref<1x256xf32, #tpu.memory_space<vmem>>, %arg7: memref<256x128xbf16, #tpu.memory_space<vmem>>, %arg8: memref<1x128xf32, #tpu.memory_space<vmem>>, %arg9: memref<1x128xf32, #tpu.memory_space<vmem>>, %arg10: memref<416x128xf32, #tpu.memory_space<vmem>>) attributes {dimension_semantics = [], scalar_prefetch = 0 : i64, scratch_operands = 1 : i64, tpu.core_type = #tpu.core_type<tc>} {
    %cst = arith.constant 0.000000e+00 : f32
    %0 = vector.broadcast %cst : f32 to vector<16x128xf32>
    %c400 = arith.constant 400 : index
    %c0 = arith.constant 0 : index
    %1 = vector.load %arg10[%c400, %c0] : memref<416x128xf32, #tpu.memory_space<vmem>>, vector<16x128xf32>
    tpu.vector_store %arg10[%c400, %c0], %0 {strides = array<i32>} : memref<416x128xf32, #tpu.memory_space<vmem>>, vector<16x128xf32>,
    %c0_0 = arith.constant 0 : index
    %c0_1 = arith.constant 0 : index
    %2 = vector.load %arg0[%c0_0, %c0_1] : memref<400x256xbf16, #tpu.memory_space<vmem>>, vector<208x256xbf16>
    %c0_2 = arith.constant 0 : index
    %c0_3 = arith.constant 0 : index
    %3 = vector.load %arg1[%c0_2, %c0_3] : memref<256x128xbf16, #tpu.memory_space<vmem>>, vector<256x128xbf16>
    %cst_4 = arith.constant dense<0.000000e+00> : vector<208x128xf32>
    %4 = tpu.matmul %2, %3, %cst_4 {dimension_numbers = #tpu.dot_dimension_numbers<[1], [0], [0], [1], [0, 0, 1, 1], [], []>} : vector<208x256xbf16>, vector<256x128xbf16>, vector<208x128xf32> -> vector<208x128xf32>
    %c0_5 = arith.constant 0 : index
    %c0_6 = arith.constant 0 : index
    %5 = vector.load %arg2[%c0_5, %c0_6] : memref<1x128xf32, #tpu.memory_space<vmem>>, vector<1x128xf32>
    %6 = vector.broadcast %5 : vector<1x128xf32> to vector<208x128xf32>
    %7 = arith.addf %4, %6 : vector<208x128xf32>
    %cst_7 = arith.constant 0.000000e+00 : f32
    %8 = vector.broadcast %cst_7 : f32 to vector<208x128xf32>
    %9 = arith.maximumf %7, %8 : vector<208x128xf32>
    %c0_8 = arith.constant 0 : index
    %c0_9 = arith.constant 0 : index
    %10 = vector.load %arg10[%c0_8, %c0_9] : memref<416x128xf32, #tpu.memory_space<vmem>>, vector<208x128xf32>
    tpu.vector_store %arg10[%c0_8, %c0_9], %9 {strides = array<i32>} : memref<416x128xf32, #tpu.memory_space<vmem>>, vector<208x128xf32>,
    %c208 = arith.constant 208 : index
    %c0_10 = arith.constant 0 : index
    %11 = vector.load %arg0[%c208, %c0_10] : memref<400x256xbf16, #tpu.memory_space<vmem>>, vector<192x256xbf16>
    %c0_11 = arith.constant 0 : index
    %c0_12 = arith.constant 0 : index
    %12 = vector.load %arg1[%c0_11, %c0_12] : memref<256x128xbf16, #tpu.memory_space<vmem>>, vector<256x128xbf16>
    %cst_13 = arith.constant dense<0.000000e+00> : vector<192x128xf32>
    %13 = tpu.matmul %11, %12, %cst_13 {dimension_numbers = #tpu.dot_dimension_numbers<[1], [0], [0], [1], [0, 0, 1, 1], [], []>} : vector<192x256xbf16>, vector<256x128xbf16>, vector<192x128xf32> -> vector<192x128xf32>
    %c0_14 = arith.constant 0 : index
    %c0_15 = arith.constant 0 : index
    %14 = vector.load %arg2[%c0_14, %c0_15] : memref<1x128xf32, #tpu.memory_space<vmem>>, vector<1x128xf32>
    %15 = vector.broadcast %14 : vector<1x128xf32> to vector<192x128xf32>
    %16 = arith.addf %13, %15 : vector<192x128xf32>
    %cst_16 = arith.constant 0.000000e+00 : f32
    %17 = vector.broadcast %cst_16 : f32 to vector<192x128xf32>
    %18 = arith.maximumf %16, %17 : vector<192x128xf32>
    %c208_17 = arith.constant 208 : index
    %c0_18 = arith.constant 0 : index
    %19 = vector.load %arg10[%c208_17, %c0_18] : memref<416x128xf32, #tpu.memory_space<vmem>>, vector<192x128xf32>
    tpu.vector_store %arg10[%c208_17, %c0_18], %18 {strides = array<i32>} : memref<416x128xf32, #tpu.memory_space<vmem>>, vector<192x128xf32>,
    %cst_19 = arith.constant 0.000000e+00 : f32
    %20 = vector.broadcast %cst_19 : f32 to vector<128x96xf32>
    %c0_20 = arith.constant 0 : index
    %c0_21 = arith.constant 0 : index
    %21 = vector.load %arg10[%c0_20, %c0_21] : memref<416x128xf32, #tpu.memory_space<vmem>>, vector<96x128xf32>
    %22 = arith.truncf %21 : vector<96x128xf32> to vector<96x128xbf16>
    %c0_22 = arith.constant 0 : index
    %c0_23 = arith.constant 0 : index
    %c0_24 = arith.constant 0 : index
    %23 = vector.load %arg3[%c0_22, %c0_23, %c0_24] : memref<16x128x128xbf16, #tpu.memory_space<vmem>>, vector<1x128x128xbf16>
    %24 = vector.shape_cast %23 : vector<1x128x128xbf16> to vector<128x128xbf16>
    %cst_25 = arith.constant dense<0.000000e+00> : vector<128x96xf32>
    %25 = tpu.matmul %24, %22, %cst_25 {dimension_numbers = #tpu.dot_dimension_numbers<[1], [1], [0], [0], [0, 0, 1, 0], [], []>} : vector<128x128xbf16>, vector<96x128xbf16>, vector<128x96xf32> -> vector<128x96xf32>
    %26 = arith.addf %20, %25 : vector<128x96xf32>
    %c100 = arith.constant 100 : index
    %c0_26 = arith.constant 0 : index
    %27 = vector.load %arg10[%c100, %c0_26] : memref<416x128xf32, #tpu.memory_space<vmem>>, vector<96x128xf32>
    %28 = arith.truncf %27 : vector<96x128xf32> to vector<96x128xbf16>
    %c1 = arith.constant 1 : index
    %c0_27 = arith.constant 0 : index
    %c0_28 = arith.constant 0 : index
    %29 = vector.load %arg3[%c1, %c0_27, %c0_28] : memref<16x128x128xbf16, #tpu.memory_space<vmem>>, vector<1x128x128xbf16>
    %30 = vector.shape_cast %29 : vector<1x128x128xbf16> to vector<128x128xbf16>
    %cst_29 = arith.constant dense<0.000000e+00> : vector<128x96xf32>
    %31 = tpu.matmul %30, %28, %cst_29 {dimension_numbers = #tpu.dot_dimension_numbers<[1], [1], [0], [0], [0, 0, 1, 0], [], []>} : vector<128x128xbf16>, vector<96x128xbf16>, vector<128x96xf32> -> vector<128x96xf32>
    %32 = arith.addf %26, %31 : vector<128x96xf32>
    %c1_30 = arith.constant 1 : index
    %c0_31 = arith.constant 0 : index
    %33 = vector.load %arg10[%c1_30, %c0_31] : memref<416x128xf32, #tpu.memory_space<vmem>>, vector<96x128xf32>
    %34 = arith.truncf %33 : vector<96x128xf32> to vector<96x128xbf16>
    %c2 = arith.constant 2 : index
    %c0_32 = arith.constant 0 : index
    %c0_33 = arith.constant 0 : index
    %35 = vector.load %arg3[%c2, %c0_32, %c0_33] : memref<16x128x128xbf16, #tpu.memory_space<vmem>>, vector<1x128x128xbf16>
    %36 = vector.shape_cast %35 : vector<1x128x128xbf16> to vector<128x128xbf16>
    %cst_34 = arith.constant dense<0.000000e+00> : vector<128x96xf32>
    %37 = tpu.matmul %36, %34, %cst_34 {dimension_numbers = #tpu.dot_dimension_numbers<[1], [1], [0], [0], [0, 0, 1, 0], [], []>} : vector<128x128xbf16>, vector<96x128xbf16>, vector<128x96xf32> -> vector<128x96xf32>
    %38 = arith.addf %32, %37 : vector<128x96xf32>
    %c101 = arith.constant 101 : index
    %c0_35 = arith.constant 0 : index
    %39 = vector.load %arg10[%c101, %c0_35] : memref<416x128xf32, #tpu.memory_space<vmem>>, vector<96x128xf32>
    %40 = arith.truncf %39 : vector<96x128xf32> to vector<96x128xbf16>
    %c3 = arith.constant 3 : index
    %c0_36 = arith.constant 0 : index
    %c0_37 = arith.constant 0 : index
    %41 = vector.load %arg3[%c3, %c0_36, %c0_37] : memref<16x128x128xbf16, #tpu.memory_space<vmem>>, vector<1x128x128xbf16>
    %42 = vector.shape_cast %41 : vector<1x128x128xbf16> to vector<128x128xbf16>
    %cst_38 = arith.constant dense<0.000000e+00> : vector<128x96xf32>
    %43 = tpu.matmul %42, %40, %cst_38 {dimension_numbers = #tpu.dot_dimension_numbers<[1], [1], [0], [0], [0, 0, 1, 0], [], []>} : vector<128x128xbf16>, vector<96x128xbf16>, vector<128x96xf32> -> vector<128x96xf32>
    %44 = arith.addf %38, %43 : vector<128x96xf32>
    %c200 = arith.constant 200 : index
    %c0_39 = arith.constant 0 : index
    %45 = vector.load %arg10[%c200, %c0_39] : memref<416x128xf32, #tpu.memory_space<vmem>>, vector<96x128xf32>
    %46 = arith.truncf %45 : vector<96x128xf32> to vector<96x128xbf16>
    %c4 = arith.constant 4 : index
    %c0_40 = arith.constant 0 : index
    %c0_41 = arith.constant 0 : index
    %47 = vector.load %arg3[%c4, %c0_40, %c0_41] : memref<16x128x128xbf16, #tpu.memory_space<vmem>>, vector<1x128x128xbf16>
    %48 = vector.shape_cast %47 : vector<1x128x128xbf16> to vector<128x128xbf16>
    %cst_42 = arith.constant dense<0.000000e+00> : vector<128x96xf32>
    %49 = tpu.matmul %48, %46, %cst_42 {dimension_numbers = #tpu.dot_dimension_numbers<[1], [1], [0], [0], [0, 0, 1, 0], [], []>} : vector<128x128xbf16>, vector<96x128xbf16>, vector<128x96xf32> -> vector<128x96xf32>
    %50 = arith.addf %44, %49 : vector<128x96xf32>
    %c300 = arith.constant 300 : index
    %c0_43 = arith.constant 0 : index
    %51 = vector.load %arg10[%c300, %c0_43] : memref<416x128xf32, #tpu.memory_space<vmem>>, vector<96x128xf32>
    %52 = arith.truncf %51 : vector<96x128xf32> to vector<96x128xbf16>
    %c5 = arith.constant 5 : index
    %c0_44 = arith.constant 0 : index
    %c0_45 = arith.constant 0 : index
    %53 = vector.load %arg3[%c5, %c0_44, %c0_45] : memref<16x128x128xbf16, #tpu.memory_space<vmem>>, vector<1x128x128xbf16>
    %54 = vector.shape_cast %53 : vector<1x128x128xbf16> to vector<128x128xbf16>
    %cst_46 = arith.constant dense<0.000000e+00> : vector<128x96xf32>
    %55 = tpu.matmul %54, %52, %cst_46 {dimension_numbers = #tpu.dot_dimension_numbers<[1], [1], [0], [0], [0, 0, 1, 0], [], []>} : vector<128x128xbf16>, vector<96x128xbf16>, vector<128x96xf32> -> vector<128x96xf32>
    %56 = arith.addf %50, %55 : vector<128x96xf32>
    %c201 = arith.constant 201 : index
    %c0_47 = arith.constant 0 : index
    %57 = vector.load %arg10[%c201, %c0_47] : memref<416x128xf32, #tpu.memory_space<vmem>>, vector<96x128xf32>
    %58 = arith.truncf %57 : vector<96x128xf32> to vector<96x128xbf16>
    %c6 = arith.constant 6 : index
    %c0_48 = arith.constant 0 : index
    %c0_49 = arith.constant 0 : index
    %59 = vector.load %arg3[%c6, %c0_48, %c0_49] : memref<16x128x128xbf16, #tpu.memory_space<vmem>>, vector<1x128x128xbf16>
    %60 = vector.shape_cast %59 : vector<1x128x128xbf16> to vector<128x128xbf16>
    %cst_50 = arith.constant dense<0.000000e+00> : vector<128x96xf32>
    %61 = tpu.matmul %60, %58, %cst_50 {dimension_numbers = #tpu.dot_dimension_numbers<[1], [1], [0], [0], [0, 0, 1, 0], [], []>} : vector<128x128xbf16>, vector<96x128xbf16>, vector<128x96xf32> -> vector<128x96xf32>
    %62 = arith.addf %56, %61 : vector<128x96xf32>
    %c301 = arith.constant 301 : index
    %c0_51 = arith.constant 0 : index
    %63 = vector.load %arg10[%c301, %c0_51] : memref<416x128xf32, #tpu.memory_space<vmem>>, vector<96x128xf32>
    %64 = arith.truncf %63 : vector<96x128xf32> to vector<96x128xbf16>
    %c7 = arith.constant 7 : index
    %c0_52 = arith.constant 0 : index
    %c0_53 = arith.constant 0 : index
    %65 = vector.load %arg3[%c7, %c0_52, %c0_53] : memref<16x128x128xbf16, #tpu.memory_space<vmem>>, vector<1x128x128xbf16>
    %66 = vector.shape_cast %65 : vector<1x128x128xbf16> to vector<128x128xbf16>
    %cst_54 = arith.constant dense<0.000000e+00> : vector<128x96xf32>
    %67 = tpu.matmul %66, %64, %cst_54 {dimension_numbers = #tpu.dot_dimension_numbers<[1], [1], [0], [0], [0, 0, 1, 0], [], []>} : vector<128x128xbf16>, vector<96x128xbf16>, vector<128x96xf32> -> vector<128x96xf32>
    %68 = arith.addf %62, %67 : vector<128x96xf32>
    %c10 = arith.constant 10 : index
    %c0_55 = arith.constant 0 : index
    %69 = vector.load %arg10[%c10, %c0_55] : memref<416x128xf32, #tpu.memory_space<vmem>>, vector<96x128xf32>
    %70 = arith.truncf %69 : vector<96x128xf32> to vector<96x128xbf16>
    %c8 = arith.constant 8 : index
    %c0_56 = arith.constant 0 : index
    %c0_57 = arith.constant 0 : index
    %71 = vector.load %arg3[%c8, %c0_56, %c0_57] : memref<16x128x128xbf16, #tpu.memory_space<vmem>>, vector<1x128x128xbf16>
    %72 = vector.shape_cast %71 : vector<1x128x128xbf16> to vector<128x128xbf16>
    %cst_58 = arith.constant dense<0.000000e+00> : vector<128x96xf32>
    %73 = tpu.matmul %72, %70, %cst_58 {dimension_numbers = #tpu.dot_dimension_numbers<[1], [1], [0], [0], [0, 0, 1, 0], [], []>} : vector<128x128xbf16>, vector<96x128xbf16>, vector<128x96xf32> -> vector<128x96xf32>
    %74 = arith.addf %68, %73 : vector<128x96xf32>
    %c110 = arith.constant 110 : index
    %c0_59 = arith.constant 0 : index
    %75 = vector.load %arg10[%c110, %c0_59] : memref<416x128xf32, #tpu.memory_space<vmem>>, vector<96x128xf32>
    %76 = arith.truncf %75 : vector<96x128xf32> to vector<96x128xbf16>
    %c9 = arith.constant 9 : index
    %c0_60 = arith.constant 0 : index
    %c0_61 = arith.constant 0 : index
    %77 = vector.load %arg3[%c9, %c0_60, %c0_61] : memref<16x128x128xbf16, #tpu.memory_space<vmem>>, vector<1x128x128xbf16>
    %78 = vector.shape_cast %77 : vector<1x128x128xbf16> to vector<128x128xbf16>
    %cst_62 = arith.constant dense<0.000000e+00> : vector<128x96xf32>
    %79 = tpu.matmul %78, %76, %cst_62 {dimension_numbers = #tpu.dot_dimension_numbers<[1], [1], [0], [0], [0, 0, 1, 0], [], []>} : vector<128x128xbf16>, vector<96x128xbf16>, vector<128x96xf32> -> vector<128x96xf32>
    %80 = arith.addf %74, %79 : vector<128x96xf32>
    %c11 = arith.constant 11 : index
    %c0_63 = arith.constant 0 : index
    %81 = vector.load %arg10[%c11, %c0_63] : memref<416x128xf32, #tpu.memory_space<vmem>>, vector<96x128xf32>
    %82 = arith.truncf %81 : vector<96x128xf32> to vector<96x128xbf16>
    %c10_64 = arith.constant 10 : index
    %c0_65 = arith.constant 0 : index
    %c0_66 = arith.constant 0 : index
    %83 = vector.load %arg3[%c10_64, %c0_65, %c0_66] : memref<16x128x128xbf16, #tpu.memory_space<vmem>>, vector<1x128x128xbf16>
    %84 = vector.shape_cast %83 : vector<1x128x128xbf16> to vector<128x128xbf16>
    %cst_67 = arith.constant dense<0.000000e+00> : vector<128x96xf32>
    %85 = tpu.matmul %84, %82, %cst_67 {dimension_numbers = #tpu.dot_dimension_numbers<[1], [1], [0], [0], [0, 0, 1, 0], [], []>} : vector<128x128xbf16>, vector<96x128xbf16>, vector<128x96xf32> -> vector<128x96xf32>
    %86 = arith.addf %80, %85 : vector<128x96xf32>
    %c111 = arith.constant 111 : index
    %c0_68 = arith.constant 0 : index
    %87 = vector.load %arg10[%c111, %c0_68] : memref<416x128xf32, #tpu.memory_space<vmem>>, vector<96x128xf32>
    %88 = arith.truncf %87 : vector<96x128xf32> to vector<96x128xbf16>
    %c11_69 = arith.constant 11 : index
    %c0_70 = arith.constant 0 : index
    %c0_71 = arith.constant 0 : index
    %89 = vector.load %arg3[%c11_69, %c0_70, %c0_71] : memref<16x128x128xbf16, #tpu.memory_space<vmem>>, vector<1x128x128xbf16>
    %90 = vector.shape_cast %89 : vector<1x128x128xbf16> to vector<128x128xbf16>
    %cst_72 = arith.constant dense<0.000000e+00> : vector<128x96xf32>
    %91 = tpu.matmul %90, %88, %cst_72 {dimension_numbers = #tpu.dot_dimension_numbers<[1], [1], [0], [0], [0, 0, 1, 0], [], []>} : vector<128x128xbf16>, vector<96x128xbf16>, vector<128x96xf32> -> vector<128x96xf32>
    %92 = arith.addf %86, %91 : vector<128x96xf32>
    %c210 = arith.constant 210 : index
    %c0_73 = arith.constant 0 : index
    %93 = vector.load %arg10[%c210, %c0_73] : memref<416x128xf32, #tpu.memory_space<vmem>>, vector<96x128xf32>
    %94 = arith.truncf %93 : vector<96x128xf32> to vector<96x128xbf16>
    %c12 = arith.constant 12 : index
    %c0_74 = arith.constant 0 : index
    %c0_75 = arith.constant 0 : index
    %95 = vector.load %arg3[%c12, %c0_74, %c0_75] : memref<16x128x128xbf16, #tpu.memory_space<vmem>>, vector<1x128x128xbf16>
    %96 = vector.shape_cast %95 : vector<1x128x128xbf16> to vector<128x128xbf16>
    %cst_76 = arith.constant dense<0.000000e+00> : vector<128x96xf32>
    %97 = tpu.matmul %96, %94, %cst_76 {dimension_numbers = #tpu.dot_dimension_numbers<[1], [1], [0], [0], [0, 0, 1, 0], [], []>} : vector<128x128xbf16>, vector<96x128xbf16>, vector<128x96xf32> -> vector<128x96xf32>
    %98 = arith.addf %92, %97 : vector<128x96xf32>
    %c310 = arith.constant 310 : index
    %c0_77 = arith.constant 0 : index
    %99 = vector.load %arg10[%c310, %c0_77] : memref<416x128xf32, #tpu.memory_space<vmem>>, vector<96x128xf32>
    %100 = arith.truncf %99 : vector<96x128xf32> to vector<96x128xbf16>
    %c13 = arith.constant 13 : index
    %c0_78 = arith.constant 0 : index
    %c0_79 = arith.constant 0 : index
    %101 = vector.load %arg3[%c13, %c0_78, %c0_79] : memref<16x128x128xbf16, #tpu.memory_space<vmem>>, vector<1x128x128xbf16>
    %102 = vector.shape_cast %101 : vector<1x128x128xbf16> to vector<128x128xbf16>
    %cst_80 = arith.constant dense<0.000000e+00> : vector<128x96xf32>
    %103 = tpu.matmul %102, %100, %cst_80 {dimension_numbers = #tpu.dot_dimension_numbers<[1], [1], [0], [0], [0, 0, 1, 0], [], []>} : vector<128x128xbf16>, vector<96x128xbf16>, vector<128x96xf32> -> vector<128x96xf32>
    %104 = arith.addf %98, %103 : vector<128x96xf32>
    %c211 = arith.constant 211 : index
    %c0_81 = arith.constant 0 : index
    %105 = vector.load %arg10[%c211, %c0_81] : memref<416x128xf32, #tpu.memory_space<vmem>>, vector<96x128xf32>
    %106 = arith.truncf %105 : vector<96x128xf32> to vector<96x128xbf16>
    %c14 = arith.constant 14 : index
    %c0_82 = arith.constant 0 : index
    %c0_83 = arith.constant 0 : index
    %107 = vector.load %arg3[%c14, %c0_82, %c0_83] : memref<16x128x128xbf16, #tpu.memory_space<vmem>>, vector<1x128x128xbf16>
    %108 = vector.shape_cast %107 : vector<1x128x128xbf16> to vector<128x128xbf16>
    %cst_84 = arith.constant dense<0.000000e+00> : vector<128x96xf32>
    %109 = tpu.matmul %108, %106, %cst_84 {dimension_numbers = #tpu.dot_dimension_numbers<[1], [1], [0], [0], [0, 0, 1, 0], [], []>} : vector<128x128xbf16>, vector<96x128xbf16>, vector<128x96xf32> -> vector<128x96xf32>
    %110 = arith.addf %104, %109 : vector<128x96xf32>
    %c311 = arith.constant 311 : index
    %c0_85 = arith.constant 0 : index
    %111 = vector.load %arg10[%c311, %c0_85] : memref<416x128xf32, #tpu.memory_space<vmem>>, vector<96x128xf32>
    %112 = arith.truncf %111 : vector<96x128xf32> to vector<96x128xbf16>
    %c15 = arith.constant 15 : index
    %c0_86 = arith.constant 0 : index
    %c0_87 = arith.constant 0 : index
    %113 = vector.load %arg3[%c15, %c0_86, %c0_87] : memref<16x128x128xbf16, #tpu.memory_space<vmem>>, vector<1x128x128xbf16>
    %114 = vector.shape_cast %113 : vector<1x128x128xbf16> to vector<128x128xbf16>
    %cst_88 = arith.constant dense<0.000000e+00> : vector<128x96xf32>
    %115 = tpu.matmul %114, %112, %cst_88 {dimension_numbers = #tpu.dot_dimension_numbers<[1], [1], [0], [0], [0, 0, 1, 0], [], []>} : vector<128x128xbf16>, vector<96x128xbf16>, vector<128x96xf32> -> vector<128x96xf32>
    %116 = arith.addf %110, %115 : vector<128x96xf32>
    %c0_89 = arith.constant 0 : index
    %c0_90 = arith.constant 0 : index
    %117 = vector.load %arg4[%c0_89, %c0_90] : memref<128x1xf32, #tpu.memory_space<vmem>>, vector<128x1xf32>
    %118 = vector.broadcast %117 : vector<128x1xf32> to vector<128x96xf32>
    %119 = arith.addf %116, %118 : vector<128x96xf32>
    %cst_91 = arith.constant 0.000000e+00 : f32
    %120 = vector.broadcast %cst_91 : f32 to vector<128x96xf32>
    %121 = arith.maximumf %119, %120 : vector<128x96xf32>
    %122 = arith.truncf %121 : vector<128x96xf32> to vector<128x96xbf16>
    %cst_92 = arith.constant 0.000000e+00 : f32
    %123 = vector.broadcast %cst_92 : f32 to vector<1x256xf32>
    %124 = vector.extract_strided_slice %122 {offsets = [0, 0], sizes = [1, 96], strides = [1, 1]} : vector<128x96xbf16> to vector<1x96xbf16>
    %c0_93 = arith.constant 0 : index
    %c0_94 = arith.constant 0 : index
    %c0_95 = arith.constant 0 : index
    %125 = vector.load %arg5[%c0_93, %c0_94, %c0_95] : memref<32x96x256xbf16, #tpu.memory_space<vmem>>, vector<1x96x256xbf16>
    %126 = vector.shape_cast %125 : vector<1x96x256xbf16> to vector<96x256xbf16>
    %cst_96 = arith.constant dense<0.000000e+00> : vector<1x256xf32>
    %127 = tpu.matmul %124, %126, %cst_96 {dimension_numbers = #tpu.dot_dimension_numbers<[1], [0], [0], [1], [0, 0, 1, 1], [], []>} : vector<1x96xbf16>, vector<96x256xbf16>, vector<1x256xf32> -> vector<1x256xf32>
    %128 = arith.addf %123, %127 : vector<1x256xf32>
    %129 = vector.extract_strided_slice %122 {offsets = [1, 0], sizes = [1, 96], strides = [1, 1]} : vector<128x96xbf16> to vector<1x96xbf16>
    %c1_97 = arith.constant 1 : index
    %c0_98 = arith.constant 0 : index
    %c0_99 = arith.constant 0 : index
    %130 = vector.load %arg5[%c1_97, %c0_98, %c0_99] : memref<32x96x256xbf16, #tpu.memory_space<vmem>>, vector<1x96x256xbf16>
    %131 = vector.shape_cast %130 : vector<1x96x256xbf16> to vector<96x256xbf16>
    %cst_100 = arith.constant dense<0.000000e+00> : vector<1x256xf32>
    %132 = tpu.matmul %129, %131, %cst_100 {dimension_numbers = #tpu.dot_dimension_numbers<[1], [0], [0], [1], [0, 0, 1, 1], [], []>} : vector<1x96xbf16>, vector<96x256xbf16>, vector<1x256xf32> -> vector<1x256xf32>
    %133 = arith.addf %128, %132 : vector<1x256xf32>
    %134 = vector.extract_strided_slice %122 {offsets = [2, 0], sizes = [1, 96], strides = [1, 1]} : vector<128x96xbf16> to vector<1x96xbf16>
    %c2_101 = arith.constant 2 : index
    %c0_102 = arith.constant 0 : index
    %c0_103 = arith.constant 0 : index
    %135 = vector.load %arg5[%c2_101, %c0_102, %c0_103] : memref<32x96x256xbf16, #tpu.memory_space<vmem>>, vector<1x96x256xbf16>
    %136 = vector.shape_cast %135 : vector<1x96x256xbf16> to vector<96x256xbf16>
    %cst_104 = arith.constant dense<0.000000e+00> : vector<1x256xf32>
    %137 = tpu.matmul %134, %136, %cst_104 {dimension_numbers = #tpu.dot_dimension_numbers<[1], [0], [0], [1], [0, 0, 1, 1], [], []>} : vector<1x96xbf16>, vector<96x256xbf16>, vector<1x256xf32> -> vector<1x256xf32>
    %138 = arith.addf %133, %137 : vector<1x256xf32>
    %139 = vector.extract_strided_slice %122 {offsets = [3, 0], sizes = [1, 96], strides = [1, 1]} : vector<128x96xbf16> to vector<1x96xbf16>
    %c3_105 = arith.constant 3 : index
    %c0_106 = arith.constant 0 : index
    %c0_107 = arith.constant 0 : index
    %140 = vector.load %arg5[%c3_105, %c0_106, %c0_107] : memref<32x96x256xbf16, #tpu.memory_space<vmem>>, vector<1x96x256xbf16>
    %141 = vector.shape_cast %140 : vector<1x96x256xbf16> to vector<96x256xbf16>
    %cst_108 = arith.constant dense<0.000000e+00> : vector<1x256xf32>
    %142 = tpu.matmul %139, %141, %cst_108 {dimension_numbers = #tpu.dot_dimension_numbers<[1], [0], [0], [1], [0, 0, 1, 1], [], []>} : vector<1x96xbf16>, vector<96x256xbf16>, vector<1x256xf32> -> vector<1x256xf32>
    %143 = arith.addf %138, %142 : vector<1x256xf32>
    %144 = vector.extract_strided_slice %122 {offsets = [4, 0], sizes = [1, 96], strides = [1, 1]} : vector<128x96xbf16> to vector<1x96xbf16>
    %c4_109 = arith.constant 4 : index
    %c0_110 = arith.constant 0 : index
    %c0_111 = arith.constant 0 : index
    %145 = vector.load %arg5[%c4_109, %c0_110, %c0_111] : memref<32x96x256xbf16, #tpu.memory_space<vmem>>, vector<1x96x256xbf16>
    %146 = vector.shape_cast %145 : vector<1x96x256xbf16> to vector<96x256xbf16>
    %cst_112 = arith.constant dense<0.000000e+00> : vector<1x256xf32>
    %147 = tpu.matmul %144, %146, %cst_112 {dimension_numbers = #tpu.dot_dimension_numbers<[1], [0], [0], [1], [0, 0, 1, 1], [], []>} : vector<1x96xbf16>, vector<96x256xbf16>, vector<1x256xf32> -> vector<1x256xf32>
    %148 = arith.addf %143, %147 : vector<1x256xf32>
    %149 = vector.extract_strided_slice %122 {offsets = [5, 0], sizes = [1, 96], strides = [1, 1]} : vector<128x96xbf16> to vector<1x96xbf16>
    %c5_113 = arith.constant 5 : index
    %c0_114 = arith.constant 0 : index
    %c0_115 = arith.constant 0 : index
    %150 = vector.load %arg5[%c5_113, %c0_114, %c0_115] : memref<32x96x256xbf16, #tpu.memory_space<vmem>>, vector<1x96x256xbf16>
    %151 = vector.shape_cast %150 : vector<1x96x256xbf16> to vector<96x256xbf16>
    %cst_116 = arith.constant dense<0.000000e+00> : vector<1x256xf32>
    %152 = tpu.matmul %149, %151, %cst_116 {dimension_numbers = #tpu.dot_dimension_numbers<[1], [0], [0], [1], [0, 0, 1, 1], [], []>} : vector<1x96xbf16>, vector<96x256xbf16>, vector<1x256xf32> -> vector<1x256xf32>
    %153 = arith.addf %148, %152 : vector<1x256xf32>
    %154 = vector.extract_strided_slice %122 {offsets = [6, 0], sizes = [1, 96], strides = [1, 1]} : vector<128x96xbf16> to vector<1x96xbf16>
    %c6_117 = arith.constant 6 : index
    %c0_118 = arith.constant 0 : index
    %c0_119 = arith.constant 0 : index
    %155 = vector.load %arg5[%c6_117, %c0_118, %c0_119] : memref<32x96x256xbf16, #tpu.memory_space<vmem>>, vector<1x96x256xbf16>
    %156 = vector.shape_cast %155 : vector<1x96x256xbf16> to vector<96x256xbf16>
    %cst_120 = arith.constant dense<0.000000e+00> : vector<1x256xf32>
    %157 = tpu.matmul %154, %156, %cst_120 {dimension_numbers = #tpu.dot_dimension_numbers<[1], [0], [0], [1], [0, 0, 1, 1], [], []>} : vector<1x96xbf16>, vector<96x256xbf16>, vector<1x256xf32> -> vector<1x256xf32>
    %158 = arith.addf %153, %157 : vector<1x256xf32>
    %159 = vector.extract_strided_slice %122 {offsets = [7, 0], sizes = [1, 96], strides = [1, 1]} : vector<128x96xbf16> to vector<1x96xbf16>
    %c7_121 = arith.constant 7 : index
    %c0_122 = arith.constant 0 : index
    %c0_123 = arith.constant 0 : index
    %160 = vector.load %arg5[%c7_121, %c0_122, %c0_123] : memref<32x96x256xbf16, #tpu.memory_space<vmem>>, vector<1x96x256xbf16>
    %161 = vector.shape_cast %160 : vector<1x96x256xbf16> to vector<96x256xbf16>
    %cst_124 = arith.constant dense<0.000000e+00> : vector<1x256xf32>
    %162 = tpu.matmul %159, %161, %cst_124 {dimension_numbers = #tpu.dot_dimension_numbers<[1], [0], [0], [1], [0, 0, 1, 1], [], []>} : vector<1x96xbf16>, vector<96x256xbf16>, vector<1x256xf32> -> vector<1x256xf32>
    %163 = arith.addf %158, %162 : vector<1x256xf32>
    %164 = vector.extract_strided_slice %122 {offsets = [8, 0], sizes = [1, 96], strides = [1, 1]} : vector<128x96xbf16> to vector<1x96xbf16>
    %c8_125 = arith.constant 8 : index
    %c0_126 = arith.constant 0 : index
    %c0_127 = arith.constant 0 : index
    %165 = vector.load %arg5[%c8_125, %c0_126, %c0_127] : memref<32x96x256xbf16, #tpu.memory_space<vmem>>, vector<1x96x256xbf16>
    %166 = vector.shape_cast %165 : vector<1x96x256xbf16> to vector<96x256xbf16>
    %cst_128 = arith.constant dense<0.000000e+00> : vector<1x256xf32>
    %167 = tpu.matmul %164, %166, %cst_128 {dimension_numbers = #tpu.dot_dimension_numbers<[1], [0], [0], [1], [0, 0, 1, 1], [], []>} : vector<1x96xbf16>, vector<96x256xbf16>, vector<1x256xf32> -> vector<1x256xf32>
    %168 = arith.addf %163, %167 : vector<1x256xf32>
    %169 = vector.extract_strided_slice %122 {offsets = [9, 0], sizes = [1, 96], strides = [1, 1]} : vector<128x96xbf16> to vector<1x96xbf16>
    %c9_129 = arith.constant 9 : index
    %c0_130 = arith.constant 0 : index
    %c0_131 = arith.constant 0 : index
    %170 = vector.load %arg5[%c9_129, %c0_130, %c0_131] : memref<32x96x256xbf16, #tpu.memory_space<vmem>>, vector<1x96x256xbf16>
    %171 = vector.shape_cast %170 : vector<1x96x256xbf16> to vector<96x256xbf16>
    %cst_132 = arith.constant dense<0.000000e+00> : vector<1x256xf32>
    %172 = tpu.matmul %169, %171, %cst_132 {dimension_numbers = #tpu.dot_dimension_numbers<[1], [0], [0], [1], [0, 0, 1, 1], [], []>} : vector<1x96xbf16>, vector<96x256xbf16>, vector<1x256xf32> -> vector<1x256xf32>
    %173 = arith.addf %168, %172 : vector<1x256xf32>
    %174 = vector.extract_strided_slice %122 {offsets = [10, 0], sizes = [1, 96], strides = [1, 1]} : vector<128x96xbf16> to vector<1x96xbf16>
    %c10_133 = arith.constant 10 : index
    %c0_134 = arith.constant 0 : index
    %c0_135 = arith.constant 0 : index
    %175 = vector.load %arg5[%c10_133, %c0_134, %c0_135] : memref<32x96x256xbf16, #tpu.memory_space<vmem>>, vector<1x96x256xbf16>
    %176 = vector.shape_cast %175 : vector<1x96x256xbf16> to vector<96x256xbf16>
    %cst_136 = arith.constant dense<0.000000e+00> : vector<1x256xf32>
    %177 = tpu.matmul %174, %176, %cst_136 {dimension_numbers = #tpu.dot_dimension_numbers<[1], [0], [0], [1], [0, 0, 1, 1], [], []>} : vector<1x96xbf16>, vector<96x256xbf16>, vector<1x256xf32> -> vector<1x256xf32>
    %178 = arith.addf %173, %177 : vector<1x256xf32>
    %179 = vector.extract_strided_slice %122 {offsets = [11, 0], sizes = [1, 96], strides = [1, 1]} : vector<128x96xbf16> to vector<1x96xbf16>
    %c11_137 = arith.constant 11 : index
    %c0_138 = arith.constant 0 : index
    %c0_139 = arith.constant 0 : index
    %180 = vector.load %arg5[%c11_137, %c0_138, %c0_139] : memref<32x96x256xbf16, #tpu.memory_space<vmem>>, vector<1x96x256xbf16>
    %181 = vector.shape_cast %180 : vector<1x96x256xbf16> to vector<96x256xbf16>
    %cst_140 = arith.constant dense<0.000000e+00> : vector<1x256xf32>
    %182 = tpu.matmul %179, %181, %cst_140 {dimension_numbers = #tpu.dot_dimension_numbers<[1], [0], [0], [1], [0, 0, 1, 1], [], []>} : vector<1x96xbf16>, vector<96x256xbf16>, vector<1x256xf32> -> vector<1x256xf32>
    %183 = arith.addf %178, %182 : vector<1x256xf32>
    %184 = vector.extract_strided_slice %122 {offsets = [12, 0], sizes = [1, 96], strides = [1, 1]} : vector<128x96xbf16> to vector<1x96xbf16>
    %c12_141 = arith.constant 12 : index
    %c0_142 = arith.constant 0 : index
    %c0_143 = arith.constant 0 : index
    %185 = vector.load %arg5[%c12_141, %c0_142, %c0_143] : memref<32x96x256xbf16, #tpu.memory_space<vmem>>, vector<1x96x256xbf16>
    %186 = vector.shape_cast %185 : vector<1x96x256xbf16> to vector<96x256xbf16>
    %cst_144 = arith.constant dense<0.000000e+00> : vector<1x256xf32>
    %187 = tpu.matmul %184, %186, %cst_144 {dimension_numbers = #tpu.dot_dimension_numbers<[1], [0], [0], [1], [0, 0, 1, 1], [], []>} : vector<1x96xbf16>, vector<96x256xbf16>, vector<1x256xf32> -> vector<1x256xf32>
    %188 = arith.addf %183, %187 : vector<1x256xf32>
    %189 = vector.extract_strided_slice %122 {offsets = [13, 0], sizes = [1, 96], strides = [1, 1]} : vector<128x96xbf16> to vector<1x96xbf16>
    %c13_145 = arith.constant 13 : index
    %c0_146 = arith.constant 0 : index
    %c0_147 = arith.constant 0 : index
    %190 = vector.load %arg5[%c13_145, %c0_146, %c0_147] : memref<32x96x256xbf16, #tpu.memory_space<vmem>>, vector<1x96x256xbf16>
    %191 = vector.shape_cast %190 : vector<1x96x256xbf16> to vector<96x256xbf16>
    %cst_148 = arith.constant dense<0.000000e+00> : vector<1x256xf32>
    %192 = tpu.matmul %189, %191, %cst_148 {dimension_numbers = #tpu.dot_dimension_numbers<[1], [0], [0], [1], [0, 0, 1, 1], [], []>} : vector<1x96xbf16>, vector<96x256xbf16>, vector<1x256xf32> -> vector<1x256xf32>
    %193 = arith.addf %188, %192 : vector<1x256xf32>
    %194 = vector.extract_strided_slice %122 {offsets = [14, 0], sizes = [1, 96], strides = [1, 1]} : vector<128x96xbf16> to vector<1x96xbf16>
    %c14_149 = arith.constant 14 : index
    %c0_150 = arith.constant 0 : index
    %c0_151 = arith.constant 0 : index
    %195 = vector.load %arg5[%c14_149, %c0_150, %c0_151] : memref<32x96x256xbf16, #tpu.memory_space<vmem>>, vector<1x96x256xbf16>
    %196 = vector.shape_cast %195 : vector<1x96x256xbf16> to vector<96x256xbf16>
    %cst_152 = arith.constant dense<0.000000e+00> : vector<1x256xf32>
    %197 = tpu.matmul %194, %196, %cst_152 {dimension_numbers = #tpu.dot_dimension_numbers<[1], [0], [0], [1], [0, 0, 1, 1], [], []>} : vector<1x96xbf16>, vector<96x256xbf16>, vector<1x256xf32> -> vector<1x256xf32>
    %198 = arith.addf %193, %197 : vector<1x256xf32>
    %199 = vector.extract_strided_slice %122 {offsets = [15, 0], sizes = [1, 96], strides = [1, 1]} : vector<128x96xbf16> to vector<1x96xbf16>
    %c15_153 = arith.constant 15 : index
    %c0_154 = arith.constant 0 : index
    %c0_155 = arith.constant 0 : index
    %200 = vector.load %arg5[%c15_153, %c0_154, %c0_155] : memref<32x96x256xbf16, #tpu.memory_space<vmem>>, vector<1x96x256xbf16>
    %201 = vector.shape_cast %200 : vector<1x96x256xbf16> to vector<96x256xbf16>
    %cst_156 = arith.constant dense<0.000000e+00> : vector<1x256xf32>
    %202 = tpu.matmul %199, %201, %cst_156 {dimension_numbers = #tpu.dot_dimension_numbers<[1], [0], [0], [1], [0, 0, 1, 1], [], []>} : vector<1x96xbf16>, vector<96x256xbf16>, vector<1x256xf32> -> vector<1x256xf32>
    %203 = arith.addf %198, %202 : vector<1x256xf32>
    %204 = vector.extract_strided_slice %122 {offsets = [16, 0], sizes = [1, 96], strides = [1, 1]} : vector<128x96xbf16> to vector<1x96xbf16>
    %c16 = arith.constant 16 : index
    %c0_157 = arith.constant 0 : index
    %c0_158 = arith.constant 0 : index
    %205 = vector.load %arg5[%c16, %c0_157, %c0_158] : memref<32x96x256xbf16, #tpu.memory_space<vmem>>, vector<1x96x256xbf16>
    %206 = vector.shape_cast %205 : vector<1x96x256xbf16> to vector<96x256xbf16>
    %cst_159 = arith.constant dense<0.000000e+00> : vector<1x256xf32>
    %207 = tpu.matmul %204, %206, %cst_159 {dimension_numbers = #tpu.dot_dimension_numbers<[1], [0], [0], [1], [0, 0, 1, 1], [], []>} : vector<1x96xbf16>, vector<96x256xbf16>, vector<1x256xf32> -> vector<1x256xf32>
    %208 = arith.addf %203, %207 : vector<1x256xf32>
    %209 = vector.extract_strided_slice %122 {offsets = [17, 0], sizes = [1, 96], strides = [1, 1]} : vector<128x96xbf16> to vector<1x96xbf16>
    %c17 = arith.constant 17 : index
    %c0_160 = arith.constant 0 : index
    %c0_161 = arith.constant 0 : index
    %210 = vector.load %arg5[%c17, %c0_160, %c0_161] : memref<32x96x256xbf16, #tpu.memory_space<vmem>>, vector<1x96x256xbf16>
    %211 = vector.shape_cast %210 : vector<1x96x256xbf16> to vector<96x256xbf16>
    %cst_162 = arith.constant dense<0.000000e+00> : vector<1x256xf32>
    %212 = tpu.matmul %209, %211, %cst_162 {dimension_numbers = #tpu.dot_dimension_numbers<[1], [0], [0], [1], [0, 0, 1, 1], [], []>} : vector<1x96xbf16>, vector<96x256xbf16>, vector<1x256xf32> -> vector<1x256xf32>
    %213 = arith.addf %208, %212 : vector<1x256xf32>
    %214 = vector.extract_strided_slice %122 {offsets = [18, 0], sizes = [1, 96], strides = [1, 1]} : vector<128x96xbf16> to vector<1x96xbf16>
    %c18 = arith.constant 18 : index
    %c0_163 = arith.constant 0 : index
    %c0_164 = arith.constant 0 : index
    %215 = vector.load %arg5[%c18, %c0_163, %c0_164] : memref<32x96x256xbf16, #tpu.memory_space<vmem>>, vector<1x96x256xbf16>
    %216 = vector.shape_cast %215 : vector<1x96x256xbf16> to vector<96x256xbf16>
    %cst_165 = arith.constant dense<0.000000e+00> : vector<1x256xf32>
    %217 = tpu.matmul %214, %216, %cst_165 {dimension_numbers = #tpu.dot_dimension_numbers<[1], [0], [0], [1], [0, 0, 1, 1], [], []>} : vector<1x96xbf16>, vector<96x256xbf16>, vector<1x256xf32> -> vector<1x256xf32>
    %218 = arith.addf %213, %217 : vector<1x256xf32>
    %219 = vector.extract_strided_slice %122 {offsets = [19, 0], sizes = [1, 96], strides = [1, 1]} : vector<128x96xbf16> to vector<1x96xbf16>
    %c19 = arith.constant 19 : index
    %c0_166 = arith.constant 0 : index
    %c0_167 = arith.constant 0 : index
    %220 = vector.load %arg5[%c19, %c0_166, %c0_167] : memref<32x96x256xbf16, #tpu.memory_space<vmem>>, vector<1x96x256xbf16>
    %221 = vector.shape_cast %220 : vector<1x96x256xbf16> to vector<96x256xbf16>
    %cst_168 = arith.constant dense<0.000000e+00> : vector<1x256xf32>
    %222 = tpu.matmul %219, %221, %cst_168 {dimension_numbers = #tpu.dot_dimension_numbers<[1], [0], [0], [1], [0, 0, 1, 1], [], []>} : vector<1x96xbf16>, vector<96x256xbf16>, vector<1x256xf32> -> vector<1x256xf32>
    %223 = arith.addf %218, %222 : vector<1x256xf32>
    %224 = vector.extract_strided_slice %122 {offsets = [20, 0], sizes = [1, 96], strides = [1, 1]} : vector<128x96xbf16> to vector<1x96xbf16>
    %c20 = arith.constant 20 : index
    %c0_169 = arith.constant 0 : index
    %c0_170 = arith.constant 0 : index
    %225 = vector.load %arg5[%c20, %c0_169, %c0_170] : memref<32x96x256xbf16, #tpu.memory_space<vmem>>, vector<1x96x256xbf16>
    %226 = vector.shape_cast %225 : vector<1x96x256xbf16> to vector<96x256xbf16>
    %cst_171 = arith.constant dense<0.000000e+00> : vector<1x256xf32>
    %227 = tpu.matmul %224, %226, %cst_171 {dimension_numbers = #tpu.dot_dimension_numbers<[1], [0], [0], [1], [0, 0, 1, 1], [], []>} : vector<1x96xbf16>, vector<96x256xbf16>, vector<1x256xf32> -> vector<1x256xf32>
    %228 = arith.addf %223, %227 : vector<1x256xf32>
    %229 = vector.extract_strided_slice %122 {offsets = [21, 0], sizes = [1, 96], strides = [1, 1]} : vector<128x96xbf16> to vector<1x96xbf16>
    %c21 = arith.constant 21 : index
    %c0_172 = arith.constant 0 : index
    %c0_173 = arith.constant 0 : index
    %230 = vector.load %arg5[%c21, %c0_172, %c0_173] : memref<32x96x256xbf16, #tpu.memory_space<vmem>>, vector<1x96x256xbf16>
    %231 = vector.shape_cast %230 : vector<1x96x256xbf16> to vector<96x256xbf16>
    %cst_174 = arith.constant dense<0.000000e+00> : vector<1x256xf32>
    %232 = tpu.matmul %229, %231, %cst_174 {dimension_numbers = #tpu.dot_dimension_numbers<[1], [0], [0], [1], [0, 0, 1, 1], [], []>} : vector<1x96xbf16>, vector<96x256xbf16>, vector<1x256xf32> -> vector<1x256xf32>
    %233 = arith.addf %228, %232 : vector<1x256xf32>
    %234 = vector.extract_strided_slice %122 {offsets = [22, 0], sizes = [1, 96], strides = [1, 1]} : vector<128x96xbf16> to vector<1x96xbf16>
    %c22 = arith.constant 22 : index
    %c0_175 = arith.constant 0 : index
    %c0_176 = arith.constant 0 : index
    %235 = vector.load %arg5[%c22, %c0_175, %c0_176] : memref<32x96x256xbf16, #tpu.memory_space<vmem>>, vector<1x96x256xbf16>
    %236 = vector.shape_cast %235 : vector<1x96x256xbf16> to vector<96x256xbf16>
    %cst_177 = arith.constant dense<0.000000e+00> : vector<1x256xf32>
    %237 = tpu.matmul %234, %236, %cst_177 {dimension_numbers = #tpu.dot_dimension_numbers<[1], [0], [0], [1], [0, 0, 1, 1], [], []>} : vector<1x96xbf16>, vector<96x256xbf16>, vector<1x256xf32> -> vector<1x256xf32>
    %238 = arith.addf %233, %237 : vector<1x256xf32>
    %239 = vector.extract_strided_slice %122 {offsets = [23, 0], sizes = [1, 96], strides = [1, 1]} : vector<128x96xbf16> to vector<1x96xbf16>
    %c23 = arith.constant 23 : index
    %c0_178 = arith.constant 0 : index
    %c0_179 = arith.constant 0 : index
    %240 = vector.load %arg5[%c23, %c0_178, %c0_179] : memref<32x96x256xbf16, #tpu.memory_space<vmem>>, vector<1x96x256xbf16>
    %241 = vector.shape_cast %240 : vector<1x96x256xbf16> to vector<96x256xbf16>
    %cst_180 = arith.constant dense<0.000000e+00> : vector<1x256xf32>
    %242 = tpu.matmul %239, %241, %cst_180 {dimension_numbers = #tpu.dot_dimension_numbers<[1], [0], [0], [1], [0, 0, 1, 1], [], []>} : vector<1x96xbf16>, vector<96x256xbf16>, vector<1x256xf32> -> vector<1x256xf32>
    %243 = arith.addf %238, %242 : vector<1x256xf32>
    %244 = vector.extract_strided_slice %122 {offsets = [24, 0], sizes = [1, 96], strides = [1, 1]} : vector<128x96xbf16> to vector<1x96xbf16>
    %c24 = arith.constant 24 : index
    %c0_181 = arith.constant 0 : index
    %c0_182 = arith.constant 0 : index
    %245 = vector.load %arg5[%c24, %c0_181, %c0_182] : memref<32x96x256xbf16, #tpu.memory_space<vmem>>, vector<1x96x256xbf16>
    %246 = vector.shape_cast %245 : vector<1x96x256xbf16> to vector<96x256xbf16>
    %cst_183 = arith.constant dense<0.000000e+00> : vector<1x256xf32>
    %247 = tpu.matmul %244, %246, %cst_183 {dimension_numbers = #tpu.dot_dimension_numbers<[1], [0], [0], [1], [0, 0, 1, 1], [], []>} : vector<1x96xbf16>, vector<96x256xbf16>, vector<1x256xf32> -> vector<1x256xf32>
    %248 = arith.addf %243, %247 : vector<1x256xf32>
    %249 = vector.extract_strided_slice %122 {offsets = [25, 0], sizes = [1, 96], strides = [1, 1]} : vector<128x96xbf16> to vector<1x96xbf16>
    %c25 = arith.constant 25 : index
    %c0_184 = arith.constant 0 : index
    %c0_185 = arith.constant 0 : index
    %250 = vector.load %arg5[%c25, %c0_184, %c0_185] : memref<32x96x256xbf16, #tpu.memory_space<vmem>>, vector<1x96x256xbf16>
    %251 = vector.shape_cast %250 : vector<1x96x256xbf16> to vector<96x256xbf16>
    %cst_186 = arith.constant dense<0.000000e+00> : vector<1x256xf32>
    %252 = tpu.matmul %249, %251, %cst_186 {dimension_numbers = #tpu.dot_dimension_numbers<[1], [0], [0], [1], [0, 0, 1, 1], [], []>} : vector<1x96xbf16>, vector<96x256xbf16>, vector<1x256xf32> -> vector<1x256xf32>
    %253 = arith.addf %248, %252 : vector<1x256xf32>
    %254 = vector.extract_strided_slice %122 {offsets = [26, 0], sizes = [1, 96], strides = [1, 1]} : vector<128x96xbf16> to vector<1x96xbf16>
    %c26 = arith.constant 26 : index
    %c0_187 = arith.constant 0 : index
    %c0_188 = arith.constant 0 : index
    %255 = vector.load %arg5[%c26, %c0_187, %c0_188] : memref<32x96x256xbf16, #tpu.memory_space<vmem>>, vector<1x96x256xbf16>
    %256 = vector.shape_cast %255 : vector<1x96x256xbf16> to vector<96x256xbf16>
    %cst_189 = arith.constant dense<0.000000e+00> : vector<1x256xf32>
    %257 = tpu.matmul %254, %256, %cst_189 {dimension_numbers = #tpu.dot_dimension_numbers<[1], [0], [0], [1], [0, 0, 1, 1], [], []>} : vector<1x96xbf16>, vector<96x256xbf16>, vector<1x256xf32> -> vector<1x256xf32>
    %258 = arith.addf %253, %257 : vector<1x256xf32>
    %259 = vector.extract_strided_slice %122 {offsets = [27, 0], sizes = [1, 96], strides = [1, 1]} : vector<128x96xbf16> to vector<1x96xbf16>
    %c27 = arith.constant 27 : index
    %c0_190 = arith.constant 0 : index
    %c0_191 = arith.constant 0 : index
    %260 = vector.load %arg5[%c27, %c0_190, %c0_191] : memref<32x96x256xbf16, #tpu.memory_space<vmem>>, vector<1x96x256xbf16>
    %261 = vector.shape_cast %260 : vector<1x96x256xbf16> to vector<96x256xbf16>
    %cst_192 = arith.constant dense<0.000000e+00> : vector<1x256xf32>
    %262 = tpu.matmul %259, %261, %cst_192 {dimension_numbers = #tpu.dot_dimension_numbers<[1], [0], [0], [1], [0, 0, 1, 1], [], []>} : vector<1x96xbf16>, vector<96x256xbf16>, vector<1x256xf32> -> vector<1x256xf32>
    %263 = arith.addf %258, %262 : vector<1x256xf32>
    %264 = vector.extract_strided_slice %122 {offsets = [28, 0], sizes = [1, 96], strides = [1, 1]} : vector<128x96xbf16> to vector<1x96xbf16>
    %c28 = arith.constant 28 : index
    %c0_193 = arith.constant 0 : index
    %c0_194 = arith.constant 0 : index
    %265 = vector.load %arg5[%c28, %c0_193, %c0_194] : memref<32x96x256xbf16, #tpu.memory_space<vmem>>, vector<1x96x256xbf16>
    %266 = vector.shape_cast %265 : vector<1x96x256xbf16> to vector<96x256xbf16>
    %cst_195 = arith.constant dense<0.000000e+00> : vector<1x256xf32>
    %267 = tpu.matmul %264, %266, %cst_195 {dimension_numbers = #tpu.dot_dimension_numbers<[1], [0], [0], [1], [0, 0, 1, 1], [], []>} : vector<1x96xbf16>, vector<96x256xbf16>, vector<1x256xf32> -> vector<1x256xf32>
    %268 = arith.addf %263, %267 : vector<1x256xf32>
    %269 = vector.extract_strided_slice %122 {offsets = [29, 0], sizes = [1, 96], strides = [1, 1]} : vector<128x96xbf16> to vector<1x96xbf16>
    %c29 = arith.constant 29 : index
    %c0_196 = arith.constant 0 : index
    %c0_197 = arith.constant 0 : index
    %270 = vector.load %arg5[%c29, %c0_196, %c0_197] : memref<32x96x256xbf16, #tpu.memory_space<vmem>>, vector<1x96x256xbf16>
    %271 = vector.shape_cast %270 : vector<1x96x256xbf16> to vector<96x256xbf16>
    %cst_198 = arith.constant dense<0.000000e+00> : vector<1x256xf32>
    %272 = tpu.matmul %269, %271, %cst_198 {dimension_numbers = #tpu.dot_dimension_numbers<[1], [0], [0], [1], [0, 0, 1, 1], [], []>} : vector<1x96xbf16>, vector<96x256xbf16>, vector<1x256xf32> -> vector<1x256xf32>
    %273 = arith.addf %268, %272 : vector<1x256xf32>
    %274 = vector.extract_strided_slice %122 {offsets = [30, 0], sizes = [1, 96], strides = [1, 1]} : vector<128x96xbf16> to vector<1x96xbf16>
    %c30 = arith.constant 30 : index
    %c0_199 = arith.constant 0 : index
    %c0_200 = arith.constant 0 : index
    %275 = vector.load %arg5[%c30, %c0_199, %c0_200] : memref<32x96x256xbf16, #tpu.memory_space<vmem>>, vector<1x96x256xbf16>
    %276 = vector.shape_cast %275 : vector<1x96x256xbf16> to vector<96x256xbf16>
    %cst_201 = arith.constant dense<0.000000e+00> : vector<1x256xf32>
    %277 = tpu.matmul %274, %276, %cst_201 {dimension_numbers = #tpu.dot_dimension_numbers<[1], [0], [0], [1], [0, 0, 1, 1], [], []>} : vector<1x96xbf16>, vector<96x256xbf16>, vector<1x256xf32> -> vector<1x256xf32>
    %278 = arith.addf %273, %277 : vector<1x256xf32>
    %279 = vector.extract_strided_slice %122 {offsets = [31, 0], sizes = [1, 96], strides = [1, 1]} : vector<128x96xbf16> to vector<1x96xbf16>
    %c31 = arith.constant 31 : index
    %c0_202 = arith.constant 0 : index
    %c0_203 = arith.constant 0 : index
    %280 = vector.load %arg5[%c31, %c0_202, %c0_203] : memref<32x96x256xbf16, #tpu.memory_space<vmem>>, vector<1x96x256xbf16>
    %281 = vector.shape_cast %280 : vector<1x96x256xbf16> to vector<96x256xbf16>
    %cst_204 = arith.constant dense<0.000000e+00> : vector<1x256xf32>
    %282 = tpu.matmul %279, %281, %cst_204 {dimension_numbers = #tpu.dot_dimension_numbers<[1], [0], [0], [1], [0, 0, 1, 1], [], []>} : vector<1x96xbf16>, vector<96x256xbf16>, vector<1x256xf32> -> vector<1x256xf32>
    %283 = arith.addf %278, %282 : vector<1x256xf32>
    %c0_205 = arith.constant 0 : index
    %c0_206 = arith.constant 0 : index
    %284 = vector.load %arg6[%c0_205, %c0_206] : memref<1x256xf32, #tpu.memory_space<vmem>>, vector<1x256xf32>
    %285 = arith.addf %283, %284 : vector<1x256xf32>
    %cst_207 = arith.constant 0.000000e+00 : f32
    %286 = vector.broadcast %cst_207 : f32 to vector<1x256xf32>
    %287 = arith.maximumf %285, %286 : vector<1x256xf32>
    %288 = arith.truncf %287 : vector<1x256xf32> to vector<1x256xbf16>
    %c0_208 = arith.constant 0 : index
    %c0_209 = arith.constant 0 : index
    %289 = vector.load %arg7[%c0_208, %c0_209] : memref<256x128xbf16, #tpu.memory_space<vmem>>, vector<256x128xbf16>
    %cst_210 = arith.constant dense<0.000000e+00> : vector<1x128xf32>
    %290 = tpu.matmul %288, %289, %cst_210 {dimension_numbers = #tpu.dot_dimension_numbers<[1], [0], [0], [1], [0, 0, 1, 1], [], []>} : vector<1x256xbf16>, vector<256x128xbf16>, vector<1x128xf32> -> vector<1x128xf32>
    %c0_211 = arith.constant 0 : index
    %c0_212 = arith.constant 0 : index
    %291 = vector.load %arg8[%c0_211, %c0_212] : memref<1x128xf32, #tpu.memory_space<vmem>>, vector<1x128xf32>
    %292 = arith.addf %290, %291 : vector<1x128xf32>
    %c0_213 = arith.constant 0 : index
    %c0_214 = arith.constant 0 : index
    %293 = vector.load %arg9[%c0_213, %c0_214] : memref<1x128xf32, #tpu.memory_space<vmem>>, vector<1x128xf32>
    tpu.vector_store %arg9[%c0_213, %c0_214], %292 {strides = array<i32>} : memref<1x128xf32, #tpu.memory_space<vmem>>, vector<1x128xf32>,
    return
  }
}

</mosaic_0001>

<llo_original>
// kernel: q_module_forward.1
$region0: #{q_module_forward.1}
  #allocation0 [shape = 'u32[]', space=smem, size = 0x4, offset = 0x4, fixed_abs, tag = 'smem constant byte address 0x4 - core index']
  #allocation1 [shape = 'u32[72,128]{1,0:T(1,128)}', space=vmem, size = 0x9000, scoped, tag = 'internal scratch']
  #allocation2 [shape = 'f32[416,128]{1,0:T(8,128)}', space=vmem, size = 0x34000, scoped, tag = 'scratch operand']
  %s0 = inlined_call_operand.vmem [shape: bf16[400,256], index: 0, kind: input, shape index: {}]
  %s1 = inlined_call_operand.vmem [shape: bf16[256,128], index: 1, kind: input, shape index: {}]
  %s2 = inlined_call_operand.vmem [shape: f32[1,128], index: 2, kind: input, shape index: {}]
  %s3 = inlined_call_operand.vmem [shape: bf16[16,128,128], index: 3, kind: input, shape index: {}]
  %s4 = inlined_call_operand.vmem [shape: f32[128,1], index: 4, kind: input, shape index: {}]
  %s5 = inlined_call_operand.vmem [shape: bf16[32,96,256], index: 5, kind: input, shape index: {}]
  %s6 = inlined_call_operand.vmem [shape: f32[1,256], index: 6, kind: input, shape index: {}]
  %s7 = inlined_call_operand.vmem [shape: bf16[256,128], index: 7, kind: input, shape index: {}]
  %s8 = inlined_call_operand.vmem [shape: f32[1,128], index: 8, kind: input, shape index: {}]
  %s9 = inlined_call_operand.vmem [shape: f32[1,128], index: 9, kind: output, shape index: {}]
  %s10 = sld [smem:[#allocation0]]
  $region46: #{q_module_forward.1} parent=0
    _
  %s12 = ssub.s32 1, %s10
  %s13 = scalar_select 0, %s12, %s10
  // Predicated region
  $region2: #{q_module_forward.1} parent=0 // pred_check
    _
  $region3: #{q_module_forward.1} parent=0 // pred_check_branch
    %15 = sbr.rel (0) target = $region5
  $region4: #{q_module_forward.1} parent=0 // pred_region
    _
  $region5: #{q_module_forward.1} parent=0 // pred_fallthru
    _
  // Predicated region
  $region6: #{q_module_forward.1} parent=0 // pred_check
    _
  $region7: #{q_module_forward.1} parent=0 // pred_check_branch
    %17 = sbr.rel (0) target = $region9
  $region8: #{q_module_forward.1} parent=0 // pred_region
    _
  $region9: #{q_module_forward.1} parent=0 // pred_fallthru
    _
  // Predicated region
  $region10: #{q_module_forward.1} parent=0 // pred_check
    _
  $region11: #{q_module_forward.1} parent=0 // pred_check_branch
    %19 = sbr.rel (0) target = $region13
  $region12: #{q_module_forward.1} parent=0 // pred_region
    _
  $region13: #{q_module_forward.1} parent=0 // pred_fallthru
    _
  // Predicated region
  $region14: #{q_module_forward.1} parent=0 // pred_check
    _
  $region15: #{q_module_forward.1} parent=0 // pred_check_branch
    %21 = sbr.rel (0) target = $region17
  $region16: #{q_module_forward.1} parent=0 // pred_region
    _
  $region17: #{q_module_forward.1} parent=0 // pred_fallthru
    _
  // Predicated region
  $region18: #{q_module_forward.1} parent=0 // pred_check
    _
  $region19: #{q_module_forward.1} parent=0 // pred_check_branch
    %23 = sbr.rel (0) target = $region21
  $region20: #{q_module_forward.1} parent=0 // pred_region
    _
  $region21: #{q_module_forward.1} parent=0 // pred_fallthru
    _
  // Predicated region
  $region22: #{q_module_forward.1} parent=0 // pred_check
    _
  $region23: #{q_module_forward.1} parent=0 // pred_check_branch
    %25 = sbr.rel (0) target = $region25
  $region24: #{q_module_forward.1} parent=0 // pred_region
    _
  $region25: #{q_module_forward.1} parent=0 // pred_fallthru
    _
  // Predicated region
  $region26: #{q_module_forward.1} parent=0 // pred_check
    _
  $region27: #{q_module_forward.1} parent=0 // pred_check_branch
    %27 = sbr.rel (0) target = $region29
  $region28: #{q_module_forward.1} parent=0 // pred_region
    _
  $region29: #{q_module_forward.1} parent=0 // pred_fallthru
    _
  // Predicated region
  $region30: #{q_module_forward.1} parent=0 // pred_check
    _
  $region31: #{q_module_forward.1} parent=0 // pred_check_branch
    %29 = sbr.rel (0) target = $region33
  $region32: #{q_module_forward.1} parent=0 // pred_region
    _
  $region33: #{q_module_forward.1} parent=0 // pred_fallthru
    _
  // Predicated region
  $region34: #{q_module_forward.1} parent=0 // pred_check
    _
  $region35: #{q_module_forward.1} parent=0 // pred_check_branch
    %31 = sbr.rel (0) target = $region37
  $region36: #{q_module_forward.1} parent=0 // pred_region
    _
  $region37: #{q_module_forward.1} parent=0 // pred_fallthru
    _
  %33 = vst [vmem:[#allocation2 + $0x190] sm:$0xff] 0.0
  %34 = vst [vmem:[#allocation2 + $0x198] sm:$0xff] 0.0
  %v35 = vld [vmem:[%s0] sm:$0xff]
  %v36 = vld [vmem:[%s0 + $0x8] sm:$0xff]
  %v37 = vld [vmem:[%s0 + $0x10] sm:$0xff]
  %v38 = vld [vmem:[%s0 + $0x18] sm:$0xff]
  %v39 = vld [vmem:[%s0 + $0x20] sm:$0xff]
  %v40 = vld [vmem:[%s0 + $0x28] sm:$0xff]
  %v41 = vld [vmem:[%s0 + $0x30] sm:$0xff]
  %v42 = vld [vmem:[%s0 + $0x38] sm:$0xff]
  %v43 = vld [vmem:[%s0 + $0x40] sm:$0xff]
  %v44 = vld [vmem:[%s0 + $0x48] sm:$0xff]
  %v45 = vld [vmem:[%s0 + $0x50] sm:$0xff]
  %v46 = vld [vmem:[%s0 + $0x58] sm:$0xff]
  %v47 = vld [vmem:[%s0 + $0x60] sm:$0xff]
  %v48 = vld [vmem:[%s0 + $0x68] sm:$0xff]
  %v49 = vld [vmem:[%s0 + $0x70] sm:$0xff]
  %v50 = vld [vmem:[%s0 + $0x78] sm:$0xff]
  %v51 = vld [vmem:[%s0 + $0x80] sm:$0xff]
  %v52 = vld [vmem:[%s0 + $0x88] sm:$0xff]
  %v53 = vld [vmem:[%s0 + $0x90] sm:$0xff]
  %v54 = vld [vmem:[%s0 + $0x98] sm:$0xff]
  %v55 = vld [vmem:[%s0 + $0xa0] sm:$0xff]
  %v56 = vld [vmem:[%s0 + $0xa8] sm:$0xff]
  %v57 = vld [vmem:[%s0 + $0xb0] sm:$0xff]
  %v58 = vld [vmem:[%s0 + $0xb8] sm:$0xff]
  %v59 = vld [vmem:[%s0 + $0xc0] sm:$0xff]
  %v60 = vld [vmem:[%s0 + $0xc8] sm:$0xff]
  %v61 = vld [vmem:[%s1] sm:$0xf]
  %v62 = vld [vmem:[%s1 + $0x4] sm:$0xf]
  %v63 = vld [vmem:[%s1 + $0x8] sm:$0xf]
  %v64 = vld [vmem:[%s1 + $0xc] sm:$0xf]
  %v65 = vld [vmem:[%s1 + $0x10] sm:$0xf]
  %v66 = vld [vmem:[%s1 + $0x14] sm:$0xf]
  %v67 = vld [vmem:[%s1 + $0x18] sm:$0xf]
  %v68 = vld [vmem:[%s1 + $0x1c] sm:$0xf]
  %v69 = vld [vmem:[%s1 + $0x20] sm:$0xf]
  %v70 = vld [vmem:[%s1 + $0x24] sm:$0xf]
  %v71 = vld [vmem:[%s1 + $0x28] sm:$0xf]
  %v72 = vld [vmem:[%s1 + $0x2c] sm:$0xf]
  %v73 = vld [vmem:[%s1 + $0x30] sm:$0xf]
  %v74 = vld [vmem:[%s1 + $0x34] sm:$0xf]
  %v75 = vld [vmem:[%s1 + $0x38] sm:$0xf]
  %v76 = vld [vmem:[%s1 + $0x3c] sm:$0xf]
  %v77 = vld [vmem:[%s1 + $0x40] sm:$0xf]
  %v78 = vld [vmem:[%s1 + $0x44] sm:$0xf]
  %v79 = vld [vmem:[%s1 + $0x48] sm:$0xf]
  %v80 = vld [vmem:[%s1 + $0x4c] sm:$0xf]
  %v81 = vld [vmem:[%s1 + $0x50] sm:$0xf]
  %v82 = vld [vmem:[%s1 + $0x54] sm:$0xf]
  %v83 = vld [vmem:[%s1 + $0x58] sm:$0xf]
  %v84 = vld [vmem:[%s1 + $0x5c] sm:$0xf]
  %v85 = vld [vmem:[%s1 + $0x60] sm:$0xf]
  %v86 = vld [vmem:[%s1 + $0x64] sm:$0xf]
  %v87 = vld [vmem:[%s1 + $0x68] sm:$0xf]
  %v88 = vld [vmem:[%s1 + $0x6c] sm:$0xf]
  %v89 = vld [vmem:[%s1 + $0x70] sm:$0xf]
  %v90 = vld [vmem:[%s1 + $0x74] sm:$0xf]
  %v91 = vld [vmem:[%s1 + $0x78] sm:$0xf]
  %v92 = vld [vmem:[%s1 + $0x7c] sm:$0xf]
  %v93 = vld [vmem:[%s2] sm:$0x1]
  %v95 = vperm.slane %v93, 0
  %v123 = vunpack.c.l.b16 %v35
  %v124 = vunpack.c.h.b16 %v35
  %v125 = vunpack.c.l.b16 %v36
  %v126 = vunpack.c.h.b16 %v36
  %v127 = vunpack.c.l.b16 %v37
  %v128 = vunpack.c.h.b16 %v37
  %v129 = vunpack.c.l.b16 %v38
  %v130 = vunpack.c.h.b16 %v38
  %v131 = vunpack.c.l.b16 %v39
  %v132 = vunpack.c.h.b16 %v39
  %v133 = vunpack.c.l.b16 %v40
  %v134 = vunpack.c.h.b16 %v40
  %v135 = vunpack.c.l.b16 %v41
  %v136 = vunpack.c.h.b16 %v41
  %v137 = vunpack.c.l.b16 %v42
  %v138 = vunpack.c.h.b16 %v42
  %v139 = vunpack.c.l.b16 %v43
  %v140 = vunpack.c.h.b16 %v43
  %v141 = vunpack.c.l.b16 %v44
  %v142 = vunpack.c.h.b16 %v44
  %v143 = vunpack.c.l.b16 %v45
  %v144 = vunpack.c.h.b16 %v45
  %v145 = vunpack.c.l.b16 %v46
  %v146 = vunpack.c.h.b16 %v46
  %v147 = vunpack.c.l.b16 %v47
  %v148 = vunpack.c.h.b16 %v47
  %v149 = vunpack.c.l.b16 %v48
  %v150 = vunpack.c.h.b16 %v48
  %v151 = vunpack.c.l.b16 %v49
  %v152 = vunpack.c.h.b16 %v49
  %v153 = vunpack.c.l.b16 %v50
  %v154 = vunpack.c.h.b16 %v50
  %v155 = vunpack.c.l.b16 %v51
  %v156 = vunpack.c.h.b16 %v51
  %v157 = vunpack.c.l.b16 %v52
  %v158 = vunpack.c.h.b16 %v52
  %v159 = vunpack.c.l.b16 %v53
  %v160 = vunpack.c.h.b16 %v53
  %v161 = vunpack.c.l.b16 %v54
  %v162 = vunpack.c.h.b16 %v54
  %v163 = vunpack.c.l.b16 %v55
  %v164 = vunpack.c.h.b16 %v55
  %v165 = vunpack.c.l.b16 %v56
  %v166 = vunpack.c.h.b16 %v56
  %v167 = vunpack.c.l.b16 %v57
  %v168 = vunpack.c.h.b16 %v57
  %v169 = vunpack.c.l.b16 %v58
  %v170 = vunpack.c.h.b16 %v58
  %v171 = vunpack.c.l.b16 %v59
  %v172 = vunpack.c.h.b16 %v59
  %v173 = vunpack.c.l.b16 %v60
  %v174 = vunpack.c.h.b16 %v60
  %v175 = vpack.c.b16 %v125, %v123
  %v176 = vpack.c.b16 %v126, %v124
  %v177 = vpack.c.b16 %v129, %v127
  %v178 = vpack.c.b16 %v130, %v128
  %v179 = vpack.c.b16 %v133, %v131
  %v180 = vpack.c.b16 %v134, %v132
  %v181 = vpack.c.b16 %v137, %v135
  %v182 = vpack.c.b16 %v138, %v136
  %v183 = vpack.c.b16 %v141, %v139
  %v184 = vpack.c.b16 %v142, %v140
  %v185 = vpack.c.b16 %v145, %v143
  %v186 = vpack.c.b16 %v146, %v144
  %v187 = vpack.c.b16 %v149, %v147
  %v188 = vpack.c.b16 %v150, %v148
  %v189 = vpack.c.b16 %v153, %v151
  %v190 = vpack.c.b16 %v154, %v152
  %v191 = vpack.c.b16 %v157, %v155
  %v192 = vpack.c.b16 %v158, %v156
  %v193 = vpack.c.b16 %v161, %v159
  %v194 = vpack.c.b16 %v162, %v160
  %v195 = vpack.c.b16 %v165, %v163
  %v196 = vpack.c.b16 %v166, %v164
  %v197 = vpack.c.b16 %v169, %v167
  %v198 = vpack.c.b16 %v170, %v168
  %v199 = vpack.c.b16 %v173, %v171
  %v200 = vpack.c.b16 %v174, %v172
  %v259 = vunpack.c.l.b16 %v61
  %v260 = vunpack.c.l.b16 %v62
  %v261 = vunpack.c.l.b16 %v63
  %v262 = vunpack.c.l.b16 %v64
  %v263 = vunpack.c.l.b16 %v65
  %v264 = vunpack.c.l.b16 %v66
  %v265 = vunpack.c.l.b16 %v67
  %v266 = vunpack.c.l.b16 %v68
  %v267 = vunpack.c.l.b16 %v69
  %v268 = vunpack.c.l.b16 %v70
  %v269 = vunpack.c.l.b16 %v71
  %v270 = vunpack.c.l.b16 %v72
  %v271 = vunpack.c.l.b16 %v73
  %v272 = vunpack.c.l.b16 %v74
  %v273 = vunpack.c.l.b16 %v75
  %v274 = vunpack.c.l.b16 %v76
  %v275 = vunpack.c.l.b16 %v77
  %v276 = vunpack.c.l.b16 %v78
  %v277 = vunpack.c.l.b16 %v79
  %v278 = vunpack.c.l.b16 %v80
  %v279 = vunpack.c.l.b16 %v81
  %v280 = vunpack.c.l.b16 %v82
  %v281 = vunpack.c.l.b16 %v83
  %v282 = vunpack.c.l.b16 %v84
  %v283 = vunpack.c.l.b16 %v85
  %v284 = vunpack.c.l.b16 %v86
  %v285 = vunpack.c.l.b16 %v87
  %v286 = vunpack.c.l.b16 %v88
  %v287 = vunpack.c.l.b16 %v89
  %v288 = vunpack.c.l.b16 %v90
  %v289 = vunpack.c.l.b16 %v91
  %v290 = vunpack.c.l.b16 %v92
  %v291 = vpack.c.b16 %v260, %v259
  %v292 = vpack.c.b16 %v262, %v261
  %v293 = vpack.c.b16 %v264, %v263
  %v294 = vpack.c.b16 %v266, %v265
  %v295 = vpack.c.b16 %v268, %v267
  %v296 = vpack.c.b16 %v270, %v269
  %v297 = vpack.c.b16 %v272, %v271
  %v298 = vpack.c.b16 %v274, %v273
  %v299 = vpack.c.b16 %v276, %v275
  %v300 = vpack.c.b16 %v278, %v277
  %v301 = vpack.c.b16 %v280, %v279
  %v302 = vpack.c.b16 %v282, %v281
  %v303 = vpack.c.b16 %v284, %v283
  %v304 = vpack.c.b16 %v286, %v285
  %v305 = vpack.c.b16 %v288, %v287
  %v306 = vpack.c.b16 %v290, %v289
  %323 = vmatpush.bf16.msra.mxu0 %v298
  %324 = vmatpush.bf16.msra.mxu0 %v297
  %325 = vmatpush.bf16.msra.mxu0 %v296
  %326 = vmatpush.bf16.msra.mxu0 %v295
  %327 = vmatpush.bf16.msra.mxu0 %v294
  %328 = vmatpush.bf16.msra.mxu0 %v293
  %329 = vmatpush.bf16.msra.mxu0 %v292
  %330 = vmatpush.bf16.msra.mxu0 %v291
  %331 = vmatmul.bf16.gmra.mxu0 %v175
  %v332 = vpop.f32.mrf.mxu0
  %v333 = vadd.f32 %v95, %v332
  %v334 = vpop.f32.mrf.mxu0
  %v335 = vadd.f32 %v95, %v334
  %336 = vmatmul.bf16.gmra.mxu0 %v177
  %v337 = vpop.f32.mrf.mxu0
  %v338 = vadd.f32 %v95, %v337
  %v339 = vpop.f32.mrf.mxu0
  %v340 = vadd.f32 %v95, %v339
  %341 = vmatmul.bf16.gmra.mxu0 %v179
  %v342 = vpop.f32.mrf.mxu0
  %v343 = vadd.f32 %v95, %v342
  %v344 = vpop.f32.mrf.mxu0
  %v345 = vadd.f32 %v95, %v344
  %346 = vmatmul.bf16.gmra.mxu0 %v181
  %v347 = vpop.f32.mrf.mxu0
  %v348 = vadd.f32 %v95, %v347
  %v349 = vpop.f32.mrf.mxu0
  %v350 = vadd.f32 %v95, %v349
  %351 = vmatmul.bf16.gmra.mxu0 %v183
  %v352 = vpop.f32.mrf.mxu0
  %v353 = vadd.f32 %v95, %v352
  %v354 = vpop.f32.mrf.mxu0
  %v355 = vadd.f32 %v95, %v354
  %356 = vmatmul.bf16.gmra.mxu0 %v185
  %v357 = vpop.f32.mrf.mxu0
  %v358 = vadd.f32 %v95, %v357
  %v359 = vpop.f32.mrf.mxu0
  %v360 = vadd.f32 %v95, %v359
  %361 = vmatmul.bf16.gmra.mxu0 %v187
  %v362 = vpop.f32.mrf.mxu0
  %v363 = vadd.f32 %v95, %v362
  %v364 = vpop.f32.mrf.mxu0
  %v365 = vadd.f32 %v95, %v364
  %366 = vmatmul.bf16.gmra.mxu0 %v189
  %v367 = vpop.f32.mrf.mxu0
  %v368 = vadd.f32 %v95, %v367
  %v369 = vpop.f32.mrf.mxu0
  %v370 = vadd.f32 %v95, %v369
  %371 = vmatmul.bf16.gmra.mxu0 %v191
  %v372 = vpop.f32.mrf.mxu0
  %v373 = vadd.f32 %v95, %v372
  %v374 = vpop.f32.mrf.mxu0
  %v375 = vadd.f32 %v95, %v374
  %376 = vmatmul.bf16.gmra.mxu0 %v193
  %v377 = vpop.f32.mrf.mxu0
  %v378 = vadd.f32 %v95, %v377
  %v379 = vpop.f32.mrf.mxu0
  %v380 = vadd.f32 %v95, %v379
  %381 = vmatmul.bf16.gmra.mxu0 %v195
  %v382 = vpop.f32.mrf.mxu0
  %v383 = vadd.f32 %v95, %v382
  %v384 = vpop.f32.mrf.mxu0
  %v385 = vadd.f32 %v95, %v384
  %386 = vmatmul.bf16.gmra.mxu0 %v197
  %v387 = vpop.f32.mrf.mxu0
  %v388 = vadd.f32 %v95, %v387
  %v389 = vpop.f32.mrf.mxu0
  %v390 = vadd.f32 %v95, %v389
  %391 = vmatmul.bf16.gmra.mxu0 %v199
  %v392 = vpop.f32.mrf.mxu0
  %v393 = vadd.f32 %v95, %v392
  %v394 = vpop.f32.mrf.mxu0
  %v395 = vadd.f32 %v95, %v394
  %396 = vdwg.mxu0
  %397 = vmatpush.bf16.msra.mxu0 %v306
  %398 = vmatpush.bf16.msra.mxu0 %v305
  %399 = vmatpush.bf16.msra.mxu0 %v304
  %400 = vmatpush.bf16.msra.mxu0 %v303
  %401 = vmatpush.bf16.msra.mxu0 %v302
  %402 = vmatpush.bf16.msra.mxu0 %v301
  %403 = vmatpush.bf16.msra.mxu0 %v300
  %404 = vmatpush.bf16.msra.mxu0 %v299
  %405 = vmatmul.bf16.gmra.mxu0 %v176
  %v406 = vpop.f32.mrf.mxu0
  %v407 = vadd.f32 %v333, %v406
  %v408 = vpop.f32.mrf.mxu0
  %v409 = vadd.f32 %v335, %v408
  %410 = vmatmul.bf16.gmra.mxu0 %v178
  %v411 = vpop.f32.mrf.mxu0
  %v412 = vadd.f32 %v338, %v411
  %v413 = vpop.f32.mrf.mxu0
  %v414 = vadd.f32 %v340, %v413
  %415 = vmatmul.bf16.gmra.mxu0 %v180
  %v416 = vpop.f32.mrf.mxu0
  %v417 = vadd.f32 %v343, %v416
  %v418 = vpop.f32.mrf.mxu0
  %v419 = vadd.f32 %v345, %v418
  %420 = vmatmul.bf16.gmra.mxu0 %v182
  %v421 = vpop.f32.mrf.mxu0
  %v422 = vadd.f32 %v348, %v421
  %v423 = vpop.f32.mrf.mxu0
  %v424 = vadd.f32 %v350, %v423
  %425 = vmatmul.bf16.gmra.mxu0 %v184
  %v426 = vpop.f32.mrf.mxu0
  %v427 = vadd.f32 %v353, %v426
  %v428 = vpop.f32.mrf.mxu0
  %v429 = vadd.f32 %v355, %v428
  %430 = vmatmul.bf16.gmra.mxu0 %v186
  %v431 = vpop.f32.mrf.mxu0
  %v432 = vadd.f32 %v358, %v431
  %v433 = vpop.f32.mrf.mxu0
  %v434 = vadd.f32 %v360, %v433
  %435 = vmatmul.bf16.gmra.mxu0 %v188
  %v436 = vpop.f32.mrf.mxu0
  %v437 = vadd.f32 %v363, %v436
  %v438 = vpop.f32.mrf.mxu0
  %v439 = vadd.f32 %v365, %v438
  %440 = vmatmul.bf16.gmra.mxu0 %v190
  %v441 = vpop.f32.mrf.mxu0
  %v442 = vadd.f32 %v368, %v441
  %v443 = vpop.f32.mrf.mxu0
  %v444 = vadd.f32 %v370, %v443
  %445 = vmatmul.bf16.gmra.mxu0 %v192
  %v446 = vpop.f32.mrf.mxu0
  %v447 = vadd.f32 %v373, %v446
  %v448 = vpop.f32.mrf.mxu0
  %v449 = vadd.f32 %v375, %v448
  %450 = vmatmul.bf16.gmra.mxu0 %v194
  %v451 = vpop.f32.mrf.mxu0
  %v452 = vadd.f32 %v378, %v451
  %v453 = vpop.f32.mrf.mxu0
  %v454 = vadd.f32 %v380, %v453
  %455 = vmatmul.bf16.gmra.mxu0 %v196
  %v456 = vpop.f32.mrf.mxu0
  %v457 = vadd.f32 %v383, %v456
  %v458 = vpop.f32.mrf.mxu0
  %v459 = vadd.f32 %v385, %v458
  %460 = vmatmul.bf16.gmra.mxu0 %v198
  %v461 = vpop.f32.mrf.mxu0
  %v462 = vadd.f32 %v388, %v461
  %v463 = vpop.f32.mrf.mxu0
  %v464 = vadd.f32 %v390, %v463
  %465 = vmatmul.bf16.gmra.mxu0 %v200
  %v466 = vpop.f32.mrf.mxu0
  %v467 = vadd.f32 %v393, %v466
  %v468 = vpop.f32.mrf.mxu0
  %v469 = vadd.f32 %v395, %v468
  %470 = vdwg.mxu0
  %v471 = vmax.f32 %v407, 0.0
  %v472 = vmax.f32 %v409, 0.0
  %v473 = vmax.f32 %v412, 0.0
  %v474 = vmax.f32 %v414, 0.0
  %v475 = vmax.f32 %v417, 0.0
  %v476 = vmax.f32 %v419, 0.0
  %v477 = vmax.f32 %v422, 0.0
  %v478 = vmax.f32 %v424, 0.0
  %v479 = vmax.f32 %v427, 0.0
  %v480 = vmax.f32 %v429, 0.0
  %v481 = vmax.f32 %v432, 0.0
  %v482 = vmax.f32 %v434, 0.0
  %v483 = vmax.f32 %v437, 0.0
  %v484 = vmax.f32 %v439, 0.0
  %v485 = vmax.f32 %v442, 0.0
  %v486 = vmax.f32 %v444, 0.0
  %v487 = vmax.f32 %v447, 0.0
  %v488 = vmax.f32 %v449, 0.0
  %v489 = vmax.f32 %v452, 0.0
  %v490 = vmax.f32 %v454, 0.0
  %v491 = vmax.f32 %v457, 0.0
  %v492 = vmax.f32 %v459, 0.0
  %v493 = vmax.f32 %v462, 0.0
  %v494 = vmax.f32 %v464, 0.0
  %v495 = vmax.f32 %v467, 0.0
  %v496 = vmax.f32 %v469, 0.0
  %497 = vst [vmem:[#allocation2] sm:$0xff] %v471
  %498 = vst [vmem:[#allocation2 + $0x8] sm:$0xff] %v472
  %499 = vst [vmem:[#allocation2 + $0x10] sm:$0xff] %v473
  %500 = vst [vmem:[#allocation2 + $0x18] sm:$0xff] %v474
  %501 = vst [vmem:[#allocation2 + $0x20] sm:$0xff] %v475
  %502 = vst [vmem:[#allocation2 + $0x28] sm:$0xff] %v476
  %503 = vst [vmem:[#allocation2 + $0x30] sm:$0xff] %v477
  %504 = vst [vmem:[#allocation2 + $0x38] sm:$0xff] %v478
  %505 = vst [vmem:[#allocation2 + $0x40] sm:$0xff] %v479
  %506 = vst [vmem:[#allocation2 + $0x48] sm:$0xff] %v480
  %507 = vst [vmem:[#allocation2 + $0x50] sm:$0xff] %v481
  %508 = vst [vmem:[#allocation2 + $0x58] sm:$0xff] %v482
  %509 = vst [vmem:[#allocation2 + $0x60] sm:$0xff] %v483
  %510 = vst [vmem:[#allocation2 + $0x68] sm:$0xff] %v484
  %511 = vst [vmem:[#allocation2 + $0x70] sm:$0xff] %v485
  %512 = vst [vmem:[#allocation2 + $0x78] sm:$0xff] %v486
  %513 = vst [vmem:[#allocation2 + $0x80] sm:$0xff] %v487
  %514 = vst [vmem:[#allocation2 + $0x88] sm:$0xff] %v488
  %515 = vst [vmem:[#allocation2 + $0x90] sm:$0xff] %v489
  %516 = vst [vmem:[#allocation2 + $0x98] sm:$0xff] %v490
  %517 = vst [vmem:[#allocation2 + $0xa0] sm:$0xff] %v491
  %518 = vst [vmem:[#allocation2 + $0xa8] sm:$0xff] %v492
  %519 = vst [vmem:[#allocation2 + $0xb0] sm:$0xff] %v493
  %520 = vst [vmem:[#allocation2 + $0xb8] sm:$0xff] %v494
  %521 = vst [vmem:[#allocation2 + $0xc0] sm:$0xff] %v495
  %522 = vst [vmem:[#allocation2 + $0xc8] sm:$0xff] %v496
  %v523 = vld [vmem:[%s0 + $0xd0] sm:$0xff]
  %v524 = vld [vmem:[%s0 + $0xd8] sm:$0xff]
  %v525 = vld [vmem:[%s0 + $0xe0] sm:$0xff]
  %v526 = vld [vmem:[%s0 + $0xe8] sm:$0xff]
  %v527 = vld [vmem:[%s0 + $0xf0] sm:$0xff]
  %v528 = vld [vmem:[%s0 + $0xf8] sm:$0xff]
  %v529 = vld [vmem:[%s0 + $0x100] sm:$0xff]
  %v530 = vld [vmem:[%s0 + $0x108] sm:$0xff]
  %v531 = vld [vmem:[%s0 + $0x110] sm:$0xff]
  %v532 = vld [vmem:[%s0 + $0x118] sm:$0xff]
  %v533 = vld [vmem:[%s0 + $0x120] sm:$0xff]
  %v534 = vld [vmem:[%s0 + $0x128] sm:$0xff]
  %v535 = vld [vmem:[%s0 + $0x130] sm:$0xff]
  %v536 = vld [vmem:[%s0 + $0x138] sm:$0xff]
  %v537 = vld [vmem:[%s0 + $0x140] sm:$0xff]
  %v538 = vld [vmem:[%s0 + $0x148] sm:$0xff]
  %v539 = vld [vmem:[%s0 + $0x150] sm:$0xff]
  %v540 = vld [vmem:[%s0 + $0x158] sm:$0xff]
  %v541 = vld [vmem:[%s0 + $0x160] sm:$0xff]
  %v542 = vld [vmem:[%s0 + $0x168] sm:$0xff]
  %v543 = vld [vmem:[%s0 + $0x170] sm:$0xff]
  %v544 = vld [vmem:[%s0 + $0x178] sm:$0xff]
  %v545 = vld [vmem:[%s0 + $0x180] sm:$0xff]
  %v546 = vld [vmem:[%s0 + $0x188] sm:$0xff]
  %v547 = vld [vmem:[%s1] sm:$0xf]
  %v548 = vld [vmem:[%s1 + $0x4] sm:$0xf]
  %v549 = vld [vmem:[%s1 + $0x8] sm:$0xf]
  %v550 = vld [vmem:[%s1 + $0xc] sm:$0xf]
  %v551 = vld [vmem:[%s1 + $0x10] sm:$0xf]
  %v552 = vld [vmem:[%s1 + $0x14] sm:$0xf]
  %v553 = vld [vmem:[%s1 + $0x18] sm:$0xf]
  %v554 = vld [vmem:[%s1 + $0x1c] sm:$0xf]
  %v555 = vld [vmem:[%s1 + $0x20] sm:$0xf]
  %v556 = vld [vmem:[%s1 + $0x24] sm:$0xf]
  %v557 = vld [vmem:[%s1 + $0x28] sm:$0xf]
  %v558 = vld [vmem:[%s1 + $0x2c] sm:$0xf]
  %v559 = vld [vmem:[%s1 + $0x30] sm:$0xf]
  %v560 = vld [vmem:[%s1 + $0x34] sm:$0xf]
  %v561 = vld [vmem:[%s1 + $0x38] sm:$0xf]
  %v562 = vld [vmem:[%s1 + $0x3c] sm:$0xf]
  %v563 = vld [vmem:[%s1 + $0x40] sm:$0xf]
  %v564 = vld [vmem:[%s1 + $0x44] sm:$0xf]
  %v565 = vld [vmem:[%s1 + $0x48] sm:$0xf]
  %v566 = vld [vmem:[%s1 + $0x4c] sm:$0xf]
  %v567 = vld [vmem:[%s1 + $0x50] sm:$0xf]
  %v568 = vld [vmem:[%s1 + $0x54] sm:$0xf]
  %v569 = vld [vmem:[%s1 + $0x58] sm:$0xf]
  %v570 = vld [vmem:[%s1 + $0x5c] sm:$0xf]
  %v571 = vld [vmem:[%s1 + $0x60] sm:$0xf]
  %v572 = vld [vmem:[%s1 + $0x64] sm:$0xf]
  %v573 = vld [vmem:[%s1 + $0x68] sm:$0xf]
  %v574 = vld [vmem:[%s1 + $0x6c] sm:$0xf]
  %v575 = vld [vmem:[%s1 + $0x70] sm:$0xf]
  %v576 = vld [vmem:[%s1 + $0x74] sm:$0xf]
  %v577 = vld [vmem:[%s1 + $0x78] sm:$0xf]
  %v578 = vld [vmem:[%s1 + $0x7c] sm:$0xf]
  %v579 = vld [vmem:[%s2] sm:$0x1]
  %v581 = vperm.slane %v579, 0
  %v607 = vunpack.c.l.b16 %v523
  %v608 = vunpack.c.h.b16 %v523
  %v609 = vunpack.c.l.b16 %v524
  %v610 = vunpack.c.h.b16 %v524
  %v611 = vunpack.c.l.b16 %v525
  %v612 = vunpack.c.h.b16 %v525
  %v613 = vunpack.c.l.b16 %v526
  %v614 = vunpack.c.h.b16 %v526
  %v615 = vunpack.c.l.b16 %v527
  %v616 = vunpack.c.h.b16 %v527
  %v617 = vunpack.c.l.b16 %v528
  %v618 = vunpack.c.h.b16 %v528
  %v619 = vunpack.c.l.b16 %v529
  %v620 = vunpack.c.h.b16 %v529
  %v621 = vunpack.c.l.b16 %v530
  %v622 = vunpack.c.h.b16 %v530
  %v623 = vunpack.c.l.b16 %v531
  %v624 = vunpack.c.h.b16 %v531
  %v625 = vunpack.c.l.b16 %v532
  %v626 = vunpack.c.h.b16 %v532
  %v627 = vunpack.c.l.b16 %v533
  %v628 = vunpack.c.h.b16 %v533
  %v629 = vunpack.c.l.b16 %v534
  %v630 = vunpack.c.h.b16 %v534
  %v631 = vunpack.c.l.b16 %v535
  %v632 = vunpack.c.h.b16 %v535
  %v633 = vunpack.c.l.b16 %v536
  %v634 = vunpack.c.h.b16 %v536
  %v635 = vunpack.c.l.b16 %v537
  %v636 = vunpack.c.h.b16 %v537
  %v637 = vunpack.c.l.b16 %v538
  %v638 = vunpack.c.h.b16 %v538
  %v639 = vunpack.c.l.b16 %v539
  %v640 = vunpack.c.h.b16 %v539
  %v641 = vunpack.c.l.b16 %v540
  %v642 = vunpack.c.h.b16 %v540
  %v643 = vunpack.c.l.b16 %v541
  %v644 = vunpack.c.h.b16 %v541
  %v645 = vunpack.c.l.b16 %v542
  %v646 = vunpack.c.h.b16 %v542
  %v647 = vunpack.c.l.b16 %v543
  %v648 = vunpack.c.h.b16 %v543
  %v649 = vunpack.c.l.b16 %v544
  %v650 = vunpack.c.h.b16 %v544
  %v651 = vunpack.c.l.b16 %v545
  %v652 = vunpack.c.h.b16 %v545
  %v653 = vunpack.c.l.b16 %v546
  %v654 = vunpack.c.h.b16 %v546
  %v655 = vpack.c.b16 %v609, %v607
  %v656 = vpack.c.b16 %v610, %v608
  %v657 = vpack.c.b16 %v613, %v611
  %v658 = vpack.c.b16 %v614, %v612
  %v659 = vpack.c.b16 %v617, %v615
  %v660 = vpack.c.b16 %v618, %v616
  %v661 = vpack.c.b16 %v621, %v619
  %v662 = vpack.c.b16 %v622, %v620
  %v663 = vpack.c.b16 %v625, %v623
  %v664 = vpack.c.b16 %v626, %v624
  %v665 = vpack.c.b16 %v629, %v627
  %v666 = vpack.c.b16 %v630, %v628
  %v667 = vpack.c.b16 %v633, %v631
  %v668 = vpack.c.b16 %v634, %v632
  %v669 = vpack.c.b16 %v637, %v635
  %v670 = vpack.c.b16 %v638, %v636
  %v671 = vpack.c.b16 %v641, %v639
  %v672 = vpack.c.b16 %v642, %v640
  %v673 = vpack.c.b16 %v645, %v643
  %v674 = vpack.c.b16 %v646, %v644
  %v675 = vpack.c.b16 %v649, %v647
  %v676 = vpack.c.b16 %v650, %v648
  %v677 = vpack.c.b16 %v653, %v651
  %v678 = vpack.c.b16 %v654, %v652
  %v735 = vunpack.c.l.b16 %v547
  %v736 = vunpack.c.l.b16 %v548
  %v737 = vunpack.c.l.b16 %v549
  %v738 = vunpack.c.l.b16 %v550
  %v739 = vunpack.c.l.b16 %v551
  %v740 = vunpack.c.l.b16 %v552
  %v741 = vunpack.c.l.b16 %v553
  %v742 = vunpack.c.l.b16 %v554
  %v743 = vunpack.c.l.b16 %v555
  %v744 = vunpack.c.l.b16 %v556
  %v745 = vunpack.c.l.b16 %v557
  %v746 = vunpack.c.l.b16 %v558
  %v747 = vunpack.c.l.b16 %v559
  %v748 = vunpack.c.l.b16 %v560
  %v749 = vunpack.c.l.b16 %v561
  %v750 = vunpack.c.l.b16 %v562
  %v751 = vunpack.c.l.b16 %v563
  %v752 = vunpack.c.l.b16 %v564
  %v753 = vunpack.c.l.b16 %v565
  %v754 = vunpack.c.l.b16 %v566
  %v755 = vunpack.c.l.b16 %v567
  %v756 = vunpack.c.l.b16 %v568
  %v757 = vunpack.c.l.b16 %v569
  %v758 = vunpack.c.l.b16 %v570
  %v759 = vunpack.c.l.b16 %v571
  %v760 = vunpack.c.l.b16 %v572
  %v761 = vunpack.c.l.b16 %v573
  %v762 = vunpack.c.l.b16 %v574
  %v763 = vunpack.c.l.b16 %v575
  %v764 = vunpack.c.l.b16 %v576
  %v765 = vunpack.c.l.b16 %v577
  %v766 = vunpack.c.l.b16 %v578
  %v767 = vpack.c.b16 %v736, %v735
  %v768 = vpack.c.b16 %v738, %v737
  %v769 = vpack.c.b16 %v740, %v739
  %v770 = vpack.c.b16 %v742, %v741
  %v771 = vpack.c.b16 %v744, %v743
  %v772 = vpack.c.b16 %v746, %v745
  %v773 = vpack.c.b16 %v748, %v747
  %v774 = vpack.c.b16 %v750, %v749
  %v775 = vpack.c.b16 %v752, %v751
  %v776 = vpack.c.b16 %v754, %v753
  %v777 = vpack.c.b16 %v756, %v755
  %v778 = vpack.c.b16 %v758, %v757
  %v779 = vpack.c.b16 %v760, %v759
  %v780 = vpack.c.b16 %v762, %v761
  %v781 = vpack.c.b16 %v764, %v763
  %v782 = vpack.c.b16 %v766, %v765
  %799 = vmatpush.bf16.msra.mxu0 %v774
  %800 = vmatpush.bf16.msra.mxu0 %v773
  %801 = vmatpush.bf16.msra.mxu0 %v772
  %802 = vmatpush.bf16.msra.mxu0 %v771
  %803 = vmatpush.bf16.msra.mxu0 %v770
  %804 = vmatpush.bf16.msra.mxu0 %v769
  %805 = vmatpush.bf16.msra.mxu0 %v768
  %806 = vmatpush.bf16.msra.mxu0 %v767
  %807 = vmatmul.bf16.gmra.mxu0 %v655
  %v808 = vpop.f32.mrf.mxu0
  %v809 = vadd.f32 %v581, %v808
  %v810 = vpop.f32.mrf.mxu0
  %v811 = vadd.f32 %v581, %v810
  %812 = vmatmul.bf16.gmra.mxu0 %v657
  %v813 = vpop.f32.mrf.mxu0
  %v814 = vadd.f32 %v581, %v813
  %v815 = vpop.f32.mrf.mxu0
  %v816 = vadd.f32 %v581, %v815
  %817 = vmatmul.bf16.gmra.mxu0 %v659
  %v818 = vpop.f32.mrf.mxu0
  %v819 = vadd.f32 %v581, %v818
  %v820 = vpop.f32.mrf.mxu0
  %v821 = vadd.f32 %v581, %v820
  %822 = vmatmul.bf16.gmra.mxu0 %v661
  %v823 = vpop.f32.mrf.mxu0
  %v824 = vadd.f32 %v581, %v823
  %v825 = vpop.f32.mrf.mxu0
  %v826 = vadd.f32 %v581, %v825
  %827 = vmatmul.bf16.gmra.mxu0 %v663
  %v828 = vpop.f32.mrf.mxu0
  %v829 = vadd.f32 %v581, %v828
  %v830 = vpop.f32.mrf.mxu0
  %v831 = vadd.f32 %v581, %v830
  %832 = vmatmul.bf16.gmra.mxu0 %v665
  %v833 = vpop.f32.mrf.mxu0
  %v834 = vadd.f32 %v581, %v833
  %v835 = vpop.f32.mrf.mxu0
  %v836 = vadd.f32 %v581, %v835
  %837 = vmatmul.bf16.gmra.mxu0 %v667
  %v838 = vpop.f32.mrf.mxu0
  %v839 = vadd.f32 %v581, %v838
  %v840 = vpop.f32.mrf.mxu0
  %v841 = vadd.f32 %v581, %v840
  %842 = vmatmul.bf16.gmra.mxu0 %v669
  %v843 = vpop.f32.mrf.mxu0
  %v844 = vadd.f32 %v581, %v843
  %v845 = vpop.f32.mrf.mxu0
  %v846 = vadd.f32 %v581, %v845
  %847 = vmatmul.bf16.gmra.mxu0 %v671
  %v848 = vpop.f32.mrf.mxu0
  %v849 = vadd.f32 %v581, %v848
  %v850 = vpop.f32.mrf.mxu0
  %v851 = vadd.f32 %v581, %v850
  %852 = vmatmul.bf16.gmra.mxu0 %v673
  %v853 = vpop.f32.mrf.mxu0
  %v854 = vadd.f32 %v581, %v853
  %v855 = vpop.f32.mrf.mxu0
  %v856 = vadd.f32 %v581, %v855
  %857 = vmatmul.bf16.gmra.mxu0 %v675
  %v858 = vpop.f32.mrf.mxu0
  %v859 = vadd.f32 %v581, %v858
  %v860 = vpop.f32.mrf.mxu0
  %v861 = vadd.f32 %v581, %v860
  %862 = vmatmul.bf16.gmra.mxu0 %v677
  %v863 = vpop.f32.mrf.mxu0
  %v864 = vadd.f32 %v581, %v863
  %v865 = vpop.f32.mrf.mxu0
  %v866 = vadd.f32 %v581, %v865
  %867 = vdwg.mxu0
  %868 = vmatpush.bf16.msra.mxu0 %v782
  %869 = vmatpush.bf16.msra.mxu0 %v781
  %870 = vmatpush.bf16.msra.mxu0 %v780
  %871 = vmatpush.bf16.msra.mxu0 %v779
  %872 = vmatpush.bf16.msra.mxu0 %v778
  %873 = vmatpush.bf16.msra.mxu0 %v777
  %874 = vmatpush.bf16.msra.mxu0 %v776
  %875 = vmatpush.bf16.msra.mxu0 %v775
  %876 = vmatmul.bf16.gmra.mxu0 %v656
  %v877 = vpop.f32.mrf.mxu0
  %v878 = vadd.f32 %v809, %v877
  %v879 = vpop.f32.mrf.mxu0
  %v880 = vadd.f32 %v811, %v879
  %881 = vmatmul.bf16.gmra.mxu0 %v658
  %v882 = vpop.f32.mrf.mxu0
  %v883 = vadd.f32 %v814, %v882
  %v884 = vpop.f32.mrf.mxu0
  %v885 = vadd.f32 %v816, %v884
  %886 = vmatmul.bf16.gmra.mxu0 %v660
  %v887 = vpop.f32.mrf.mxu0
  %v888 = vadd.f32 %v819, %v887
  %v889 = vpop.f32.mrf.mxu0
  %v890 = vadd.f32 %v821, %v889
  %891 = vmatmul.bf16.gmra.mxu0 %v662
  %v892 = vpop.f32.mrf.mxu0
  %v893 = vadd.f32 %v824, %v892
  %v894 = vpop.f32.mrf.mxu0
  %v895 = vadd.f32 %v826, %v894
  %896 = vmatmul.bf16.gmra.mxu0 %v664
  %v897 = vpop.f32.mrf.mxu0
  %v898 = vadd.f32 %v829, %v897
  %v899 = vpop.f32.mrf.mxu0
  %v900 = vadd.f32 %v831, %v899
  %901 = vmatmul.bf16.gmra.mxu0 %v666
  %v902 = vpop.f32.mrf.mxu0
  %v903 = vadd.f32 %v834, %v902
  %v904 = vpop.f32.mrf.mxu0
  %v905 = vadd.f32 %v836, %v904
  %906 = vmatmul.bf16.gmra.mxu0 %v668
  %v907 = vpop.f32.mrf.mxu0
  %v908 = vadd.f32 %v839, %v907
  %v909 = vpop.f32.mrf.mxu0
  %v910 = vadd.f32 %v841, %v909
  %911 = vmatmul.bf16.gmra.mxu0 %v670
  %v912 = vpop.f32.mrf.mxu0
  %v913 = vadd.f32 %v844, %v912
  %v914 = vpop.f32.mrf.mxu0
  %v915 = vadd.f32 %v846, %v914
  %916 = vmatmul.bf16.gmra.mxu0 %v672
  %v917 = vpop.f32.mrf.mxu0
  %v918 = vadd.f32 %v849, %v917
  %v919 = vpop.f32.mrf.mxu0
  %v920 = vadd.f32 %v851, %v919
  %921 = vmatmul.bf16.gmra.mxu0 %v674
  %v922 = vpop.f32.mrf.mxu0
  %v923 = vadd.f32 %v854, %v922
  %v924 = vpop.f32.mrf.mxu0
  %v925 = vadd.f32 %v856, %v924
  %926 = vmatmul.bf16.gmra.mxu0 %v676
  %v927 = vpop.f32.mrf.mxu0
  %v928 = vadd.f32 %v859, %v927
  %v929 = vpop.f32.mrf.mxu0
  %v930 = vadd.f32 %v861, %v929
  %931 = vmatmul.bf16.gmra.mxu0 %v678
  %v932 = vpop.f32.mrf.mxu0
  %v933 = vadd.f32 %v864, %v932
  %v934 = vpop.f32.mrf.mxu0
  %v935 = vadd.f32 %v866, %v934
  %936 = vdwg.mxu0
  %v937 = vmax.f32 %v878, 0.0
  %v938 = vmax.f32 %v880, 0.0
  %v939 = vmax.f32 %v883, 0.0
  %v940 = vmax.f32 %v885, 0.0
  %v941 = vmax.f32 %v888, 0.0
  %v942 = vmax.f32 %v890, 0.0
  %v943 = vmax.f32 %v893, 0.0
  %v944 = vmax.f32 %v895, 0.0
  %v945 = vmax.f32 %v898, 0.0
  %v946 = vmax.f32 %v900, 0.0
  %v947 = vmax.f32 %v903, 0.0
  %v948 = vmax.f32 %v905, 0.0
  %v949 = vmax.f32 %v908, 0.0
  %v950 = vmax.f32 %v910, 0.0
  %v951 = vmax.f32 %v913, 0.0
  %v952 = vmax.f32 %v915, 0.0
  %v953 = vmax.f32 %v918, 0.0
  %v954 = vmax.f32 %v920, 0.0
  %v955 = vmax.f32 %v923, 0.0
  %v956 = vmax.f32 %v925, 0.0
  %v957 = vmax.f32 %v928, 0.0
  %v958 = vmax.f32 %v930, 0.0
  %v959 = vmax.f32 %v933, 0.0
  %v960 = vmax.f32 %v935, 0.0
  %961 = vst [vmem:[#allocation2 + $0xd0] sm:$0xff] %v937
  %962 = vst [vmem:[#allocation2 + $0xd8] sm:$0xff] %v938
  %963 = vst [vmem:[#allocation2 + $0xe0] sm:$0xff] %v939
  %964 = vst [vmem:[#allocation2 + $0xe8] sm:$0xff] %v940
  %965 = vst [vmem:[#allocation2 + $0xf0] sm:$0xff] %v941
  %966 = vst [vmem:[#allocation2 + $0xf8] sm:$0xff] %v942
  %967 = vst [vmem:[#allocation2 + $0x100] sm:$0xff] %v943
  %968 = vst [vmem:[#allocation2 + $0x108] sm:$0xff] %v944
  %969 = vst [vmem:[#allocation2 + $0x110] sm:$0xff] %v945
  %970 = vst [vmem:[#allocation2 + $0x118] sm:$0xff] %v946
  %971 = vst [vmem:[#allocation2 + $0x120] sm:$0xff] %v947
  %972 = vst [vmem:[#allocation2 + $0x128] sm:$0xff] %v948
  %973 = vst [vmem:[#allocation2 + $0x130] sm:$0xff] %v949
  %974 = vst [vmem:[#allocation2 + $0x138] sm:$0xff] %v950
  %975 = vst [vmem:[#allocation2 + $0x140] sm:$0xff] %v951
  %976 = vst [vmem:[#allocation2 + $0x148] sm:$0xff] %v952
  %977 = vst [vmem:[#allocation2 + $0x150] sm:$0xff] %v953
  %978 = vst [vmem:[#allocation2 + $0x158] sm:$0xff] %v954
  %979 = vst [vmem:[#allocation2 + $0x160] sm:$0xff] %v955
  %980 = vst [vmem:[#allocation2 + $0x168] sm:$0xff] %v956
  %981 = vst [vmem:[#allocation2 + $0x170] sm:$0xff] %v957
  %982 = vst [vmem:[#allocation2 + $0x178] sm:$0xff] %v958
  %983 = vst [vmem:[#allocation2 + $0x180] sm:$0xff] %v959
  %984 = vst [vmem:[#allocation2 + $0x188] sm:$0xff] %v960
  %v985 = vld [vmem:[#allocation2] sm:$0xff]
  %v986 = vld [vmem:[#allocation2 + $0x8] sm:$0xff]
  %v987 = vld [vmem:[#allocation2 + $0x10] sm:$0xff]
  %v988 = vld [vmem:[#allocation2 + $0x18] sm:$0xff]
  %v989 = vld [vmem:[#allocation2 + $0x20] sm:$0xff]
  %v990 = vld [vmem:[#allocation2 + $0x28] sm:$0xff]
  %v991 = vld [vmem:[#allocation2 + $0x30] sm:$0xff]
  %v992 = vld [vmem:[#allocation2 + $0x38] sm:$0xff]
  %v993 = vld [vmem:[#allocation2 + $0x40] sm:$0xff]
  %v994 = vld [vmem:[#allocation2 + $0x48] sm:$0xff]
  %v995 = vld [vmem:[#allocation2 + $0x50] sm:$0xff]
  %v996 = vld [vmem:[#allocation2 + $0x58] sm:$0xff]
  %v997 = vpack.c.bf16 %v986, %v985
  %v998 = vpack.c.bf16 %v988, %v987
  %v999 = vpack.c.bf16 %v990, %v989
  %v1000 = vpack.c.bf16 %v992, %v991
  %v1001 = vpack.c.bf16 %v994, %v993
  %v1002 = vpack.c.bf16 %v996, %v995
  %v1003 = vld [vmem:[%s3] sm:$0xf]
  %v1004 = vld [vmem:[%s3 + $0x4] sm:$0xf]
  %v1005 = vld [vmem:[%s3 + $0x8] sm:$0xf]
  %v1006 = vld [vmem:[%s3 + $0xc] sm:$0xf]
  %v1007 = vld [vmem:[%s3 + $0x10] sm:$0xf]
  %v1008 = vld [vmem:[%s3 + $0x14] sm:$0xf]
  %v1009 = vld [vmem:[%s3 + $0x18] sm:$0xf]
  %v1010 = vld [vmem:[%s3 + $0x1c] sm:$0xf]
  %v1011 = vld [vmem:[%s3 + $0x20] sm:$0xf]
  %v1012 = vld [vmem:[%s3 + $0x24] sm:$0xf]
  %v1013 = vld [vmem:[%s3 + $0x28] sm:$0xf]
  %v1014 = vld [vmem:[%s3 + $0x2c] sm:$0xf]
  %v1015 = vld [vmem:[%s3 + $0x30] sm:$0xf]
  %v1016 = vld [vmem:[%s3 + $0x34] sm:$0xf]
  %v1017 = vld [vmem:[%s3 + $0x38] sm:$0xf]
  %v1018 = vld [vmem:[%s3 + $0x3c] sm:$0xf]
  %v1019 = vld [vmem:[#allocation2 + $0x64] sm:$0xff]
  %v1020 = vld [vmem:[#allocation2 + $0x6c] sm:$0xff]
  %v1021 = vld [vmem:[#allocation2 + $0x74] sm:$0xff]
  %v1022 = vld [vmem:[#allocation2 + $0x7c] sm:$0xff]
  %v1023 = vld [vmem:[#allocation2 + $0x84] sm:$0xff]
  %v1024 = vld [vmem:[#allocation2 + $0x8c] sm:$0xff]
  %v1025 = vld [vmem:[#allocation2 + $0x94] sm:$0xff]
  %v1026 = vld [vmem:[#allocation2 + $0x9c] sm:$0xff]
  %v1027 = vld [vmem:[#allocation2 + $0xa4] sm:$0xff]
  %v1028 = vld [vmem:[#allocation2 + $0xac] sm:$0xff]
  %v1029 = vld [vmem:[#allocation2 + $0xb4] sm:$0xff]
  %v1030 = vld [vmem:[#allocation2 + $0xbc] sm:$0xff]
  %v1031 = vpack.c.bf16 %v1020, %v1019
  %v1032 = vpack.c.bf16 %v1022, %v1021
  %v1033 = vpack.c.bf16 %v1024, %v1023
  %v1034 = vpack.c.bf16 %v1026, %v1025
  %v1035 = vpack.c.bf16 %v1028, %v1027
  %v1036 = vpack.c.bf16 %v1030, %v1029
  %s1037 = scalar_lea.vmem %s3, 64
  %v1038 = vld [vmem:[%s1037] sm:$0xf]
  %v1039 = vld [vmem:[%s1037 + $0x4] sm:$0xf]
  %v1040 = vld [vmem:[%s1037 + $0x8] sm:$0xf]
  %v1041 = vld [vmem:[%s1037 + $0xc] sm:$0xf]
  %v1042 = vld [vmem:[%s1037 + $0x10] sm:$0xf]
  %v1043 = vld [vmem:[%s1037 + $0x14] sm:$0xf]
  %v1044 = vld [vmem:[%s1037 + $0x18] sm:$0xf]
  %v1045 = vld [vmem:[%s1037 + $0x1c] sm:$0xf]
  %v1046 = vld [vmem:[%s1037 + $0x20] sm:$0xf]
  %v1047 = vld [vmem:[%s1037 + $0x24] sm:$0xf]
  %v1048 = vld [vmem:[%s1037 + $0x28] sm:$0xf]
  %v1049 = vld [vmem:[%s1037 + $0x2c] sm:$0xf]
  %v1050 = vld [vmem:[%s1037 + $0x30] sm:$0xf]
  %v1051 = vld [vmem:[%s1037 + $0x34] sm:$0xf]
  %v1052 = vld [vmem:[%s1037 + $0x38] sm:$0xf]
  %v1053 = vld [vmem:[%s1037 + $0x3c] sm:$0xf]
  %v1070 = vunpack.c.l.b16 %v1038
  %v1071 = vunpack.c.l.b16 %v1039
  %v1072 = vunpack.c.l.b16 %v1040
  %v1073 = vunpack.c.l.b16 %v1041
  %v1074 = vunpack.c.l.b16 %v1042
  %v1075 = vunpack.c.l.b16 %v1043
  %v1076 = vunpack.c.l.b16 %v1044
  %v1077 = vunpack.c.l.b16 %v1045
  %v1078 = vunpack.c.l.b16 %v1046
  %v1079 = vunpack.c.l.b16 %v1047
  %v1080 = vunpack.c.l.b16 %v1048
  %v1081 = vunpack.c.l.b16 %v1049
  %v1082 = vunpack.c.l.b16 %v1050
  %v1083 = vunpack.c.l.b16 %v1051
  %v1084 = vunpack.c.l.b16 %v1052
  %v1085 = vunpack.c.l.b16 %v1053
  %v1086 = vpack.c.b16 %v1071, %v1070
  %v1087 = vpack.c.b16 %v1073, %v1072
  %v1088 = vpack.c.b16 %v1075, %v1074
  %v1089 = vpack.c.b16 %v1077, %v1076
  %v1090 = vpack.c.b16 %v1079, %v1078
  %v1091 = vpack.c.b16 %v1081, %v1080
  %v1092 = vpack.c.b16 %v1083, %v1082
  %v1093 = vpack.c.b16 %v1085, %v1084
  %1102 = vmatpush.bf16.xpose.msra.mxu0 0
  %1103 = vmatpush.bf16.xpose.msra.mxu0 0
  %1104 = vmatpush.bf16.xpose.msra.mxu0 %v1036
  %1105 = vmatpush.bf16.xpose.msra.mxu0 %v1035
  %1106 = vmatpush.bf16.xpose.msra.mxu0 %v1034
  %1107 = vmatpush.bf16.xpose.msra.mxu0 %v1033
  %1108 = vmatpush.bf16.xpose.msra.mxu0 %v1032
  %1109 = vmatpush.bf16.xpose.msra.mxu0 %v1031
  %1110 = vmatmul.bf16.gmra.mxu0 %v1086
  %v1111 = vpop.f32.mrf.mxu0
  %v1112 = vadd.f32 0.0, %v1111
  %v1113 = vpop.f32.mrf.mxu0
  %v1114 = vadd.f32 0.0, %v1113
  %1115 = vmatmul.bf16.gmra.mxu0 %v1087
  %v1116 = vpop.f32.mrf.mxu0
  %v1117 = vadd.f32 0.0, %v1116
  %v1118 = vpop.f32.mrf.mxu0
  %v1119 = vadd.f32 0.0, %v1118
  %1120 = vmatmul.bf16.gmra.mxu0 %v1088
  %v1121 = vpop.f32.mrf.mxu0
  %v1122 = vpop.f32.mrf.mxu0
  %1123 = vmatmul.bf16.gmra.mxu0 %v1089
  %v1124 = vpop.f32.mrf.mxu0
  %v1125 = vpop.f32.mrf.mxu0
  %1126 = vmatmul.bf16.gmra.mxu0 %v1090
  %v1127 = vpop.f32.mrf.mxu0
  %v1128 = vpop.f32.mrf.mxu0
  %1129 = vmatmul.bf16.gmra.mxu0 %v1091
  %v1130 = vpop.f32.mrf.mxu0
  %v1131 = vpop.f32.mrf.mxu0
  %1132 = vmatmul.bf16.gmra.mxu0 %v1092
  %v1133 = vpop.f32.mrf.mxu0
  %v1134 = vpop.f32.mrf.mxu0
  %1135 = vmatmul.bf16.gmra.mxu0 %v1093
  %v1136 = vpop.f32.mrf.mxu0
  %v1137 = vpop.f32.mrf.mxu0
  %1138 = vdwg.mxu0
  %v1155 = vunpack.c.l.b16 %v1003
  %v1156 = vunpack.c.l.b16 %v1004
  %v1157 = vunpack.c.l.b16 %v1005
  %v1158 = vunpack.c.l.b16 %v1006
  %v1159 = vunpack.c.l.b16 %v1007
  %v1160 = vunpack.c.l.b16 %v1008
  %v1161 = vunpack.c.l.b16 %v1009
  %v1162 = vunpack.c.l.b16 %v1010
  %v1163 = vunpack.c.l.b16 %v1011
  %v1164 = vunpack.c.l.b16 %v1012
  %v1165 = vunpack.c.l.b16 %v1013
  %v1166 = vunpack.c.l.b16 %v1014
  %v1167 = vunpack.c.l.b16 %v1015
  %v1168 = vunpack.c.l.b16 %v1016
  %v1169 = vunpack.c.l.b16 %v1017
  %v1170 = vunpack.c.l.b16 %v1018
  %v1171 = vpack.c.b16 %v1156, %v1155
  %v1172 = vpack.c.b16 %v1158, %v1157
  %v1173 = vpack.c.b16 %v1160, %v1159
  %v1174 = vpack.c.b16 %v1162, %v1161
  %v1175 = vpack.c.b16 %v1164, %v1163
  %v1176 = vpack.c.b16 %v1166, %v1165
  %v1177 = vpack.c.b16 %v1168, %v1167
  %v1178 = vpack.c.b16 %v1170, %v1169
  %1187 = vmatpush.bf16.xpose.msra.mxu0 0
  %1188 = vmatpush.bf16.xpose.msra.mxu0 0
  %1189 = vmatpush.bf16.xpose.msra.mxu0 %v1002
  %1190 = vmatpush.bf16.xpose.msra.mxu0 %v1001
  %1191 = vmatpush.bf16.xpose.msra.mxu0 %v1000
  %1192 = vmatpush.bf16.xpose.msra.mxu0 %v999
  %1193 = vmatpush.bf16.xpose.msra.mxu0 %v998
  %1194 = vmatpush.bf16.xpose.msra.mxu0 %v997
  %1195 = vmatmul.bf16.gmra.mxu0 %v1171
  %v1196 = vpop.f32.mrf.mxu0
  %v1197 = vadd.f32 %v1112, %v1196
  %v1198 = vpop.f32.mrf.mxu0
  %v1199 = vadd.f32 %v1114, %v1198
  %1200 = vmatmul.bf16.gmra.mxu0 %v1172
  %v1201 = vpop.f32.mrf.mxu0
  %v1202 = vadd.f32 %v1117, %v1201
  %v1203 = vpop.f32.mrf.mxu0
  %v1204 = vadd.f32 %v1119, %v1203
  %1205 = vmatmul.bf16.gmra.mxu0 %v1173
  %v1206 = vpop.f32.mrf.mxu0
  %v1207 = vpop.f32.mrf.mxu0
  %1208 = vmatmul.bf16.gmra.mxu0 %v1174
  %v1209 = vpop.f32.mrf.mxu0
  %v1210 = vpop.f32.mrf.mxu0
  %1211 = vmatmul.bf16.gmra.mxu0 %v1175
  %v1212 = vpop.f32.mrf.mxu0
  %v1213 = vpop.f32.mrf.mxu0
  %1214 = vmatmul.bf16.gmra.mxu0 %v1176
  %v1215 = vpop.f32.mrf.mxu0
  %v1216 = vpop.f32.mrf.mxu0
  %1217 = vmatmul.bf16.gmra.mxu0 %v1177
  %v1218 = vpop.f32.mrf.mxu0
  %v1219 = vpop.f32.mrf.mxu0
  %1220 = vmatmul.bf16.gmra.mxu0 %v1178
  %v1221 = vpop.f32.mrf.mxu0
  %v1222 = vpop.f32.mrf.mxu0
  %1223 = vdwg.mxu0
  %v1224 = vld [vmem:[#allocation2 + $0x1] sm:$0xff]
  %v1225 = vld [vmem:[#allocation2 + $0x9] sm:$0xff]
  %v1226 = vld [vmem:[#allocation2 + $0x11] sm:$0xff]
  %v1227 = vld [vmem:[#allocation2 + $0x19] sm:$0xff]
  %v1228 = vld [vmem:[#allocation2 + $0x21] sm:$0xff]
  %v1229 = vld [vmem:[#allocation2 + $0x29] sm:$0xff]
  %v1230 = vld [vmem:[#allocation2 + $0x31] sm:$0xff]
  %v1231 = vld [vmem:[#allocation2 + $0x39] sm:$0xff]
  %v1232 = vld [vmem:[#allocation2 + $0x41] sm:$0xff]
  %v1233 = vld [vmem:[#allocation2 + $0x49] sm:$0xff]
  %v1234 = vld [vmem:[#allocation2 + $0x51] sm:$0xff]
  %v1235 = vld [vmem:[#allocation2 + $0x59] sm:$0xff]
  %v1236 = vpack.c.bf16 %v1225, %v1224
  %v1237 = vpack.c.bf16 %v1227, %v1226
  %v1238 = vpack.c.bf16 %v1229, %v1228
  %v1239 = vpack.c.bf16 %v1231, %v1230
  %v1240 = vpack.c.bf16 %v1233, %v1232
  %v1241 = vpack.c.bf16 %v1235, %v1234
  %s1242 = scalar_lea.vmem %s3, 128
  %v1243 = vld [vmem:[%s1242] sm:$0xf]
  %v1244 = vld [vmem:[%s1242 + $0x4] sm:$0xf]
  %v1245 = vld [vmem:[%s1242 + $0x8] sm:$0xf]
  %v1246 = vld [vmem:[%s1242 + $0xc] sm:$0xf]
  %v1247 = vld [vmem:[%s1242 + $0x10] sm:$0xf]
  %v1248 = vld [vmem:[%s1242 + $0x14] sm:$0xf]
  %v1249 = vld [vmem:[%s1242 + $0x18] sm:$0xf]
  %v1250 = vld [vmem:[%s1242 + $0x1c] sm:$0xf]
  %v1251 = vld [vmem:[%s1242 + $0x20] sm:$0xf]
  %v1252 = vld [vmem:[%s1242 + $0x24] sm:$0xf]
  %v1253 = vld [vmem:[%s1242 + $0x28] sm:$0xf]
  %v1254 = vld [vmem:[%s1242 + $0x2c] sm:$0xf]
  %v1255 = vld [vmem:[%s1242 + $0x30] sm:$0xf]
  %v1256 = vld [vmem:[%s1242 + $0x34] sm:$0xf]
  %v1257 = vld [vmem:[%s1242 + $0x38] sm:$0xf]
  %v1258 = vld [vmem:[%s1242 + $0x3c] sm:$0xf]
  %v1275 = vunpack.c.l.b16 %v1243
  %v1276 = vunpack.c.l.b16 %v1244
  %v1277 = vunpack.c.l.b16 %v1245
  %v1278 = vunpack.c.l.b16 %v1246
  %v1279 = vunpack.c.l.b16 %v1247
  %v1280 = vunpack.c.l.b16 %v1248
  %v1281 = vunpack.c.l.b16 %v1249
  %v1282 = vunpack.c.l.b16 %v1250
  %v1283 = vunpack.c.l.b16 %v1251
  %v1284 = vunpack.c.l.b16 %v1252
  %v1285 = vunpack.c.l.b16 %v1253
  %v1286 = vunpack.c.l.b16 %v1254
  %v1287 = vunpack.c.l.b16 %v1255
  %v1288 = vunpack.c.l.b16 %v1256
  %v1289 = vunpack.c.l.b16 %v1257
  %v1290 = vunpack.c.l.b16 %v1258
  %v1291 = vpack.c.b16 %v1276, %v1275
  %v1292 = vpack.c.b16 %v1278, %v1277
  %v1293 = vpack.c.b16 %v1280, %v1279
  %v1294 = vpack.c.b16 %v1282, %v1281
  %v1295 = vpack.c.b16 %v1284, %v1283
  %v1296 = vpack.c.b16 %v1286, %v1285
  %v1297 = vpack.c.b16 %v1288, %v1287
  %v1298 = vpack.c.b16 %v1290, %v1289
  %1307 = vmatpush.bf16.xpose.msra.mxu0 0
  %1308 = vmatpush.bf16.xpose.msra.mxu0 0
  %1309 = vmatpush.bf16.xpose.msra.mxu0 %v1241
  %1310 = vmatpush.bf16.xpose.msra.mxu0 %v1240
  %1311 = vmatpush.bf16.xpose.msra.mxu0 %v1239
  %1312 = vmatpush.bf16.xpose.msra.mxu0 %v1238
  %1313 = vmatpush.bf16.xpose.msra.mxu0 %v1237
  %1314 = vmatpush.bf16.xpose.msra.mxu0 %v1236
  %1315 = vmatmul.bf16.gmra.mxu0 %v1291
  %v1316 = vpop.f32.mrf.mxu0
  %v1317 = vadd.f32 0.0, %v1316
  %v1318 = vpop.f32.mrf.mxu0
  %v1319 = vadd.f32 0.0, %v1318
  %1320 = vmatmul.bf16.gmra.mxu0 %v1292
  %v1321 = vpop.f32.mrf.mxu0
  %v1322 = vadd.f32 0.0, %v1321
  %v1323 = vpop.f32.mrf.mxu0
  %v1324 = vadd.f32 0.0, %v1323
  %1325 = vmatmul.bf16.gmra.mxu0 %v1293
  %v1326 = vpop.f32.mrf.mxu0
  %v1327 = vpop.f32.mrf.mxu0
  %1328 = vmatmul.bf16.gmra.mxu0 %v1294
  %v1329 = vpop.f32.mrf.mxu0
  %v1330 = vpop.f32.mrf.mxu0
  %1331 = vmatmul.bf16.gmra.mxu0 %v1295
  %v1332 = vpop.f32.mrf.mxu0
  %v1333 = vpop.f32.mrf.mxu0
  %1334 = vmatmul.bf16.gmra.mxu0 %v1296
  %v1335 = vpop.f32.mrf.mxu0
  %v1336 = vpop.f32.mrf.mxu0
  %1337 = vmatmul.bf16.gmra.mxu0 %v1297
  %v1338 = vpop.f32.mrf.mxu0
  %v1339 = vpop.f32.mrf.mxu0
  %1340 = vmatmul.bf16.gmra.mxu0 %v1298
  %v1341 = vpop.f32.mrf.mxu0
  %v1342 = vpop.f32.mrf.mxu0
  %1343 = vdwg.mxu0
  %v1344 = vadd.f32 %v1197, %v1317
  %v1345 = vadd.f32 %v1199, %v1319
  %v1346 = vadd.f32 %v1202, %v1322
  %v1347 = vadd.f32 %v1204, %v1324
  %v1348 = vld [vmem:[#allocation2 + $0x65] sm:$0xff]
  %v1349 = vld [vmem:[#allocation2 + $0x6d] sm:$0xff]
  %v1350 = vld [vmem:[#allocation2 + $0x75] sm:$0xff]
  %v1351 = vld [vmem:[#allocation2 + $0x7d] sm:$0xff]
  %v1352 = vld [vmem:[#allocation2 + $0x85] sm:$0xff]
  %v1353 = vld [vmem:[#allocation2 + $0x8d] sm:$0xff]
  %v1354 = vld [vmem:[#allocation2 + $0x95] sm:$0xff]
  %v1355 = vld [vmem:[#allocation2 + $0x9d] sm:$0xff]
  %v1356 = vld [vmem:[#allocation2 + $0xa5] sm:$0xff]
  %v1357 = vld [vmem:[#allocation2 + $0xad] sm:$0xff]
  %v1358 = vld [vmem:[#allocation2 + $0xb5] sm:$0xff]
  %v1359 = vld [vmem:[#allocation2 + $0xbd] sm:$0xff]
  %v1360 = vpack.c.bf16 %v1349, %v1348
  %v1361 = vpack.c.bf16 %v1351, %v1350
  %v1362 = vpack.c.bf16 %v1353, %v1352
  %v1363 = vpack.c.bf16 %v1355, %v1354
  %v1364 = vpack.c.bf16 %v1357, %v1356
  %v1365 = vpack.c.bf16 %v1359, %v1358
  %s1366 = scalar_lea.vmem %s3, 192
  %v1367 = vld [vmem:[%s1366] sm:$0xf]
  %v1368 = vld [vmem:[%s1366 + $0x4] sm:$0xf]
  %v1369 = vld [vmem:[%s1366 + $0x8] sm:$0xf]
  %v1370 = vld [vmem:[%s1366 + $0xc] sm:$0xf]
  %v1371 = vld [vmem:[%s1366 + $0x10] sm:$0xf]
  %v1372 = vld [vmem:[%s1366 + $0x14] sm:$0xf]
  %v1373 = vld [vmem:[%s1366 + $0x18] sm:$0xf]
  %v1374 = vld [vmem:[%s1366 + $0x1c] sm:$0xf]
  %v1375 = vld [vmem:[%s1366 + $0x20] sm:$0xf]
  %v1376 = vld [vmem:[%s1366 + $0x24] sm:$0xf]
  %v1377 = vld [vmem:[%s1366 + $0x28] sm:$0xf]
  %v1378 = vld [vmem:[%s1366 + $0x2c] sm:$0xf]
  %v1379 = vld [vmem:[%s1366 + $0x30] sm:$0xf]
  %v1380 = vld [vmem:[%s1366 + $0x34] sm:$0xf]
  %v1381 = vld [vmem:[%s1366 + $0x38] sm:$0xf]
  %v1382 = vld [vmem:[%s1366 + $0x3c] sm:$0xf]
  %v1399 = vunpack.c.l.b16 %v1367
  %v1400 = vunpack.c.l.b16 %v1368
  %v1401 = vunpack.c.l.b16 %v1369
  %v1402 = vunpack.c.l.b16 %v1370
  %v1403 = vunpack.c.l.b16 %v1371
  %v1404 = vunpack.c.l.b16 %v1372
  %v1405 = vunpack.c.l.b16 %v1373
  %v1406 = vunpack.c.l.b16 %v1374
  %v1407 = vunpack.c.l.b16 %v1375
  %v1408 = vunpack.c.l.b16 %v1376
  %v1409 = vunpack.c.l.b16 %v1377
  %v1410 = vunpack.c.l.b16 %v1378
  %v1411 = vunpack.c.l.b16 %v1379
  %v1412 = vunpack.c.l.b16 %v1380
  %v1413 = vunpack.c.l.b16 %v1381
  %v1414 = vunpack.c.l.b16 %v1382
  %v1415 = vpack.c.b16 %v1400, %v1399
  %v1416 = vpack.c.b16 %v1402, %v1401
  %v1417 = vpack.c.b16 %v1404, %v1403
  %v1418 = vpack.c.b16 %v1406, %v1405
  %v1419 = vpack.c.b16 %v1408, %v1407
  %v1420 = vpack.c.b16 %v1410, %v1409
  %v1421 = vpack.c.b16 %v1412, %v1411
  %v1422 = vpack.c.b16 %v1414, %v1413
  %1431 = vmatpush.bf16.xpose.msra.mxu0 0
  %1432 = vmatpush.bf16.xpose.msra.mxu0 0
  %1433 = vmatpush.bf16.xpose.msra.mxu0 %v1365
  %1434 = vmatpush.bf16.xpose.msra.mxu0 %v1364
  %1435 = vmatpush.bf16.xpose.msra.mxu0 %v1363
  %1436 = vmatpush.bf16.xpose.msra.mxu0 %v1362
  %1437 = vmatpush.bf16.xpose.msra.mxu0 %v1361
  %1438 = vmatpush.bf16.xpose.msra.mxu0 %v1360
  %1439 = vmatmul.bf16.gmra.mxu0 %v1415
  %v1440 = vpop.f32.mrf.mxu0
  %v1441 = vadd.f32 0.0, %v1440
  %v1442 = vpop.f32.mrf.mxu0
  %v1443 = vadd.f32 0.0, %v1442
  %1444 = vmatmul.bf16.gmra.mxu0 %v1416
  %v1445 = vpop.f32.mrf.mxu0
  %v1446 = vadd.f32 0.0, %v1445
  %v1447 = vpop.f32.mrf.mxu0
  %v1448 = vadd.f32 0.0, %v1447
  %1449 = vmatmul.bf16.gmra.mxu0 %v1417
  %v1450 = vpop.f32.mrf.mxu0
  %v1451 = vpop.f32.mrf.mxu0
  %1452 = vmatmul.bf16.gmra.mxu0 %v1418
  %v1453 = vpop.f32.mrf.mxu0
  %v1454 = vpop.f32.mrf.mxu0
  %1455 = vmatmul.bf16.gmra.mxu0 %v1419
  %v1456 = vpop.f32.mrf.mxu0
  %v1457 = vpop.f32.mrf.mxu0
  %1458 = vmatmul.bf16.gmra.mxu0 %v1420
  %v1459 = vpop.f32.mrf.mxu0
  %v1460 = vpop.f32.mrf.mxu0
  %1461 = vmatmul.bf16.gmra.mxu0 %v1421
  %v1462 = vpop.f32.mrf.mxu0
  %v1463 = vpop.f32.mrf.mxu0
  %1464 = vmatmul.bf16.gmra.mxu0 %v1422
  %v1465 = vpop.f32.mrf.mxu0
  %v1466 = vpop.f32.mrf.mxu0
  %1467 = vdwg.mxu0
  %v1468 = vadd.f32 %v1344, %v1441
  %v1469 = vadd.f32 %v1345, %v1443
  %v1470 = vadd.f32 %v1346, %v1446
  %v1471 = vadd.f32 %v1347, %v1448
  %v1472 = vld [vmem:[#allocation2 + $0xc8] sm:$0xff]
  %v1473 = vld [vmem:[#allocation2 + $0xd0] sm:$0xff]
  %v1474 = vld [vmem:[#allocation2 + $0xd8] sm:$0xff]
  %v1475 = vld [vmem:[#allocation2 + $0xe0] sm:$0xff]
  %v1476 = vld [vmem:[#allocation2 + $0xe8] sm:$0xff]
  %v1477 = vld [vmem:[#allocation2 + $0xf0] sm:$0xff]
  %v1478 = vld [vmem:[#allocation2 + $0xf8] sm:$0xff]
  %v1479 = vld [vmem:[#allocation2 + $0x100] sm:$0xff]
  %v1480 = vld [vmem:[#allocation2 + $0x108] sm:$0xff]
  %v1481 = vld [vmem:[#allocation2 + $0x110] sm:$0xff]
  %v1482 = vld [vmem:[#allocation2 + $0x118] sm:$0xff]
  %v1483 = vld [vmem:[#allocation2 + $0x120] sm:$0xff]
  %v1484 = vpack.c.bf16 %v1473, %v1472
  %v1485 = vpack.c.bf16 %v1475, %v1474
  %v1486 = vpack.c.bf16 %v1477, %v1476
  %v1487 = vpack.c.bf16 %v1479, %v1478
  %v1488 = vpack.c.bf16 %v1481, %v1480
  %v1489 = vpack.c.bf16 %v1483, %v1482
  %s1490 = scalar_lea.vmem %s3, 256
  %v1491 = vld [vmem:[%s1490] sm:$0xf]
  %v1492 = vld [vmem:[%s1490 + $0x4] sm:$0xf]
  %v1493 = vld [vmem:[%s1490 + $0x8] sm:$0xf]
  %v1494 = vld [vmem:[%s1490 + $0xc] sm:$0xf]
  %v1495 = vld [vmem:[%s1490 + $0x10] sm:$0xf]
  %v1496 = vld [vmem:[%s1490 + $0x14] sm:$0xf]
  %v1497 = vld [vmem:[%s1490 + $0x18] sm:$0xf]
  %v1498 = vld [vmem:[%s1490 + $0x1c] sm:$0xf]
  %v1499 = vld [vmem:[%s1490 + $0x20] sm:$0xf]
  %v1500 = vld [vmem:[%s1490 + $0x24] sm:$0xf]
  %v1501 = vld [vmem:[%s1490 + $0x28] sm:$0xf]
  %v1502 = vld [vmem:[%s1490 + $0x2c] sm:$0xf]
  %v1503 = vld [vmem:[%s1490 + $0x30] sm:$0xf]
  %v1504 = vld [vmem:[%s1490 + $0x34] sm:$0xf]
  %v1505 = vld [vmem:[%s1490 + $0x38] sm:$0xf]
  %v1506 = vld [vmem:[%s1490 + $0x3c] sm:$0xf]
  %v1523 = vunpack.c.l.b16 %v1491
  %v1524 = vunpack.c.l.b16 %v1492
  %v1525 = vunpack.c.l.b16 %v1493
  %v1526 = vunpack.c.l.b16 %v1494
  %v1527 = vunpack.c.l.b16 %v1495
  %v1528 = vunpack.c.l.b16 %v1496
  %v1529 = vunpack.c.l.b16 %v1497
  %v1530 = vunpack.c.l.b16 %v1498
  %v1531 = vunpack.c.l.b16 %v1499
  %v1532 = vunpack.c.l.b16 %v1500
  %v1533 = vunpack.c.l.b16 %v1501
  %v1534 = vunpack.c.l.b16 %v1502
  %v1535 = vunpack.c.l.b16 %v1503
  %v1536 = vunpack.c.l.b16 %v1504
  %v1537 = vunpack.c.l.b16 %v1505
  %v1538 = vunpack.c.l.b16 %v1506
  %v1539 = vpack.c.b16 %v1524, %v1523
  %v1540 = vpack.c.b16 %v1526, %v1525
  %v1541 = vpack.c.b16 %v1528, %v1527
  %v1542 = vpack.c.b16 %v1530, %v1529
  %v1543 = vpack.c.b16 %v1532, %v1531
  %v1544 = vpack.c.b16 %v1534, %v1533
  %v1545 = vpack.c.b16 %v1536, %v1535
  %v1546 = vpack.c.b16 %v1538, %v1537
  %1555 = vmatpush.bf16.xpose.msra.mxu0 0
  %1556 = vmatpush.bf16.xpose.msra.mxu0 0
  %1557 = vmatpush.bf16.xpose.msra.mxu0 %v1489
  %1558 = vmatpush.bf16.xpose.msra.mxu0 %v1488
  %1559 = vmatpush.bf16.xpose.msra.mxu0 %v1487
  %1560 = vmatpush.bf16.xpose.msra.mxu0 %v1486
  %1561 = vmatpush.bf16.xpose.msra.mxu0 %v1485
  %1562 = vmatpush.bf16.xpose.msra.mxu0 %v1484
  %1563 = vmatmul.bf16.gmra.mxu0 %v1539
  %v1564 = vpop.f32.mrf.mxu0
  %v1565 = vadd.f32 0.0, %v1564
  %v1566 = vpop.f32.mrf.mxu0
  %v1567 = vadd.f32 0.0, %v1566
  %1568 = vmatmul.bf16.gmra.mxu0 %v1540
  %v1569 = vpop.f32.mrf.mxu0
  %v1570 = vadd.f32 0.0, %v1569
  %v1571 = vpop.f32.mrf.mxu0
  %v1572 = vadd.f32 0.0, %v1571
  %1573 = vmatmul.bf16.gmra.mxu0 %v1541
  %v1574 = vpop.f32.mrf.mxu0
  %v1575 = vpop.f32.mrf.mxu0
  %1576 = vmatmul.bf16.gmra.mxu0 %v1542
  %v1577 = vpop.f32.mrf.mxu0
  %v1578 = vpop.f32.mrf.mxu0
  %1579 = vmatmul.bf16.gmra.mxu0 %v1543
  %v1580 = vpop.f32.mrf.mxu0
  %v1581 = vpop.f32.mrf.mxu0
  %1582 = vmatmul.bf16.gmra.mxu0 %v1544
  %v1583 = vpop.f32.mrf.mxu0
  %v1584 = vpop.f32.mrf.mxu0
  %1585 = vmatmul.bf16.gmra.mxu0 %v1545
  %v1586 = vpop.f32.mrf.mxu0
  %v1587 = vpop.f32.mrf.mxu0
  %1588 = vmatmul.bf16.gmra.mxu0 %v1546
  %v1589 = vpop.f32.mrf.mxu0
  %v1590 = vpop.f32.mrf.mxu0
  %1591 = vdwg.mxu0
  %v1592 = vadd.f32 %v1468, %v1565
  %v1593 = vadd.f32 %v1469, %v1567
  %v1594 = vadd.f32 %v1470, %v1570
  %v1595 = vadd.f32 %v1471, %v1572
  %v1596 = vld [vmem:[#allocation2 + $0x12c] sm:$0xff]
  %v1597 = vld [vmem:[#allocation2 + $0x134] sm:$0xff]
  %v1598 = vld [vmem:[#allocation2 + $0x13c] sm:$0xff]
  %v1599 = vld [vmem:[#allocation2 + $0x144] sm:$0xff]
  %v1600 = vld [vmem:[#allocation2 + $0x14c] sm:$0xff]
  %v1601 = vld [vmem:[#allocation2 + $0x154] sm:$0xff]
  %v1602 = vld [vmem:[#allocation2 + $0x15c] sm:$0xff]
  %v1603 = vld [vmem:[#allocation2 + $0x164] sm:$0xff]
  %v1604 = vld [vmem:[#allocation2 + $0x16c] sm:$0xff]
  %v1605 = vld [vmem:[#allocation2 + $0x174] sm:$0xff]
  %v1606 = vld [vmem:[#allocation2 + $0x17c] sm:$0xff]
  %v1607 = vld [vmem:[#allocation2 + $0x184] sm:$0xff]
  %v1608 = vpack.c.bf16 %v1597, %v1596
  %v1609 = vpack.c.bf16 %v1599, %v1598
  %v1610 = vpack.c.bf16 %v1601, %v1600
  %v1611 = vpack.c.bf16 %v1603, %v1602
  %v1612 = vpack.c.bf16 %v1605, %v1604
  %v1613 = vpack.c.bf16 %v1607, %v1606
  %s1614 = scalar_lea.vmem %s3, 320
  %v1615 = vld [vmem:[%s1614] sm:$0xf]
  %v1616 = vld [vmem:[%s1614 + $0x4] sm:$0xf]
  %v1617 = vld [vmem:[%s1614 + $0x8] sm:$0xf]
  %v1618 = vld [vmem:[%s1614 + $0xc] sm:$0xf]
  %v1619 = vld [vmem:[%s1614 + $0x10] sm:$0xf]
  %v1620 = vld [vmem:[%s1614 + $0x14] sm:$0xf]
  %v1621 = vld [vmem:[%s1614 + $0x18] sm:$0xf]
  %v1622 = vld [vmem:[%s1614 + $0x1c] sm:$0xf]
  %v1623 = vld [vmem:[%s1614 + $0x20] sm:$0xf]
  %v1624 = vld [vmem:[%s1614 + $0x24] sm:$0xf]
  %v1625 = vld [vmem:[%s1614 + $0x28] sm:$0xf]
  %v1626 = vld [vmem:[%s1614 + $0x2c] sm:$0xf]
  %v1627 = vld [vmem:[%s1614 + $0x30] sm:$0xf]
  %v1628 = vld [vmem:[%s1614 + $0x34] sm:$0xf]
  %v1629 = vld [vmem:[%s1614 + $0x38] sm:$0xf]
  %v1630 = vld [vmem:[%s1614 + $0x3c] sm:$0xf]
  %v1647 = vunpack.c.l.b16 %v1615
  %v1648 = vunpack.c.l.b16 %v1616
  %v1649 = vunpack.c.l.b16 %v1617
  %v1650 = vunpack.c.l.b16 %v1618
  %v1651 = vunpack.c.l.b16 %v1619
  %v1652 = vunpack.c.l.b16 %v1620
  %v1653 = vunpack.c.l.b16 %v1621
  %v1654 = vunpack.c.l.b16 %v1622
  %v1655 = vunpack.c.l.b16 %v1623
  %v1656 = vunpack.c.l.b16 %v1624
  %v1657 = vunpack.c.l.b16 %v1625
  %v1658 = vunpack.c.l.b16 %v1626
  %v1659 = vunpack.c.l.b16 %v1627
  %v1660 = vunpack.c.l.b16 %v1628
  %v1661 = vunpack.c.l.b16 %v1629
  %v1662 = vunpack.c.l.b16 %v1630
  %v1663 = vpack.c.b16 %v1648, %v1647
  %v1664 = vpack.c.b16 %v1650, %v1649
  %v1665 = vpack.c.b16 %v1652, %v1651
  %v1666 = vpack.c.b16 %v1654, %v1653
  %v1667 = vpack.c.b16 %v1656, %v1655
  %v1668 = vpack.c.b16 %v1658, %v1657
  %v1669 = vpack.c.b16 %v1660, %v1659
  %v1670 = vpack.c.b16 %v1662, %v1661
  %1679 = vmatpush.bf16.xpose.msra.mxu0 0
  %1680 = vmatpush.bf16.xpose.msra.mxu0 0
  %1681 = vmatpush.bf16.xpose.msra.mxu0 %v1613
  %1682 = vmatpush.bf16.xpose.msra.mxu0 %v1612
  %1683 = vmatpush.bf16.xpose.msra.mxu0 %v1611
  %1684 = vmatpush.bf16.xpose.msra.mxu0 %v1610
  %1685 = vmatpush.bf16.xpose.msra.mxu0 %v1609
  %1686 = vmatpush.bf16.xpose.msra.mxu0 %v1608
  %1687 = vmatmul.bf16.gmra.mxu0 %v1663
  %v1688 = vpop.f32.mrf.mxu0
  %v1689 = vadd.f32 0.0, %v1688
  %v1690 = vpop.f32.mrf.mxu0
  %v1691 = vadd.f32 0.0, %v1690
  %1692 = vmatmul.bf16.gmra.mxu0 %v1664
  %v1693 = vpop.f32.mrf.mxu0
  %v1694 = vadd.f32 0.0, %v1693
  %v1695 = vpop.f32.mrf.mxu0
  %v1696 = vadd.f32 0.0, %v1695
  %1697 = vmatmul.bf16.gmra.mxu0 %v1665
  %v1698 = vpop.f32.mrf.mxu0
  %v1699 = vpop.f32.mrf.mxu0
  %1700 = vmatmul.bf16.gmra.mxu0 %v1666
  %v1701 = vpop.f32.mrf.mxu0
  %v1702 = vpop.f32.mrf.mxu0
  %1703 = vmatmul.bf16.gmra.mxu0 %v1667
  %v1704 = vpop.f32.mrf.mxu0
  %v1705 = vpop.f32.mrf.mxu0
  %1706 = vmatmul.bf16.gmra.mxu0 %v1668
  %v1707 = vpop.f32.mrf.mxu0
  %v1708 = vpop.f32.mrf.mxu0
  %1709 = vmatmul.bf16.gmra.mxu0 %v1669
  %v1710 = vpop.f32.mrf.mxu0
  %v1711 = vpop.f32.mrf.mxu0
  %1712 = vmatmul.bf16.gmra.mxu0 %v1670
  %v1713 = vpop.f32.mrf.mxu0
  %v1714 = vpop.f32.mrf.mxu0
  %1715 = vdwg.mxu0
  %v1716 = vadd.f32 %v1592, %v1689
  %v1717 = vadd.f32 %v1593, %v1691
  %v1718 = vadd.f32 %v1594, %v1694
  %v1719 = vadd.f32 %v1595, %v1696
  %v1720 = vld [vmem:[#allocation2 + $0xc9] sm:$0xff]
  %v1721 = vld [vmem:[#allocation2 + $0xd1] sm:$0xff]
  %v1722 = vld [vmem:[#allocation2 + $0xd9] sm:$0xff]
  %v1723 = vld [vmem:[#allocation2 + $0xe1] sm:$0xff]
  %v1724 = vld [vmem:[#allocation2 + $0xe9] sm:$0xff]
  %v1725 = vld [vmem:[#allocation2 + $0xf1] sm:$0xff]
  %v1726 = vld [vmem:[#allocation2 + $0xf9] sm:$0xff]
  %v1727 = vld [vmem:[#allocation2 + $0x101] sm:$0xff]
  %v1728 = vld [vmem:[#allocation2 + $0x109] sm:$0xff]
  %v1729 = vld [vmem:[#allocation2 + $0x111] sm:$0xff]
  %v1730 = vld [vmem:[#allocation2 + $0x119] sm:$0xff]
  %v1731 = vld [vmem:[#allocation2 + $0x121] sm:$0xff]
  %v1732 = vpack.c.bf16 %v1721, %v1720
  %v1733 = vpack.c.bf16 %v1723, %v1722
  %v1734 = vpack.c.bf16 %v1725, %v1724
  %v1735 = vpack.c.bf16 %v1727, %v1726
  %v1736 = vpack.c.bf16 %v1729, %v1728
  %v1737 = vpack.c.bf16 %v1731, %v1730
  %s1738 = scalar_lea.vmem %s3, 384
  %v1739 = vld [vmem:[%s1738] sm:$0xf]
  %v1740 = vld [vmem:[%s1738 + $0x4] sm:$0xf]
  %v1741 = vld [vmem:[%s1738 + $0x8] sm:$0xf]
  %v1742 = vld [vmem:[%s1738 + $0xc] sm:$0xf]
  %v1743 = vld [vmem:[%s1738 + $0x10] sm:$0xf]
  %v1744 = vld [vmem:[%s1738 + $0x14] sm:$0xf]
  %v1745 = vld [vmem:[%s1738 + $0x18] sm:$0xf]
  %v1746 = vld [vmem:[%s1738 + $0x1c] sm:$0xf]
  %v1747 = vld [vmem:[%s1738 + $0x20] sm:$0xf]
  %v1748 = vld [vmem:[%s1738 + $0x24] sm:$0xf]
  %v1749 = vld [vmem:[%s1738 + $0x28] sm:$0xf]
  %v1750 = vld [vmem:[%s1738 + $0x2c] sm:$0xf]
  %v1751 = vld [vmem:[%s1738 + $0x30] sm:$0xf]
  %v1752 = vld [vmem:[%s1738 + $0x34] sm:$0xf]
  %v1753 = vld [vmem:[%s1738 + $0x38] sm:$0xf]
  %v1754 = vld [vmem:[%s1738 + $0x3c] sm:$0xf]
  %v1771 = vunpack.c.l.b16 %v1739
  %v1772 = vunpack.c.l.b16 %v1740
  %v1773 = vunpack.c.l.b16 %v1741
  %v1774 = vunpack.c.l.b16 %v1742
  %v1775 = vunpack.c.l.b16 %v1743
  %v1776 = vunpack.c.l.b16 %v1744
  %v1777 = vunpack.c.l.b16 %v1745
  %v1778 = vunpack.c.l.b16 %v1746
  %v1779 = vunpack.c.l.b16 %v1747
  %v1780 = vunpack.c.l.b16 %v1748
  %v1781 = vunpack.c.l.b16 %v1749
  %v1782 = vunpack.c.l.b16 %v1750
  %v1783 = vunpack.c.l.b16 %v1751
  %v1784 = vunpack.c.l.b16 %v1752
  %v1785 = vunpack.c.l.b16 %v1753
  %v1786 = vunpack.c.l.b16 %v1754
  %v1787 = vpack.c.b16 %v1772, %v1771
  %v1788 = vpack.c.b16 %v1774, %v1773
  %v1789 = vpack.c.b16 %v1776, %v1775
  %v1790 = vpack.c.b16 %v1778, %v1777
  %v1791 = vpack.c.b16 %v1780, %v1779
  %v1792 = vpack.c.b16 %v1782, %v1781
  %v1793 = vpack.c.b16 %v1784, %v1783
  %v1794 = vpack.c.b16 %v1786, %v1785
  %1803 = vmatpush.bf16.xpose.msra.mxu0 0
  %1804 = vmatpush.bf16.xpose.msra.mxu0 0
  %1805 = vmatpush.bf16.xpose.msra.mxu0 %v1737
  %1806 = vmatpush.bf16.xpose.msra.mxu0 %v1736
  %1807 = vmatpush.bf16.xpose.msra.mxu0 %v1735
  %1808 = vmatpush.bf16.xpose.msra.mxu0 %v1734
  %1809 = vmatpush.bf16.xpose.msra.mxu0 %v1733
  %1810 = vmatpush.bf16.xpose.msra.mxu0 %v1732
  %1811 = vmatmul.bf16.gmra.mxu0 %v1787
  %v1812 = vpop.f32.mrf.mxu0
  %v1813 = vadd.f32 0.0, %v1812
  %v1814 = vpop.f32.mrf.mxu0
  %v1815 = vadd.f32 0.0, %v1814
  %1816 = vmatmul.bf16.gmra.mxu0 %v1788
  %v1817 = vpop.f32.mrf.mxu0
  %v1818 = vadd.f32 0.0, %v1817
  %v1819 = vpop.f32.mrf.mxu0
  %v1820 = vadd.f32 0.0, %v1819
  %1821 = vmatmul.bf16.gmra.mxu0 %v1789
  %v1822 = vpop.f32.mrf.mxu0
  %v1823 = vpop.f32.mrf.mxu0
  %1824 = vmatmul.bf16.gmra.mxu0 %v1790
  %v1825 = vpop.f32.mrf.mxu0
  %v1826 = vpop.f32.mrf.mxu0
  %1827 = vmatmul.bf16.gmra.mxu0 %v1791
  %v1828 = vpop.f32.mrf.mxu0
  %v1829 = vpop.f32.mrf.mxu0
  %1830 = vmatmul.bf16.gmra.mxu0 %v1792
  %v1831 = vpop.f32.mrf.mxu0
  %v1832 = vpop.f32.mrf.mxu0
  %1833 = vmatmul.bf16.gmra.mxu0 %v1793
  %v1834 = vpop.f32.mrf.mxu0
  %v1835 = vpop.f32.mrf.mxu0
  %1836 = vmatmul.bf16.gmra.mxu0 %v1794
  %v1837 = vpop.f32.mrf.mxu0
  %v1838 = vpop.f32.mrf.mxu0
  %1839 = vdwg.mxu0
  %v1840 = vadd.f32 %v1716, %v1813
  %v1841 = vadd.f32 %v1717, %v1815
  %v1842 = vadd.f32 %v1718, %v1818
  %v1843 = vadd.f32 %v1719, %v1820
  %v1844 = vld [vmem:[#allocation2 + $0x12d] sm:$0xff]
  %v1845 = vld [vmem:[#allocation2 + $0x135] sm:$0xff]
  %v1846 = vld [vmem:[#allocation2 + $0x13d] sm:$0xff]
  %v1847 = vld [vmem:[#allocation2 + $0x145] sm:$0xff]
  %v1848 = vld [vmem:[#allocation2 + $0x14d] sm:$0xff]
  %v1849 = vld [vmem:[#allocation2 + $0x155] sm:$0xff]
  %v1850 = vld [vmem:[#allocation2 + $0x15d] sm:$0xff]
  %v1851 = vld [vmem:[#allocation2 + $0x165] sm:$0xff]
  %v1852 = vld [vmem:[#allocation2 + $0x16d] sm:$0xff]
  %v1853 = vld [vmem:[#allocation2 + $0x175] sm:$0xff]
  %v1854 = vld [vmem:[#allocation2 + $0x17d] sm:$0xff]
  %v1855 = vld [vmem:[#allocation2 + $0x185] sm:$0xff]
  %v1856 = vpack.c.bf16 %v1845, %v1844
  %v1857 = vpack.c.bf16 %v1847, %v1846
  %v1858 = vpack.c.bf16 %v1849, %v1848
  %v1859 = vpack.c.bf16 %v1851, %v1850
  %v1860 = vpack.c.bf16 %v1853, %v1852
  %v1861 = vpack.c.bf16 %v1855, %v1854
  %s1862 = scalar_lea.vmem %s3, 448
  %v1863 = vld [vmem:[%s1862] sm:$0xf]
  %v1864 = vld [vmem:[%s1862 + $0x4] sm:$0xf]
  %v1865 = vld [vmem:[%s1862 + $0x8] sm:$0xf]
  %v1866 = vld [vmem:[%s1862 + $0xc] sm:$0xf]
  %v1867 = vld [vmem:[%s1862 + $0x10] sm:$0xf]
  %v1868 = vld [vmem:[%s1862 + $0x14] sm:$0xf]
  %v1869 = vld [vmem:[%s1862 + $0x18] sm:$0xf]
  %v1870 = vld [vmem:[%s1862 + $0x1c] sm:$0xf]
  %v1871 = vld [vmem:[%s1862 + $0x20] sm:$0xf]
  %v1872 = vld [vmem:[%s1862 + $0x24] sm:$0xf]
  %v1873 = vld [vmem:[%s1862 + $0x28] sm:$0xf]
  %v1874 = vld [vmem:[%s1862 + $0x2c] sm:$0xf]
  %v1875 = vld [vmem:[%s1862 + $0x30] sm:$0xf]
  %v1876 = vld [vmem:[%s1862 + $0x34] sm:$0xf]
  %v1877 = vld [vmem:[%s1862 + $0x38] sm:$0xf]
  %v1878 = vld [vmem:[%s1862 + $0x3c] sm:$0xf]
  %v1895 = vunpack.c.l.b16 %v1863
  %v1896 = vunpack.c.l.b16 %v1864
  %v1897 = vunpack.c.l.b16 %v1865
  %v1898 = vunpack.c.l.b16 %v1866
  %v1899 = vunpack.c.l.b16 %v1867
  %v1900 = vunpack.c.l.b16 %v1868
  %v1901 = vunpack.c.l.b16 %v1869
  %v1902 = vunpack.c.l.b16 %v1870
  %v1903 = vunpack.c.l.b16 %v1871
  %v1904 = vunpack.c.l.b16 %v1872
  %v1905 = vunpack.c.l.b16 %v1873
  %v1906 = vunpack.c.l.b16 %v1874
  %v1907 = vunpack.c.l.b16 %v1875
  %v1908 = vunpack.c.l.b16 %v1876
  %v1909 = vunpack.c.l.b16 %v1877
  %v1910 = vunpack.c.l.b16 %v1878
  %v1911 = vpack.c.b16 %v1896, %v1895
  %v1912 = vpack.c.b16 %v1898, %v1897
  %v1913 = vpack.c.b16 %v1900, %v1899
  %v1914 = vpack.c.b16 %v1902, %v1901
  %v1915 = vpack.c.b16 %v1904, %v1903
  %v1916 = vpack.c.b16 %v1906, %v1905
  %v1917 = vpack.c.b16 %v1908, %v1907
  %v1918 = vpack.c.b16 %v1910, %v1909
  %1927 = vmatpush.bf16.xpose.msra.mxu0 0
  %1928 = vmatpush.bf16.xpose.msra.mxu0 0
  %1929 = vmatpush.bf16.xpose.msra.mxu0 %v1861
  %1930 = vmatpush.bf16.xpose.msra.mxu0 %v1860
  %1931 = vmatpush.bf16.xpose.msra.mxu0 %v1859
  %1932 = vmatpush.bf16.xpose.msra.mxu0 %v1858
  %1933 = vmatpush.bf16.xpose.msra.mxu0 %v1857
  %1934 = vmatpush.bf16.xpose.msra.mxu0 %v1856
  %1935 = vmatmul.bf16.gmra.mxu0 %v1911
  %v1936 = vpop.f32.mrf.mxu0
  %v1937 = vadd.f32 0.0, %v1936
  %v1938 = vpop.f32.mrf.mxu0
  %v1939 = vadd.f32 0.0, %v1938
  %1940 = vmatmul.bf16.gmra.mxu0 %v1912
  %v1941 = vpop.f32.mrf.mxu0
  %v1942 = vadd.f32 0.0, %v1941
  %v1943 = vpop.f32.mrf.mxu0
  %v1944 = vadd.f32 0.0, %v1943
  %1945 = vmatmul.bf16.gmra.mxu0 %v1913
  %v1946 = vpop.f32.mrf.mxu0
  %v1947 = vpop.f32.mrf.mxu0
  %1948 = vmatmul.bf16.gmra.mxu0 %v1914
  %v1949 = vpop.f32.mrf.mxu0
  %v1950 = vpop.f32.mrf.mxu0
  %1951 = vmatmul.bf16.gmra.mxu0 %v1915
  %v1952 = vpop.f32.mrf.mxu0
  %v1953 = vpop.f32.mrf.mxu0
  %1954 = vmatmul.bf16.gmra.mxu0 %v1916
  %v1955 = vpop.f32.mrf.mxu0
  %v1956 = vpop.f32.mrf.mxu0
  %1957 = vmatmul.bf16.gmra.mxu0 %v1917
  %v1958 = vpop.f32.mrf.mxu0
  %v1959 = vpop.f32.mrf.mxu0
  %1960 = vmatmul.bf16.gmra.mxu0 %v1918
  %v1961 = vpop.f32.mrf.mxu0
  %v1962 = vpop.f32.mrf.mxu0
  %1963 = vdwg.mxu0
  %v1964 = vadd.f32 %v1840, %v1937
  %v1965 = vadd.f32 %v1841, %v1939
  %v1966 = vadd.f32 %v1842, %v1942
  %v1967 = vadd.f32 %v1843, %v1944
  %v1968 = vld [vmem:[#allocation2 + $0xa] sm:$0xff]
  %v1969 = vld [vmem:[#allocation2 + $0x12] sm:$0xff]
  %v1970 = vld [vmem:[#allocation2 + $0x1a] sm:$0xff]
  %v1971 = vld [vmem:[#allocation2 + $0x22] sm:$0xff]
  %v1972 = vld [vmem:[#allocation2 + $0x2a] sm:$0xff]
  %v1973 = vld [vmem:[#allocation2 + $0x32] sm:$0xff]
  %v1974 = vld [vmem:[#allocation2 + $0x3a] sm:$0xff]
  %v1975 = vld [vmem:[#allocation2 + $0x42] sm:$0xff]
  %v1976 = vld [vmem:[#allocation2 + $0x4a] sm:$0xff]
  %v1977 = vld [vmem:[#allocation2 + $0x52] sm:$0xff]
  %v1978 = vld [vmem:[#allocation2 + $0x5a] sm:$0xff]
  %v1979 = vld [vmem:[#allocation2 + $0x62] sm:$0xff]
  %v1980 = vpack.c.bf16 %v1969, %v1968
  %v1981 = vpack.c.bf16 %v1971, %v1970
  %v1982 = vpack.c.bf16 %v1973, %v1972
  %v1983 = vpack.c.bf16 %v1975, %v1974
  %v1984 = vpack.c.bf16 %v1977, %v1976
  %v1985 = vpack.c.bf16 %v1979, %v1978
  %s1986 = scalar_lea.vmem %s3, 512
  %v1987 = vld [vmem:[%s1986] sm:$0xf]
  %v1988 = vld [vmem:[%s1986 + $0x4] sm:$0xf]
  %v1989 = vld [vmem:[%s1986 + $0x8] sm:$0xf]
  %v1990 = vld [vmem:[%s1986 + $0xc] sm:$0xf]
  %v1991 = vld [vmem:[%s1986 + $0x10] sm:$0xf]
  %v1992 = vld [vmem:[%s1986 + $0x14] sm:$0xf]
  %v1993 = vld [vmem:[%s1986 + $0x18] sm:$0xf]
  %v1994 = vld [vmem:[%s1986 + $0x1c] sm:$0xf]
  %v1995 = vld [vmem:[%s1986 + $0x20] sm:$0xf]
  %v1996 = vld [vmem:[%s1986 + $0x24] sm:$0xf]
  %v1997 = vld [vmem:[%s1986 + $0x28] sm:$0xf]
  %v1998 = vld [vmem:[%s1986 + $0x2c] sm:$0xf]
  %v1999 = vld [vmem:[%s1986 + $0x30] sm:$0xf]
  %v2000 = vld [vmem:[%s1986 + $0x34] sm:$0xf]
  %v2001 = vld [vmem:[%s1986 + $0x38] sm:$0xf]
  %v2002 = vld [vmem:[%s1986 + $0x3c] sm:$0xf]
  %v2019 = vunpack.c.l.b16 %v1987
  %v2020 = vunpack.c.l.b16 %v1988
  %v2021 = vunpack.c.l.b16 %v1989
  %v2022 = vunpack.c.l.b16 %v1990
  %v2023 = vunpack.c.l.b16 %v1991
  %v2024 = vunpack.c.l.b16 %v1992
  %v2025 = vunpack.c.l.b16 %v1993
  %v2026 = vunpack.c.l.b16 %v1994
  %v2027 = vunpack.c.l.b16 %v1995
  %v2028 = vunpack.c.l.b16 %v1996
  %v2029 = vunpack.c.l.b16 %v1997
  %v2030 = vunpack.c.l.b16 %v1998
  %v2031 = vunpack.c.l.b16 %v1999
  %v2032 = vunpack.c.l.b16 %v2000
  %v2033 = vunpack.c.l.b16 %v2001
  %v2034 = vunpack.c.l.b16 %v2002
  %v2035 = vpack.c.b16 %v2020, %v2019
  %v2036 = vpack.c.b16 %v2022, %v2021
  %v2037 = vpack.c.b16 %v2024, %v2023
  %v2038 = vpack.c.b16 %v2026, %v2025
  %v2039 = vpack.c.b16 %v2028, %v2027
  %v2040 = vpack.c.b16 %v2030, %v2029
  %v2041 = vpack.c.b16 %v2032, %v2031
  %v2042 = vpack.c.b16 %v2034, %v2033
  %2051 = vmatpush.bf16.xpose.msra.mxu0 0
  %2052 = vmatpush.bf16.xpose.msra.mxu0 0
  %2053 = vmatpush.bf16.xpose.msra.mxu0 %v1985
  %2054 = vmatpush.bf16.xpose.msra.mxu0 %v1984
  %2055 = vmatpush.bf16.xpose.msra.mxu0 %v1983
  %2056 = vmatpush.bf16.xpose.msra.mxu0 %v1982
  %2057 = vmatpush.bf16.xpose.msra.mxu0 %v1981
  %2058 = vmatpush.bf16.xpose.msra.mxu0 %v1980
  %2059 = vmatmul.bf16.gmra.mxu0 %v2035
  %v2060 = vpop.f32.mrf.mxu0
  %v2061 = vadd.f32 0.0, %v2060
  %v2062 = vpop.f32.mrf.mxu0
  %v2063 = vadd.f32 0.0, %v2062
  %2064 = vmatmul.bf16.gmra.mxu0 %v2036
  %v2065 = vpop.f32.mrf.mxu0
  %v2066 = vadd.f32 0.0, %v2065
  %v2067 = vpop.f32.mrf.mxu0
  %v2068 = vadd.f32 0.0, %v2067
  %2069 = vmatmul.bf16.gmra.mxu0 %v2037
  %v2070 = vpop.f32.mrf.mxu0
  %v2071 = vpop.f32.mrf.mxu0
  %2072 = vmatmul.bf16.gmra.mxu0 %v2038
  %v2073 = vpop.f32.mrf.mxu0
  %v2074 = vpop.f32.mrf.mxu0
  %2075 = vmatmul.bf16.gmra.mxu0 %v2039
  %v2076 = vpop.f32.mrf.mxu0
  %v2077 = vpop.f32.mrf.mxu0
  %2078 = vmatmul.bf16.gmra.mxu0 %v2040
  %v2079 = vpop.f32.mrf.mxu0
  %v2080 = vpop.f32.mrf.mxu0
  %2081 = vmatmul.bf16.gmra.mxu0 %v2041
  %v2082 = vpop.f32.mrf.mxu0
  %v2083 = vpop.f32.mrf.mxu0
  %2084 = vmatmul.bf16.gmra.mxu0 %v2042
  %v2085 = vpop.f32.mrf.mxu0
  %v2086 = vpop.f32.mrf.mxu0
  %2087 = vdwg.mxu0
  %v2088 = vadd.f32 %v1964, %v2061
  %v2089 = vadd.f32 %v1965, %v2063
  %v2090 = vadd.f32 %v1966, %v2066
  %v2091 = vadd.f32 %v1967, %v2068
  %v2092 = vld [vmem:[#allocation2 + $0x6e] sm:$0xff]
  %v2093 = vld [vmem:[#allocation2 + $0x76] sm:$0xff]
  %v2094 = vld [vmem:[#allocation2 + $0x7e] sm:$0xff]
  %v2095 = vld [vmem:[#allocation2 + $0x86] sm:$0xff]
  %v2096 = vld [vmem:[#allocation2 + $0x8e] sm:$0xff]
  %v2097 = vld [vmem:[#allocation2 + $0x96] sm:$0xff]
  %v2098 = vld [vmem:[#allocation2 + $0x9e] sm:$0xff]
  %v2099 = vld [vmem:[#allocation2 + $0xa6] sm:$0xff]
  %v2100 = vld [vmem:[#allocation2 + $0xae] sm:$0xff]
  %v2101 = vld [vmem:[#allocation2 + $0xb6] sm:$0xff]
  %v2102 = vld [vmem:[#allocation2 + $0xbe] sm:$0xff]
  %v2103 = vld [vmem:[#allocation2 + $0xc6] sm:$0xff]
  %v2104 = vpack.c.bf16 %v2093, %v2092
  %v2105 = vpack.c.bf16 %v2095, %v2094
  %v2106 = vpack.c.bf16 %v2097, %v2096
  %v2107 = vpack.c.bf16 %v2099, %v2098
  %v2108 = vpack.c.bf16 %v2101, %v2100
  %v2109 = vpack.c.bf16 %v2103, %v2102
  %s2110 = scalar_lea.vmem %s3, 576
  %v2111 = vld [vmem:[%s2110] sm:$0xf]
  %v2112 = vld [vmem:[%s2110 + $0x4] sm:$0xf]
  %v2113 = vld [vmem:[%s2110 + $0x8] sm:$0xf]
  %v2114 = vld [vmem:[%s2110 + $0xc] sm:$0xf]
  %v2115 = vld [vmem:[%s2110 + $0x10] sm:$0xf]
  %v2116 = vld [vmem:[%s2110 + $0x14] sm:$0xf]
  %v2117 = vld [vmem:[%s2110 + $0x18] sm:$0xf]
  %v2118 = vld [vmem:[%s2110 + $0x1c] sm:$0xf]
  %v2119 = vld [vmem:[%s2110 + $0x20] sm:$0xf]
  %v2120 = vld [vmem:[%s2110 + $0x24] sm:$0xf]
  %v2121 = vld [vmem:[%s2110 + $0x28] sm:$0xf]
  %v2122 = vld [vmem:[%s2110 + $0x2c] sm:$0xf]
  %v2123 = vld [vmem:[%s2110 + $0x30] sm:$0xf]
  %v2124 = vld [vmem:[%s2110 + $0x34] sm:$0xf]
  %v2125 = vld [vmem:[%s2110 + $0x38] sm:$0xf]
  %v2126 = vld [vmem:[%s2110 + $0x3c] sm:$0xf]
  %v2143 = vunpack.c.l.b16 %v2111
  %v2144 = vunpack.c.l.b16 %v2112
  %v2145 = vunpack.c.l.b16 %v2113
  %v2146 = vunpack.c.l.b16 %v2114
  %v2147 = vunpack.c.l.b16 %v2115
  %v2148 = vunpack.c.l.b16 %v2116
  %v2149 = vunpack.c.l.b16 %v2117
  %v2150 = vunpack.c.l.b16 %v2118
  %v2151 = vunpack.c.l.b16 %v2119
  %v2152 = vunpack.c.l.b16 %v2120
  %v2153 = vunpack.c.l.b16 %v2121
  %v2154 = vunpack.c.l.b16 %v2122
  %v2155 = vunpack.c.l.b16 %v2123
  %v2156 = vunpack.c.l.b16 %v2124
  %v2157 = vunpack.c.l.b16 %v2125
  %v2158 = vunpack.c.l.b16 %v2126
  %v2159 = vpack.c.b16 %v2144, %v2143
  %v2160 = vpack.c.b16 %v2146, %v2145
  %v2161 = vpack.c.b16 %v2148, %v2147
  %v2162 = vpack.c.b16 %v2150, %v2149
  %v2163 = vpack.c.b16 %v2152, %v2151
  %v2164 = vpack.c.b16 %v2154, %v2153
  %v2165 = vpack.c.b16 %v2156, %v2155
  %v2166 = vpack.c.b16 %v2158, %v2157
  %2175 = vmatpush.bf16.xpose.msra.mxu0 0
  %2176 = vmatpush.bf16.xpose.msra.mxu0 0
  %2177 = vmatpush.bf16.xpose.msra.mxu0 %v2109
  %2178 = vmatpush.bf16.xpose.msra.mxu0 %v2108
  %2179 = vmatpush.bf16.xpose.msra.mxu0 %v2107
  %2180 = vmatpush.bf16.xpose.msra.mxu0 %v2106
  %2181 = vmatpush.bf16.xpose.msra.mxu0 %v2105
  %2182 = vmatpush.bf16.xpose.msra.mxu0 %v2104
  %2183 = vmatmul.bf16.gmra.mxu0 %v2159
  %v2184 = vpop.f32.mrf.mxu0
  %v2185 = vadd.f32 0.0, %v2184
  %v2186 = vpop.f32.mrf.mxu0
  %v2187 = vadd.f32 0.0, %v2186
  %2188 = vmatmul.bf16.gmra.mxu0 %v2160
  %v2189 = vpop.f32.mrf.mxu0
  %v2190 = vadd.f32 0.0, %v2189
  %v2191 = vpop.f32.mrf.mxu0
  %v2192 = vadd.f32 0.0, %v2191
  %2193 = vmatmul.bf16.gmra.mxu0 %v2161
  %v2194 = vpop.f32.mrf.mxu0
  %v2195 = vpop.f32.mrf.mxu0
  %2196 = vmatmul.bf16.gmra.mxu0 %v2162
  %v2197 = vpop.f32.mrf.mxu0
  %v2198 = vpop.f32.mrf.mxu0
  %2199 = vmatmul.bf16.gmra.mxu0 %v2163
  %v2200 = vpop.f32.mrf.mxu0
  %v2201 = vpop.f32.mrf.mxu0
  %2202 = vmatmul.bf16.gmra.mxu0 %v2164
  %v2203 = vpop.f32.mrf.mxu0
  %v2204 = vpop.f32.mrf.mxu0
  %2205 = vmatmul.bf16.gmra.mxu0 %v2165
  %v2206 = vpop.f32.mrf.mxu0
  %v2207 = vpop.f32.mrf.mxu0
  %2208 = vmatmul.bf16.gmra.mxu0 %v2166
  %v2209 = vpop.f32.mrf.mxu0
  %v2210 = vpop.f32.mrf.mxu0
  %2211 = vdwg.mxu0
  %v2212 = vadd.f32 %v2088, %v2185
  %v2213 = vadd.f32 %v2089, %v2187
  %v2214 = vadd.f32 %v2090, %v2190
  %v2215 = vadd.f32 %v2091, %v2192
  %v2216 = vld [vmem:[#allocation2 + $0xb] sm:$0xff]
  %v2217 = vld [vmem:[#allocation2 + $0x13] sm:$0xff]
  %v2218 = vld [vmem:[#allocation2 + $0x1b] sm:$0xff]
  %v2219 = vld [vmem:[#allocation2 + $0x23] sm:$0xff]
  %v2220 = vld [vmem:[#allocation2 + $0x2b] sm:$0xff]
  %v2221 = vld [vmem:[#allocation2 + $0x33] sm:$0xff]
  %v2222 = vld [vmem:[#allocation2 + $0x3b] sm:$0xff]
  %v2223 = vld [vmem:[#allocation2 + $0x43] sm:$0xff]
  %v2224 = vld [vmem:[#allocation2 + $0x4b] sm:$0xff]
  %v2225 = vld [vmem:[#allocation2 + $0x53] sm:$0xff]
  %v2226 = vld [vmem:[#allocation2 + $0x5b] sm:$0xff]
  %v2227 = vld [vmem:[#allocation2 + $0x63] sm:$0xff]
  %v2228 = vpack.c.bf16 %v2217, %v2216
  %v2229 = vpack.c.bf16 %v2219, %v2218
  %v2230 = vpack.c.bf16 %v2221, %v2220
  %v2231 = vpack.c.bf16 %v2223, %v2222
  %v2232 = vpack.c.bf16 %v2225, %v2224
  %v2233 = vpack.c.bf16 %v2227, %v2226
  %s2234 = scalar_lea.vmem %s3, 640
  %v2235 = vld [vmem:[%s2234] sm:$0xf]
  %v2236 = vld [vmem:[%s2234 + $0x4] sm:$0xf]
  %v2237 = vld [vmem:[%s2234 + $0x8] sm:$0xf]
  %v2238 = vld [vmem:[%s2234 + $0xc] sm:$0xf]
  %v2239 = vld [vmem:[%s2234 + $0x10] sm:$0xf]
  %v2240 = vld [vmem:[%s2234 + $0x14] sm:$0xf]
  %v2241 = vld [vmem:[%s2234 + $0x18] sm:$0xf]
  %v2242 = vld [vmem:[%s2234 + $0x1c] sm:$0xf]
  %v2243 = vld [vmem:[%s2234 + $0x20] sm:$0xf]
  %v2244 = vld [vmem:[%s2234 + $0x24] sm:$0xf]
  %v2245 = vld [vmem:[%s2234 + $0x28] sm:$0xf]
  %v2246 = vld [vmem:[%s2234 + $0x2c] sm:$0xf]
  %v2247 = vld [vmem:[%s2234 + $0x30] sm:$0xf]
  %v2248 = vld [vmem:[%s2234 + $0x34] sm:$0xf]
  %v2249 = vld [vmem:[%s2234 + $0x38] sm:$0xf]
  %v2250 = vld [vmem:[%s2234 + $0x3c] sm:$0xf]
  %v2267 = vunpack.c.l.b16 %v2235
  %v2268 = vunpack.c.l.b16 %v2236
  %v2269 = vunpack.c.l.b16 %v2237
  %v2270 = vunpack.c.l.b16 %v2238
  %v2271 = vunpack.c.l.b16 %v2239
  %v2272 = vunpack.c.l.b16 %v2240
  %v2273 = vunpack.c.l.b16 %v2241
  %v2274 = vunpack.c.l.b16 %v2242
  %v2275 = vunpack.c.l.b16 %v2243
  %v2276 = vunpack.c.l.b16 %v2244
  %v2277 = vunpack.c.l.b16 %v2245
  %v2278 = vunpack.c.l.b16 %v2246
  %v2279 = vunpack.c.l.b16 %v2247
  %v2280 = vunpack.c.l.b16 %v2248
  %v2281 = vunpack.c.l.b16 %v2249
  %v2282 = vunpack.c.l.b16 %v2250
  %v2283 = vpack.c.b16 %v2268, %v2267
  %v2284 = vpack.c.b16 %v2270, %v2269
  %v2285 = vpack.c.b16 %v2272, %v2271
  %v2286 = vpack.c.b16 %v2274, %v2273
  %v2287 = vpack.c.b16 %v2276, %v2275
  %v2288 = vpack.c.b16 %v2278, %v2277
  %v2289 = vpack.c.b16 %v2280, %v2279
  %v2290 = vpack.c.b16 %v2282, %v2281
  %2299 = vmatpush.bf16.xpose.msra.mxu0 0
  %2300 = vmatpush.bf16.xpose.msra.mxu0 0
  %2301 = vmatpush.bf16.xpose.msra.mxu0 %v2233
  %2302 = vmatpush.bf16.xpose.msra.mxu0 %v2232
  %2303 = vmatpush.bf16.xpose.msra.mxu0 %v2231
  %2304 = vmatpush.bf16.xpose.msra.mxu0 %v2230
  %2305 = vmatpush.bf16.xpose.msra.mxu0 %v2229
  %2306 = vmatpush.bf16.xpose.msra.mxu0 %v2228
  %2307 = vmatmul.bf16.gmra.mxu0 %v2283
  %v2308 = vpop.f32.mrf.mxu0
  %v2309 = vadd.f32 0.0, %v2308
  %v2310 = vpop.f32.mrf.mxu0
  %v2311 = vadd.f32 0.0, %v2310
  %2312 = vmatmul.bf16.gmra.mxu0 %v2284
  %v2313 = vpop.f32.mrf.mxu0
  %v2314 = vadd.f32 0.0, %v2313
  %v2315 = vpop.f32.mrf.mxu0
  %v2316 = vadd.f32 0.0, %v2315
  %2317 = vmatmul.bf16.gmra.mxu0 %v2285
  %v2318 = vpop.f32.mrf.mxu0
  %v2319 = vpop.f32.mrf.mxu0
  %2320 = vmatmul.bf16.gmra.mxu0 %v2286
  %v2321 = vpop.f32.mrf.mxu0
  %v2322 = vpop.f32.mrf.mxu0
  %2323 = vmatmul.bf16.gmra.mxu0 %v2287
  %v2324 = vpop.f32.mrf.mxu0
  %v2325 = vpop.f32.mrf.mxu0
  %2326 = vmatmul.bf16.gmra.mxu0 %v2288
  %v2327 = vpop.f32.mrf.mxu0
  %v2328 = vpop.f32.mrf.mxu0
  %2329 = vmatmul.bf16.gmra.mxu0 %v2289
  %v2330 = vpop.f32.mrf.mxu0
  %v2331 = vpop.f32.mrf.mxu0
  %2332 = vmatmul.bf16.gmra.mxu0 %v2290
  %v2333 = vpop.f32.mrf.mxu0
  %v2334 = vpop.f32.mrf.mxu0
  %2335 = vdwg.mxu0
  %v2336 = vadd.f32 %v2212, %v2309
  %v2337 = vadd.f32 %v2213, %v2311
  %v2338 = vadd.f32 %v2214, %v2314
  %v2339 = vadd.f32 %v2215, %v2316
  %v2340 = vld [vmem:[#allocation2 + $0x6f] sm:$0xff]
  %v2341 = vld [vmem:[#allocation2 + $0x77] sm:$0xff]
  %v2342 = vld [vmem:[#allocation2 + $0x7f] sm:$0xff]
  %v2343 = vld [vmem:[#allocation2 + $0x87] sm:$0xff]
  %v2344 = vld [vmem:[#allocation2 + $0x8f] sm:$0xff]
  %v2345 = vld [vmem:[#allocation2 + $0x97] sm:$0xff]
  %v2346 = vld [vmem:[#allocation2 + $0x9f] sm:$0xff]
  %v2347 = vld [vmem:[#allocation2 + $0xa7] sm:$0xff]
  %v2348 = vld [vmem:[#allocation2 + $0xaf] sm:$0xff]
  %v2349 = vld [vmem:[#allocation2 + $0xb7] sm:$0xff]
  %v2350 = vld [vmem:[#allocation2 + $0xbf] sm:$0xff]
  %v2351 = vld [vmem:[#allocation2 + $0xc7] sm:$0xff]
  %v2352 = vpack.c.bf16 %v2341, %v2340
  %v2353 = vpack.c.bf16 %v2343, %v2342
  %v2354 = vpack.c.bf16 %v2345, %v2344
  %v2355 = vpack.c.bf16 %v2347, %v2346
  %v2356 = vpack.c.bf16 %v2349, %v2348
  %v2357 = vpack.c.bf16 %v2351, %v2350
  %s2358 = scalar_lea.vmem %s3, 704
  %v2359 = vld [vmem:[%s2358] sm:$0xf]
  %v2360 = vld [vmem:[%s2358 + $0x4] sm:$0xf]
  %v2361 = vld [vmem:[%s2358 + $0x8] sm:$0xf]
  %v2362 = vld [vmem:[%s2358 + $0xc] sm:$0xf]
  %v2363 = vld [vmem:[%s2358 + $0x10] sm:$0xf]
  %v2364 = vld [vmem:[%s2358 + $0x14] sm:$0xf]
  %v2365 = vld [vmem:[%s2358 + $0x18] sm:$0xf]
  %v2366 = vld [vmem:[%s2358 + $0x1c] sm:$0xf]
  %v2367 = vld [vmem:[%s2358 + $0x20] sm:$0xf]
  %v2368 = vld [vmem:[%s2358 + $0x24] sm:$0xf]
  %v2369 = vld [vmem:[%s2358 + $0x28] sm:$0xf]
  %v2370 = vld [vmem:[%s2358 + $0x2c] sm:$0xf]
  %v2371 = vld [vmem:[%s2358 + $0x30] sm:$0xf]
  %v2372 = vld [vmem:[%s2358 + $0x34] sm:$0xf]
  %v2373 = vld [vmem:[%s2358 + $0x38] sm:$0xf]
  %v2374 = vld [vmem:[%s2358 + $0x3c] sm:$0xf]
  %v2391 = vunpack.c.l.b16 %v2359
  %v2392 = vunpack.c.l.b16 %v2360
  %v2393 = vunpack.c.l.b16 %v2361
  %v2394 = vunpack.c.l.b16 %v2362
  %v2395 = vunpack.c.l.b16 %v2363
  %v2396 = vunpack.c.l.b16 %v2364
  %v2397 = vunpack.c.l.b16 %v2365
  %v2398 = vunpack.c.l.b16 %v2366
  %v2399 = vunpack.c.l.b16 %v2367
  %v2400 = vunpack.c.l.b16 %v2368
  %v2401 = vunpack.c.l.b16 %v2369
  %v2402 = vunpack.c.l.b16 %v2370
  %v2403 = vunpack.c.l.b16 %v2371
  %v2404 = vunpack.c.l.b16 %v2372
  %v2405 = vunpack.c.l.b16 %v2373
  %v2406 = vunpack.c.l.b16 %v2374
  %v2407 = vpack.c.b16 %v2392, %v2391
  %v2408 = vpack.c.b16 %v2394, %v2393
  %v2409 = vpack.c.b16 %v2396, %v2395
  %v2410 = vpack.c.b16 %v2398, %v2397
  %v2411 = vpack.c.b16 %v2400, %v2399
  %v2412 = vpack.c.b16 %v2402, %v2401
  %v2413 = vpack.c.b16 %v2404, %v2403
  %v2414 = vpack.c.b16 %v2406, %v2405
  %2423 = vmatpush.bf16.xpose.msra.mxu0 0
  %2424 = vmatpush.bf16.xpose.msra.mxu0 0
  %2425 = vmatpush.bf16.xpose.msra.mxu0 %v2357
  %2426 = vmatpush.bf16.xpose.msra.mxu0 %v2356
  %2427 = vmatpush.bf16.xpose.msra.mxu0 %v2355
  %2428 = vmatpush.bf16.xpose.msra.mxu0 %v2354
  %2429 = vmatpush.bf16.xpose.msra.mxu0 %v2353
  %2430 = vmatpush.bf16.xpose.msra.mxu0 %v2352
  %2431 = vmatmul.bf16.gmra.mxu0 %v2407
  %v2432 = vpop.f32.mrf.mxu0
  %v2433 = vadd.f32 0.0, %v2432
  %v2434 = vpop.f32.mrf.mxu0
  %v2435 = vadd.f32 0.0, %v2434
  %2436 = vmatmul.bf16.gmra.mxu0 %v2408
  %v2437 = vpop.f32.mrf.mxu0
  %v2438 = vadd.f32 0.0, %v2437
  %v2439 = vpop.f32.mrf.mxu0
  %v2440 = vadd.f32 0.0, %v2439
  %2441 = vmatmul.bf16.gmra.mxu0 %v2409
  %v2442 = vpop.f32.mrf.mxu0
  %v2443 = vpop.f32.mrf.mxu0
  %2444 = vmatmul.bf16.gmra.mxu0 %v2410
  %v2445 = vpop.f32.mrf.mxu0
  %v2446 = vpop.f32.mrf.mxu0
  %2447 = vmatmul.bf16.gmra.mxu0 %v2411
  %v2448 = vpop.f32.mrf.mxu0
  %v2449 = vpop.f32.mrf.mxu0
  %2450 = vmatmul.bf16.gmra.mxu0 %v2412
  %v2451 = vpop.f32.mrf.mxu0
  %v2452 = vpop.f32.mrf.mxu0
  %2453 = vmatmul.bf16.gmra.mxu0 %v2413
  %v2454 = vpop.f32.mrf.mxu0
  %v2455 = vpop.f32.mrf.mxu0
  %2456 = vmatmul.bf16.gmra.mxu0 %v2414
  %v2457 = vpop.f32.mrf.mxu0
  %v2458 = vpop.f32.mrf.mxu0
  %2459 = vdwg.mxu0
  %v2460 = vadd.f32 %v2336, %v2433
  %v2461 = vadd.f32 %v2337, %v2435
  %v2462 = vadd.f32 %v2338, %v2438
  %v2463 = vadd.f32 %v2339, %v2440
  %v2464 = vld [vmem:[#allocation2 + $0xd2] sm:$0xff]
  %v2465 = vld [vmem:[#allocation2 + $0xda] sm:$0xff]
  %v2466 = vld [vmem:[#allocation2 + $0xe2] sm:$0xff]
  %v2467 = vld [vmem:[#allocation2 + $0xea] sm:$0xff]
  %v2468 = vld [vmem:[#allocation2 + $0xf2] sm:$0xff]
  %v2469 = vld [vmem:[#allocation2 + $0xfa] sm:$0xff]
  %v2470 = vld [vmem:[#allocation2 + $0x102] sm:$0xff]
  %v2471 = vld [vmem:[#allocation2 + $0x10a] sm:$0xff]
  %v2472 = vld [vmem:[#allocation2 + $0x112] sm:$0xff]
  %v2473 = vld [vmem:[#allocation2 + $0x11a] sm:$0xff]
  %v2474 = vld [vmem:[#allocation2 + $0x122] sm:$0xff]
  %v2475 = vld [vmem:[#allocation2 + $0x12a] sm:$0xff]
  %v2476 = vpack.c.bf16 %v2465, %v2464
  %v2477 = vpack.c.bf16 %v2467, %v2466
  %v2478 = vpack.c.bf16 %v2469, %v2468
  %v2479 = vpack.c.bf16 %v2471, %v2470
  %v2480 = vpack.c.bf16 %v2473, %v2472
  %v2481 = vpack.c.bf16 %v2475, %v2474
  %s2482 = scalar_lea.vmem %s3, 768
  %v2483 = vld [vmem:[%s2482] sm:$0xf]
  %v2484 = vld [vmem:[%s2482 + $0x4] sm:$0xf]
  %v2485 = vld [vmem:[%s2482 + $0x8] sm:$0xf]
  %v2486 = vld [vmem:[%s2482 + $0xc] sm:$0xf]
  %v2487 = vld [vmem:[%s2482 + $0x10] sm:$0xf]
  %v2488 = vld [vmem:[%s2482 + $0x14] sm:$0xf]
  %v2489 = vld [vmem:[%s2482 + $0x18] sm:$0xf]
  %v2490 = vld [vmem:[%s2482 + $0x1c] sm:$0xf]
  %v2491 = vld [vmem:[%s2482 + $0x20] sm:$0xf]
  %v2492 = vld [vmem:[%s2482 + $0x24] sm:$0xf]
  %v2493 = vld [vmem:[%s2482 + $0x28] sm:$0xf]
  %v2494 = vld [vmem:[%s2482 + $0x2c] sm:$0xf]
  %v2495 = vld [vmem:[%s2482 + $0x30] sm:$0xf]
  %v2496 = vld [vmem:[%s2482 + $0x34] sm:$0xf]
  %v2497 = vld [vmem:[%s2482 + $0x38] sm:$0xf]
  %v2498 = vld [vmem:[%s2482 + $0x3c] sm:$0xf]
  %v2515 = vunpack.c.l.b16 %v2483
  %v2516 = vunpack.c.l.b16 %v2484
  %v2517 = vunpack.c.l.b16 %v2485
  %v2518 = vunpack.c.l.b16 %v2486
  %v2519 = vunpack.c.l.b16 %v2487
  %v2520 = vunpack.c.l.b16 %v2488
  %v2521 = vunpack.c.l.b16 %v2489
  %v2522 = vunpack.c.l.b16 %v2490
  %v2523 = vunpack.c.l.b16 %v2491
  %v2524 = vunpack.c.l.b16 %v2492
  %v2525 = vunpack.c.l.b16 %v2493
  %v2526 = vunpack.c.l.b16 %v2494
  %v2527 = vunpack.c.l.b16 %v2495
  %v2528 = vunpack.c.l.b16 %v2496
  %v2529 = vunpack.c.l.b16 %v2497
  %v2530 = vunpack.c.l.b16 %v2498
  %v2531 = vpack.c.b16 %v2516, %v2515
  %v2532 = vpack.c.b16 %v2518, %v2517
  %v2533 = vpack.c.b16 %v2520, %v2519
  %v2534 = vpack.c.b16 %v2522, %v2521
  %v2535 = vpack.c.b16 %v2524, %v2523
  %v2536 = vpack.c.b16 %v2526, %v2525
  %v2537 = vpack.c.b16 %v2528, %v2527
  %v2538 = vpack.c.b16 %v2530, %v2529
  %2547 = vmatpush.bf16.xpose.msra.mxu0 0
  %2548 = vmatpush.bf16.xpose.msra.mxu0 0
  %2549 = vmatpush.bf16.xpose.msra.mxu0 %v2481
  %2550 = vmatpush.bf16.xpose.msra.mxu0 %v2480
  %2551 = vmatpush.bf16.xpose.msra.mxu0 %v2479
  %2552 = vmatpush.bf16.xpose.msra.mxu0 %v2478
  %2553 = vmatpush.bf16.xpose.msra.mxu0 %v2477
  %2554 = vmatpush.bf16.xpose.msra.mxu0 %v2476
  %2555 = vmatmul.bf16.gmra.mxu0 %v2531
  %v2556 = vpop.f32.mrf.mxu0
  %v2557 = vadd.f32 0.0, %v2556
  %v2558 = vpop.f32.mrf.mxu0
  %v2559 = vadd.f32 0.0, %v2558
  %2560 = vmatmul.bf16.gmra.mxu0 %v2532
  %v2561 = vpop.f32.mrf.mxu0
  %v2562 = vadd.f32 0.0, %v2561
  %v2563 = vpop.f32.mrf.mxu0
  %v2564 = vadd.f32 0.0, %v2563
  %2565 = vmatmul.bf16.gmra.mxu0 %v2533
  %v2566 = vpop.f32.mrf.mxu0
  %v2567 = vpop.f32.mrf.mxu0
  %2568 = vmatmul.bf16.gmra.mxu0 %v2534
  %v2569 = vpop.f32.mrf.mxu0
  %v2570 = vpop.f32.mrf.mxu0
  %2571 = vmatmul.bf16.gmra.mxu0 %v2535
  %v2572 = vpop.f32.mrf.mxu0
  %v2573 = vpop.f32.mrf.mxu0
  %2574 = vmatmul.bf16.gmra.mxu0 %v2536
  %v2575 = vpop.f32.mrf.mxu0
  %v2576 = vpop.f32.mrf.mxu0
  %2577 = vmatmul.bf16.gmra.mxu0 %v2537
  %v2578 = vpop.f32.mrf.mxu0
  %v2579 = vpop.f32.mrf.mxu0
  %2580 = vmatmul.bf16.gmra.mxu0 %v2538
  %v2581 = vpop.f32.mrf.mxu0
  %v2582 = vpop.f32.mrf.mxu0
  %2583 = vdwg.mxu0
  %v2584 = vadd.f32 %v2460, %v2557
  %v2585 = vadd.f32 %v2461, %v2559
  %v2586 = vadd.f32 %v2462, %v2562
  %v2587 = vadd.f32 %v2463, %v2564
  %v2588 = vld [vmem:[#allocation2 + $0x136] sm:$0xff]
  %v2589 = vld [vmem:[#allocation2 + $0x13e] sm:$0xff]
  %v2590 = vld [vmem:[#allocation2 + $0x146] sm:$0xff]
  %v2591 = vld [vmem:[#allocation2 + $0x14e] sm:$0xff]
  %v2592 = vld [vmem:[#allocation2 + $0x156] sm:$0xff]
  %v2593 = vld [vmem:[#allocation2 + $0x15e] sm:$0xff]
  %v2594 = vld [vmem:[#allocation2 + $0x166] sm:$0xff]
  %v2595 = vld [vmem:[#allocation2 + $0x16e] sm:$0xff]
  %v2596 = vld [vmem:[#allocation2 + $0x176] sm:$0xff]
  %v2597 = vld [vmem:[#allocation2 + $0x17e] sm:$0xff]
  %v2598 = vld [vmem:[#allocation2 + $0x186] sm:$0xff]
  %v2599 = vld [vmem:[#allocation2 + $0x18e] sm:$0xff]
  %v2600 = vpack.c.bf16 %v2589, %v2588
  %v2601 = vpack.c.bf16 %v2591, %v2590
  %v2602 = vpack.c.bf16 %v2593, %v2592
  %v2603 = vpack.c.bf16 %v2595, %v2594
  %v2604 = vpack.c.bf16 %v2597, %v2596
  %v2605 = vpack.c.bf16 %v2599, %v2598
  %s2606 = scalar_lea.vmem %s3, 832
  %v2607 = vld [vmem:[%s2606] sm:$0xf]
  %v2608 = vld [vmem:[%s2606 + $0x4] sm:$0xf]
  %v2609 = vld [vmem:[%s2606 + $0x8] sm:$0xf]
  %v2610 = vld [vmem:[%s2606 + $0xc] sm:$0xf]
  %v2611 = vld [vmem:[%s2606 + $0x10] sm:$0xf]
  %v2612 = vld [vmem:[%s2606 + $0x14] sm:$0xf]
  %v2613 = vld [vmem:[%s2606 + $0x18] sm:$0xf]
  %v2614 = vld [vmem:[%s2606 + $0x1c] sm:$0xf]
  %v2615 = vld [vmem:[%s2606 + $0x20] sm:$0xf]
  %v2616 = vld [vmem:[%s2606 + $0x24] sm:$0xf]
  %v2617 = vld [vmem:[%s2606 + $0x28] sm:$0xf]
  %v2618 = vld [vmem:[%s2606 + $0x2c] sm:$0xf]
  %v2619 = vld [vmem:[%s2606 + $0x30] sm:$0xf]
  %v2620 = vld [vmem:[%s2606 + $0x34] sm:$0xf]
  %v2621 = vld [vmem:[%s2606 + $0x38] sm:$0xf]
  %v2622 = vld [vmem:[%s2606 + $0x3c] sm:$0xf]
  %v2639 = vunpack.c.l.b16 %v2607
  %v2640 = vunpack.c.l.b16 %v2608
  %v2641 = vunpack.c.l.b16 %v2609
  %v2642 = vunpack.c.l.b16 %v2610
  %v2643 = vunpack.c.l.b16 %v2611
  %v2644 = vunpack.c.l.b16 %v2612
  %v2645 = vunpack.c.l.b16 %v2613
  %v2646 = vunpack.c.l.b16 %v2614
  %v2647 = vunpack.c.l.b16 %v2615
  %v2648 = vunpack.c.l.b16 %v2616
  %v2649 = vunpack.c.l.b16 %v2617
  %v2650 = vunpack.c.l.b16 %v2618
  %v2651 = vunpack.c.l.b16 %v2619
  %v2652 = vunpack.c.l.b16 %v2620
  %v2653 = vunpack.c.l.b16 %v2621
  %v2654 = vunpack.c.l.b16 %v2622
  %v2655 = vpack.c.b16 %v2640, %v2639
  %v2656 = vpack.c.b16 %v2642, %v2641
  %v2657 = vpack.c.b16 %v2644, %v2643
  %v2658 = vpack.c.b16 %v2646, %v2645
  %v2659 = vpack.c.b16 %v2648, %v2647
  %v2660 = vpack.c.b16 %v2650, %v2649
  %v2661 = vpack.c.b16 %v2652, %v2651
  %v2662 = vpack.c.b16 %v2654, %v2653
  %2671 = vmatpush.bf16.xpose.msra.mxu0 0
  %2672 = vmatpush.bf16.xpose.msra.mxu0 0
  %2673 = vmatpush.bf16.xpose.msra.mxu0 %v2605
  %2674 = vmatpush.bf16.xpose.msra.mxu0 %v2604
  %2675 = vmatpush.bf16.xpose.msra.mxu0 %v2603
  %2676 = vmatpush.bf16.xpose.msra.mxu0 %v2602
  %2677 = vmatpush.bf16.xpose.msra.mxu0 %v2601
  %2678 = vmatpush.bf16.xpose.msra.mxu0 %v2600
  %2679 = vmatmul.bf16.gmra.mxu0 %v2655
  %v2680 = vpop.f32.mrf.mxu0
  %v2681 = vadd.f32 0.0, %v2680
  %v2682 = vpop.f32.mrf.mxu0
  %v2683 = vadd.f32 0.0, %v2682
  %2684 = vmatmul.bf16.gmra.mxu0 %v2656
  %v2685 = vpop.f32.mrf.mxu0
  %v2686 = vadd.f32 0.0, %v2685
  %v2687 = vpop.f32.mrf.mxu0
  %v2688 = vadd.f32 0.0, %v2687
  %2689 = vmatmul.bf16.gmra.mxu0 %v2657
  %v2690 = vpop.f32.mrf.mxu0
  %v2691 = vpop.f32.mrf.mxu0
  %2692 = vmatmul.bf16.gmra.mxu0 %v2658
  %v2693 = vpop.f32.mrf.mxu0
  %v2694 = vpop.f32.mrf.mxu0
  %2695 = vmatmul.bf16.gmra.mxu0 %v2659
  %v2696 = vpop.f32.mrf.mxu0
  %v2697 = vpop.f32.mrf.mxu0
  %2698 = vmatmul.bf16.gmra.mxu0 %v2660
  %v2699 = vpop.f32.mrf.mxu0
  %v2700 = vpop.f32.mrf.mxu0
  %2701 = vmatmul.bf16.gmra.mxu0 %v2661
  %v2702 = vpop.f32.mrf.mxu0
  %v2703 = vpop.f32.mrf.mxu0
  %2704 = vmatmul.bf16.gmra.mxu0 %v2662
  %v2705 = vpop.f32.mrf.mxu0
  %v2706 = vpop.f32.mrf.mxu0
  %2707 = vdwg.mxu0
  %v2708 = vadd.f32 %v2584, %v2681
  %v2709 = vadd.f32 %v2585, %v2683
  %v2710 = vadd.f32 %v2586, %v2686
  %v2711 = vadd.f32 %v2587, %v2688
  %v2712 = vld [vmem:[#allocation2 + $0xd3] sm:$0xff]
  %v2713 = vld [vmem:[#allocation2 + $0xdb] sm:$0xff]
  %v2714 = vld [vmem:[#allocation2 + $0xe3] sm:$0xff]
  %v2715 = vld [vmem:[#allocation2 + $0xeb] sm:$0xff]
  %v2716 = vld [vmem:[#allocation2 + $0xf3] sm:$0xff]
  %v2717 = vld [vmem:[#allocation2 + $0xfb] sm:$0xff]
  %v2718 = vld [vmem:[#allocation2 + $0x103] sm:$0xff]
  %v2719 = vld [vmem:[#allocation2 + $0x10b] sm:$0xff]
  %v2720 = vld [vmem:[#allocation2 + $0x113] sm:$0xff]
  %v2721 = vld [vmem:[#allocation2 + $0x11b] sm:$0xff]
  %v2722 = vld [vmem:[#allocation2 + $0x123] sm:$0xff]
  %v2723 = vld [vmem:[#allocation2 + $0x12b] sm:$0xff]
  %v2724 = vpack.c.bf16 %v2713, %v2712
  %v2725 = vpack.c.bf16 %v2715, %v2714
  %v2726 = vpack.c.bf16 %v2717, %v2716
  %v2727 = vpack.c.bf16 %v2719, %v2718
  %v2728 = vpack.c.bf16 %v2721, %v2720
  %v2729 = vpack.c.bf16 %v2723, %v2722
  %s2730 = scalar_lea.vmem %s3, 896
  %v2731 = vld [vmem:[%s2730] sm:$0xf]
  %v2732 = vld [vmem:[%s2730 + $0x4] sm:$0xf]
  %v2733 = vld [vmem:[%s2730 + $0x8] sm:$0xf]
  %v2734 = vld [vmem:[%s2730 + $0xc] sm:$0xf]
  %v2735 = vld [vmem:[%s2730 + $0x10] sm:$0xf]
  %v2736 = vld [vmem:[%s2730 + $0x14] sm:$0xf]
  %v2737 = vld [vmem:[%s2730 + $0x18] sm:$0xf]
  %v2738 = vld [vmem:[%s2730 + $0x1c] sm:$0xf]
  %v2739 = vld [vmem:[%s2730 + $0x20] sm:$0xf]
  %v2740 = vld [vmem:[%s2730 + $0x24] sm:$0xf]
  %v2741 = vld [vmem:[%s2730 + $0x28] sm:$0xf]
  %v2742 = vld [vmem:[%s2730 + $0x2c] sm:$0xf]
  %v2743 = vld [vmem:[%s2730 + $0x30] sm:$0xf]
  %v2744 = vld [vmem:[%s2730 + $0x34] sm:$0xf]
  %v2745 = vld [vmem:[%s2730 + $0x38] sm:$0xf]
  %v2746 = vld [vmem:[%s2730 + $0x3c] sm:$0xf]
  %v2763 = vunpack.c.l.b16 %v2731
  %v2764 = vunpack.c.l.b16 %v2732
  %v2765 = vunpack.c.l.b16 %v2733
  %v2766 = vunpack.c.l.b16 %v2734
  %v2767 = vunpack.c.l.b16 %v2735
  %v2768 = vunpack.c.l.b16 %v2736
  %v2769 = vunpack.c.l.b16 %v2737
  %v2770 = vunpack.c.l.b16 %v2738
  %v2771 = vunpack.c.l.b16 %v2739
  %v2772 = vunpack.c.l.b16 %v2740
  %v2773 = vunpack.c.l.b16 %v2741
  %v2774 = vunpack.c.l.b16 %v2742
  %v2775 = vunpack.c.l.b16 %v2743
  %v2776 = vunpack.c.l.b16 %v2744
  %v2777 = vunpack.c.l.b16 %v2745
  %v2778 = vunpack.c.l.b16 %v2746
  %v2779 = vpack.c.b16 %v2764, %v2763
  %v2780 = vpack.c.b16 %v2766, %v2765
  %v2781 = vpack.c.b16 %v2768, %v2767
  %v2782 = vpack.c.b16 %v2770, %v2769
  %v2783 = vpack.c.b16 %v2772, %v2771
  %v2784 = vpack.c.b16 %v2774, %v2773
  %v2785 = vpack.c.b16 %v2776, %v2775
  %v2786 = vpack.c.b16 %v2778, %v2777
  %2795 = vmatpush.bf16.xpose.msra.mxu0 0
  %2796 = vmatpush.bf16.xpose.msra.mxu0 0
  %2797 = vmatpush.bf16.xpose.msra.mxu0 %v2729
  %2798 = vmatpush.bf16.xpose.msra.mxu0 %v2728
  %2799 = vmatpush.bf16.xpose.msra.mxu0 %v2727
  %2800 = vmatpush.bf16.xpose.msra.mxu0 %v2726
  %2801 = vmatpush.bf16.xpose.msra.mxu0 %v2725
  %2802 = vmatpush.bf16.xpose.msra.mxu0 %v2724
  %2803 = vmatmul.bf16.gmra.mxu0 %v2779
  %v2804 = vpop.f32.mrf.mxu0
  %v2805 = vadd.f32 0.0, %v2804
  %v2806 = vpop.f32.mrf.mxu0
  %v2807 = vadd.f32 0.0, %v2806
  %2808 = vmatmul.bf16.gmra.mxu0 %v2780
  %v2809 = vpop.f32.mrf.mxu0
  %v2810 = vadd.f32 0.0, %v2809
  %v2811 = vpop.f32.mrf.mxu0
  %v2812 = vadd.f32 0.0, %v2811
  %2813 = vmatmul.bf16.gmra.mxu0 %v2781
  %v2814 = vpop.f32.mrf.mxu0
  %v2815 = vpop.f32.mrf.mxu0
  %2816 = vmatmul.bf16.gmra.mxu0 %v2782
  %v2817 = vpop.f32.mrf.mxu0
  %v2818 = vpop.f32.mrf.mxu0
  %2819 = vmatmul.bf16.gmra.mxu0 %v2783
  %v2820 = vpop.f32.mrf.mxu0
  %v2821 = vpop.f32.mrf.mxu0
  %2822 = vmatmul.bf16.gmra.mxu0 %v2784
  %v2823 = vpop.f32.mrf.mxu0
  %v2824 = vpop.f32.mrf.mxu0
  %2825 = vmatmul.bf16.gmra.mxu0 %v2785
  %v2826 = vpop.f32.mrf.mxu0
  %v2827 = vpop.f32.mrf.mxu0
  %2828 = vmatmul.bf16.gmra.mxu0 %v2786
  %v2829 = vpop.f32.mrf.mxu0
  %v2830 = vpop.f32.mrf.mxu0
  %2831 = vdwg.mxu0
  %v2832 = vadd.f32 %v2708, %v2805
  %v2833 = vadd.f32 %v2709, %v2807
  %v2834 = vadd.f32 %v2710, %v2810
  %v2835 = vadd.f32 %v2711, %v2812
  %v2836 = vld [vmem:[#allocation2 + $0x137] sm:$0xff]
  %v2837 = vld [vmem:[#allocation2 + $0x13f] sm:$0xff]
  %v2838 = vld [vmem:[#allocation2 + $0x147] sm:$0xff]
  %v2839 = vld [vmem:[#allocation2 + $0x14f] sm:$0xff]
  %v2840 = vld [vmem:[#allocation2 + $0x157] sm:$0xff]
  %v2841 = vld [vmem:[#allocation2 + $0x15f] sm:$0xff]
  %v2842 = vld [vmem:[#allocation2 + $0x167] sm:$0xff]
  %v2843 = vld [vmem:[#allocation2 + $0x16f] sm:$0xff]
  %v2844 = vld [vmem:[#allocation2 + $0x177] sm:$0xff]
  %v2845 = vld [vmem:[#allocation2 + $0x17f] sm:$0xff]
  %v2846 = vld [vmem:[#allocation2 + $0x187] sm:$0xff]
  %v2847 = vld [vmem:[#allocation2 + $0x18f] sm:$0xff]
  %v2848 = vpack.c.bf16 %v2837, %v2836
  %v2849 = vpack.c.bf16 %v2839, %v2838
  %v2850 = vpack.c.bf16 %v2841, %v2840
  %v2851 = vpack.c.bf16 %v2843, %v2842
  %v2852 = vpack.c.bf16 %v2845, %v2844
  %v2853 = vpack.c.bf16 %v2847, %v2846
  %s2854 = scalar_lea.vmem %s3, 960
  %v2855 = vld [vmem:[%s2854] sm:$0xf]
  %v2856 = vld [vmem:[%s2854 + $0x4] sm:$0xf]
  %v2857 = vld [vmem:[%s2854 + $0x8] sm:$0xf]
  %v2858 = vld [vmem:[%s2854 + $0xc] sm:$0xf]
  %v2859 = vld [vmem:[%s2854 + $0x10] sm:$0xf]
  %v2860 = vld [vmem:[%s2854 + $0x14] sm:$0xf]
  %v2861 = vld [vmem:[%s2854 + $0x18] sm:$0xf]
  %v2862 = vld [vmem:[%s2854 + $0x1c] sm:$0xf]
  %v2863 = vld [vmem:[%s2854 + $0x20] sm:$0xf]
  %v2864 = vld [vmem:[%s2854 + $0x24] sm:$0xf]
  %v2865 = vld [vmem:[%s2854 + $0x28] sm:$0xf]
  %v2866 = vld [vmem:[%s2854 + $0x2c] sm:$0xf]
  %v2867 = vld [vmem:[%s2854 + $0x30] sm:$0xf]
  %v2868 = vld [vmem:[%s2854 + $0x34] sm:$0xf]
  %v2869 = vld [vmem:[%s2854 + $0x38] sm:$0xf]
  %v2870 = vld [vmem:[%s2854 + $0x3c] sm:$0xf]
  %v2887 = vunpack.c.l.b16 %v2855
  %v2888 = vunpack.c.l.b16 %v2856
  %v2889 = vunpack.c.l.b16 %v2857
  %v2890 = vunpack.c.l.b16 %v2858
  %v2891 = vunpack.c.l.b16 %v2859
  %v2892 = vunpack.c.l.b16 %v2860
  %v2893 = vunpack.c.l.b16 %v2861
  %v2894 = vunpack.c.l.b16 %v2862
  %v2895 = vunpack.c.l.b16 %v2863
  %v2896 = vunpack.c.l.b16 %v2864
  %v2897 = vunpack.c.l.b16 %v2865
  %v2898 = vunpack.c.l.b16 %v2866
  %v2899 = vunpack.c.l.b16 %v2867
  %v2900 = vunpack.c.l.b16 %v2868
  %v2901 = vunpack.c.l.b16 %v2869
  %v2902 = vunpack.c.l.b16 %v2870
  %v2903 = vpack.c.b16 %v2888, %v2887
  %v2904 = vpack.c.b16 %v2890, %v2889
  %v2905 = vpack.c.b16 %v2892, %v2891
  %v2906 = vpack.c.b16 %v2894, %v2893
  %v2907 = vpack.c.b16 %v2896, %v2895
  %v2908 = vpack.c.b16 %v2898, %v2897
  %v2909 = vpack.c.b16 %v2900, %v2899
  %v2910 = vpack.c.b16 %v2902, %v2901
  %2919 = vmatpush.bf16.xpose.msra.mxu0 0
  %2920 = vmatpush.bf16.xpose.msra.mxu0 0
  %2921 = vmatpush.bf16.xpose.msra.mxu0 %v2853
  %2922 = vmatpush.bf16.xpose.msra.mxu0 %v2852
  %2923 = vmatpush.bf16.xpose.msra.mxu0 %v2851
  %2924 = vmatpush.bf16.xpose.msra.mxu0 %v2850
  %2925 = vmatpush.bf16.xpose.msra.mxu0 %v2849
  %2926 = vmatpush.bf16.xpose.msra.mxu0 %v2848
  %2927 = vmatmul.bf16.gmra.mxu0 %v2903
  %v2928 = vpop.f32.mrf.mxu0
  %v2929 = vadd.f32 0.0, %v2928
  %v2930 = vpop.f32.mrf.mxu0
  %v2931 = vadd.f32 0.0, %v2930
  %2932 = vmatmul.bf16.gmra.mxu0 %v2904
  %v2933 = vpop.f32.mrf.mxu0
  %v2934 = vadd.f32 0.0, %v2933
  %v2935 = vpop.f32.mrf.mxu0
  %v2936 = vadd.f32 0.0, %v2935
  %2937 = vmatmul.bf16.gmra.mxu0 %v2905
  %v2938 = vpop.f32.mrf.mxu0
  %v2939 = vpop.f32.mrf.mxu0
  %2940 = vmatmul.bf16.gmra.mxu0 %v2906
  %v2941 = vpop.f32.mrf.mxu0
  %v2942 = vpop.f32.mrf.mxu0
  %2943 = vmatmul.bf16.gmra.mxu0 %v2907
  %v2944 = vpop.f32.mrf.mxu0
  %v2945 = vpop.f32.mrf.mxu0
  %2946 = vmatmul.bf16.gmra.mxu0 %v2908
  %v2947 = vpop.f32.mrf.mxu0
  %v2948 = vpop.f32.mrf.mxu0
  %2949 = vmatmul.bf16.gmra.mxu0 %v2909
  %v2950 = vpop.f32.mrf.mxu0
  %v2951 = vpop.f32.mrf.mxu0
  %2952 = vmatmul.bf16.gmra.mxu0 %v2910
  %v2953 = vpop.f32.mrf.mxu0
  %v2954 = vpop.f32.mrf.mxu0
  %2955 = vdwg.mxu0
  %v2956 = vadd.f32 %v2832, %v2929
  %v2957 = vadd.f32 %v2833, %v2931
  %v2958 = vadd.f32 %v2834, %v2934
  %v2959 = vadd.f32 %v2835, %v2936
  %v2960 = vld [vmem:[%s4] sm:$0xff]
  %v2961 = vld [vmem:[%s4 + $0x8] sm:$0xff]
  %v2962 = vld [vmem:[%s4 + $0x10] sm:$0xff]
  %v2963 = vld [vmem:[%s4 + $0x18] sm:$0xff]
  %2965 = vset.pattern.permute.xlu0 0
  %2966 = vperm.xlu0 %2965, %v2960
  %v2967 = vpop.permute.xlu0 %2966
  %2970 = vset.pattern.permute.xlu0 0
  %2971 = vperm.xlu0 %2970, %v2961
  %v2972 = vpop.permute.xlu0 %2971
  %2975 = vset.pattern.permute.xlu0 0
  %2976 = vperm.xlu0 %2975, %v2962
  %v2977 = vpop.permute.xlu0 %2976
  %2980 = vset.pattern.permute.xlu0 0
  %2981 = vperm.xlu0 %2980, %v2963
  %v2982 = vpop.permute.xlu0 %2981
  %v2984 = vadd.f32 %v2956, %v2967
  %v2985 = vadd.f32 %v2957, %v2972
  %v2986 = vadd.f32 %v2958, %v2977
  %v2987 = vadd.f32 %v2959, %v2982
  %v2988 = vmax.f32 %v2984, 0.0
  %v2989 = vmax.f32 %v2985, 0.0
  %v2990 = vmax.f32 %v2986, 0.0
  %v2991 = vmax.f32 %v2987, 0.0
  %v2992 = vpack.c.bf16 %v2988, %v2988
  %v2993 = vpack.c.bf16 %v2989, %v2989
  %v2994 = vpack.c.bf16 %v2990, %v2990
  %v2995 = vpack.c.bf16 %v2991, %v2991
  %v2996 = vld [vmem:[%s5] sm:$0xff]
  %v2997 = vld [vmem:[%s5 + $0x8] sm:$0xff]
  %v2998 = vld [vmem:[%s5 + $0x10] sm:$0xff]
  %v2999 = vld [vmem:[%s5 + $0x18] sm:$0xff]
  %v3000 = vld [vmem:[%s5 + $0x20] sm:$0xff]
  %v3001 = vld [vmem:[%s5 + $0x28] sm:$0xff]
  %v3002 = vld [vmem:[%s5 + $0x30] sm:$0xff]
  %v3003 = vld [vmem:[%s5 + $0x38] sm:$0xff]
  %v3004 = vld [vmem:[%s5 + $0x40] sm:$0xff]
  %v3005 = vld [vmem:[%s5 + $0x48] sm:$0xff]
  %v3006 = vld [vmem:[%s5 + $0x50] sm:$0xff]
  %v3007 = vld [vmem:[%s5 + $0x58] sm:$0xff]
  %s3008 = scalar_lea.vmem %s5, 96
  %v3009 = vld [vmem:[%s3008] sm:$0xff]
  %v3010 = vld [vmem:[%s3008 + $0x8] sm:$0xff]
  %v3011 = vld [vmem:[%s3008 + $0x10] sm:$0xff]
  %v3012 = vld [vmem:[%s3008 + $0x18] sm:$0xff]
  %v3013 = vld [vmem:[%s3008 + $0x20] sm:$0xff]
  %v3014 = vld [vmem:[%s3008 + $0x28] sm:$0xff]
  %v3015 = vld [vmem:[%s3008 + $0x30] sm:$0xff]
  %v3016 = vld [vmem:[%s3008 + $0x38] sm:$0xff]
  %v3017 = vld [vmem:[%s3008 + $0x40] sm:$0xff]
  %v3018 = vld [vmem:[%s3008 + $0x48] sm:$0xff]
  %v3019 = vld [vmem:[%s3008 + $0x50] sm:$0xff]
  %v3020 = vld [vmem:[%s3008 + $0x58] sm:$0xff]
  %v3022 = vunpack.c.l.b16 %v2992
  %v3023 = vpack.c.b16 %v3022, %v3022
  %v3025 = vshrl.u32 %v3023, 16
  %v3039 = vunpack.c.l.b16 %v3009
  %v3040 = vunpack.c.h.b16 %v3009
  %v3041 = vunpack.c.l.b16 %v3010
  %v3042 = vunpack.c.h.b16 %v3010
  %v3043 = vunpack.c.l.b16 %v3011
  %v3044 = vunpack.c.h.b16 %v3011
  %v3045 = vunpack.c.l.b16 %v3012
  %v3046 = vunpack.c.h.b16 %v3012
  %v3047 = vunpack.c.l.b16 %v3013
  %v3048 = vunpack.c.h.b16 %v3013
  %v3049 = vunpack.c.l.b16 %v3014
  %v3050 = vunpack.c.h.b16 %v3014
  %v3051 = vunpack.c.l.b16 %v3015
  %v3052 = vunpack.c.h.b16 %v3015
  %v3053 = vunpack.c.l.b16 %v3016
  %v3054 = vunpack.c.h.b16 %v3016
  %v3055 = vunpack.c.l.b16 %v3017
  %v3056 = vunpack.c.h.b16 %v3017
  %v3057 = vunpack.c.l.b16 %v3018
  %v3058 = vunpack.c.h.b16 %v3018
  %v3059 = vunpack.c.l.b16 %v3019
  %v3060 = vunpack.c.h.b16 %v3019
  %v3061 = vunpack.c.l.b16 %v3020
  %v3062 = vunpack.c.h.b16 %v3020
  %v3063 = vpack.c.b16 %v3041, %v3039
  %v3064 = vpack.c.b16 %v3042, %v3040
  %v3065 = vpack.c.b16 %v3045, %v3043
  %v3066 = vpack.c.b16 %v3046, %v3044
  %v3067 = vpack.c.b16 %v3049, %v3047
  %v3068 = vpack.c.b16 %v3050, %v3048
  %v3069 = vpack.c.b16 %v3053, %v3051
  %v3070 = vpack.c.b16 %v3054, %v3052
  %v3071 = vpack.c.b16 %v3057, %v3055
  %v3072 = vpack.c.b16 %v3058, %v3056
  %v3073 = vpack.c.b16 %v3061, %v3059
  %v3074 = vpack.c.b16 %v3062, %v3060
  %vm3087 = vcmask 785408
  %v3089 = vsel %vm3087, %v3025, 0
  %3091 = vmatpush.bf16.msra.mxu0 0
  %3092 = vmatpush.bf16.msra.mxu0 0
  %3093 = vmatpush.bf16.msra.mxu0 %v3073
  %3094 = vmatpush.bf16.msra.mxu0 %v3071
  %3095 = vmatpush.bf16.msra.mxu0 %v3069
  %3096 = vmatpush.bf16.msra.mxu0 %v3067
  %3097 = vmatpush.bf16.msra.mxu0 %v3065
  %3098 = vmatpush.bf16.msra.mxu0 %v3063
  %3099 = vmatmul.bf16.gmra.mxu0 %v3089
  %v3100 = vpop.f32.mrf.mxu0
  %v3101 = vadd.f32 0.0, %v3100
  %v3102 = vpop.f32.mrf.mxu0
  %3103 = vdwg.mxu0
  %3104 = vmatpush.bf16.msra.mxu0 0
  %3105 = vmatpush.bf16.msra.mxu0 0
  %3106 = vmatpush.bf16.msra.mxu0 %v3074
  %3107 = vmatpush.bf16.msra.mxu0 %v3072
  %3108 = vmatpush.bf16.msra.mxu0 %v3070
  %3109 = vmatpush.bf16.msra.mxu0 %v3068
  %3110 = vmatpush.bf16.msra.mxu0 %v3066
  %3111 = vmatpush.bf16.msra.mxu0 %v3064
  %3112 = vmatmul.bf16.gmra.mxu0 %v3089
  %v3113 = vpop.f32.mrf.mxu0
  %v3114 = vadd.f32 0.0, %v3113
  %v3115 = vpop.f32.mrf.mxu0
  %3116 = vdwg.mxu0
  %v3129 = vunpack.c.l.b16 %v2996
  %v3130 = vunpack.c.h.b16 %v2996
  %v3131 = vunpack.c.l.b16 %v2997
  %v3132 = vunpack.c.h.b16 %v2997
  %v3133 = vunpack.c.l.b16 %v2998
  %v3134 = vunpack.c.h.b16 %v2998
  %v3135 = vunpack.c.l.b16 %v2999
  %v3136 = vunpack.c.h.b16 %v2999
  %v3137 = vunpack.c.l.b16 %v3000
  %v3138 = vunpack.c.h.b16 %v3000
  %v3139 = vunpack.c.l.b16 %v3001
  %v3140 = vunpack.c.h.b16 %v3001
  %v3141 = vunpack.c.l.b16 %v3002
  %v3142 = vunpack.c.h.b16 %v3002
  %v3143 = vunpack.c.l.b16 %v3003
  %v3144 = vunpack.c.h.b16 %v3003
  %v3145 = vunpack.c.l.b16 %v3004
  %v3146 = vunpack.c.h.b16 %v3004
  %v3147 = vunpack.c.l.b16 %v3005
  %v3148 = vunpack.c.h.b16 %v3005
  %v3149 = vunpack.c.l.b16 %v3006
  %v3150 = vunpack.c.h.b16 %v3006
  %v3151 = vunpack.c.l.b16 %v3007
  %v3152 = vunpack.c.h.b16 %v3007
  %v3153 = vpack.c.b16 %v3131, %v3129
  %v3154 = vpack.c.b16 %v3132, %v3130
  %v3155 = vpack.c.b16 %v3135, %v3133
  %v3156 = vpack.c.b16 %v3136, %v3134
  %v3157 = vpack.c.b16 %v3139, %v3137
  %v3158 = vpack.c.b16 %v3140, %v3138
  %v3159 = vpack.c.b16 %v3143, %v3141
  %v3160 = vpack.c.b16 %v3144, %v3142
  %v3161 = vpack.c.b16 %v3147, %v3145
  %v3162 = vpack.c.b16 %v3148, %v3146
  %v3163 = vpack.c.b16 %v3151, %v3149
  %v3164 = vpack.c.b16 %v3152, %v3150
  %v3178 = vsel %vm3087, %v2992, 0
  %3180 = vmatpush.bf16.msra.mxu0 0
  %3181 = vmatpush.bf16.msra.mxu0 0
  %3182 = vmatpush.bf16.msra.mxu0 %v3163
  %3183 = vmatpush.bf16.msra.mxu0 %v3161
  %3184 = vmatpush.bf16.msra.mxu0 %v3159
  %3185 = vmatpush.bf16.msra.mxu0 %v3157
  %3186 = vmatpush.bf16.msra.mxu0 %v3155
  %3187 = vmatpush.bf16.msra.mxu0 %v3153
  %3188 = vmatmul.bf16.gmra.mxu0 %v3178
  %v3189 = vpop.f32.mrf.mxu0
  %v3190 = vadd.f32 %v3101, %v3189
  %v3191 = vpop.f32.mrf.mxu0
  %3192 = vdwg.mxu0
  %3193 = vmatpush.bf16.msra.mxu0 0
  %3194 = vmatpush.bf16.msra.mxu0 0
  %3195 = vmatpush.bf16.msra.mxu0 %v3164
  %3196 = vmatpush.bf16.msra.mxu0 %v3162
  %3197 = vmatpush.bf16.msra.mxu0 %v3160
  %3198 = vmatpush.bf16.msra.mxu0 %v3158
  %3199 = vmatpush.bf16.msra.mxu0 %v3156
  %3200 = vmatpush.bf16.msra.mxu0 %v3154
  %3201 = vmatmul.bf16.gmra.mxu0 %v3178
  %v3202 = vpop.f32.mrf.mxu0
  %v3203 = vadd.f32 %v3114, %v3202
  %v3204 = vpop.f32.mrf.mxu0
  %3205 = vdwg.mxu0
  %s3206 = scalar_lea.vmem %s5, 192
  %v3207 = vld [vmem:[%s3206] sm:$0xff]
  %v3208 = vld [vmem:[%s3206 + $0x8] sm:$0xff]
  %v3209 = vld [vmem:[%s3206 + $0x10] sm:$0xff]
  %v3210 = vld [vmem:[%s3206 + $0x18] sm:$0xff]
  %v3211 = vld [vmem:[%s3206 + $0x20] sm:$0xff]
  %v3212 = vld [vmem:[%s3206 + $0x28] sm:$0xff]
  %v3213 = vld [vmem:[%s3206 + $0x30] sm:$0xff]
  %v3214 = vld [vmem:[%s3206 + $0x38] sm:$0xff]
  %v3215 = vld [vmem:[%s3206 + $0x40] sm:$0xff]
  %v3216 = vld [vmem:[%s3206 + $0x48] sm:$0xff]
  %v3217 = vld [vmem:[%s3206 + $0x50] sm:$0xff]
  %v3218 = vld [vmem:[%s3206 + $0x58] sm:$0xff]
  %v3219 = vrot.slane %v3023, 1
  %v3232 = vunpack.c.l.b16 %v3207
  %v3233 = vunpack.c.h.b16 %v3207
  %v3234 = vunpack.c.l.b16 %v3208
  %v3235 = vunpack.c.h.b16 %v3208
  %v3236 = vunpack.c.l.b16 %v3209
  %v3237 = vunpack.c.h.b16 %v3209
  %v3238 = vunpack.c.l.b16 %v3210
  %v3239 = vunpack.c.h.b16 %v3210
  %v3240 = vunpack.c.l.b16 %v3211
  %v3241 = vunpack.c.h.b16 %v3211
  %v3242 = vunpack.c.l.b16 %v3212
  %v3243 = vunpack.c.h.b16 %v3212
  %v3244 = vunpack.c.l.b16 %v3213
  %v3245 = vunpack.c.h.b16 %v3213
  %v3246 = vunpack.c.l.b16 %v3214
  %v3247 = vunpack.c.h.b16 %v3214
  %v3248 = vunpack.c.l.b16 %v3215
  %v3249 = vunpack.c.h.b16 %v3215
  %v3250 = vunpack.c.l.b16 %v3216
  %v3251 = vunpack.c.h.b16 %v3216
  %v3252 = vunpack.c.l.b16 %v3217
  %v3253 = vunpack.c.h.b16 %v3217
  %v3254 = vunpack.c.l.b16 %v3218
  %v3255 = vunpack.c.h.b16 %v3218
  %v3256 = vpack.c.b16 %v3234, %v3232
  %v3257 = vpack.c.b16 %v3235, %v3233
  %v3258 = vpack.c.b16 %v3238, %v3236
  %v3259 = vpack.c.b16 %v3239, %v3237
  %v3260 = vpack.c.b16 %v3242, %v3240
  %v3261 = vpack.c.b16 %v3243, %v3241
  %v3262 = vpack.c.b16 %v3246, %v3244
  %v3263 = vpack.c.b16 %v3247, %v3245
  %v3264 = vpack.c.b16 %v3250, %v3248
  %v3265 = vpack.c.b16 %v3251, %v3249
  %v3266 = vpack.c.b16 %v3254, %v3252
  %v3267 = vpack.c.b16 %v3255, %v3253
  %v3281 = vsel %vm3087, %v3219, 0
  %3283 = vmatpush.bf16.msra.mxu0 0
  %3284 = vmatpush.bf16.msra.mxu0 0
  %3285 = vmatpush.bf16.msra.mxu0 %v3266
  %3286 = vmatpush.bf16.msra.mxu0 %v3264
  %3287 = vmatpush.bf16.msra.mxu0 %v3262
  %3288 = vmatpush.bf16.msra.mxu0 %v3260
  %3289 = vmatpush.bf16.msra.mxu0 %v3258
  %3290 = vmatpush.bf16.msra.mxu0 %v3256
  %3291 = vmatmul.bf16.gmra.mxu0 %v3281
  %v3292 = vpop.f32.mrf.mxu0
  %v3293 = vadd.f32 0.0, %v3292
  %v3294 = vpop.f32.mrf.mxu0
  %3295 = vdwg.mxu0
  %3296 = vmatpush.bf16.msra.mxu0 0
  %3297 = vmatpush.bf16.msra.mxu0 0
  %3298 = vmatpush.bf16.msra.mxu0 %v3267
  %3299 = vmatpush.bf16.msra.mxu0 %v3265
  %3300 = vmatpush.bf16.msra.mxu0 %v3263
  %3301 = vmatpush.bf16.msra.mxu0 %v3261
  %3302 = vmatpush.bf16.msra.mxu0 %v3259
  %3303 = vmatpush.bf16.msra.mxu0 %v3257
  %3304 = vmatmul.bf16.gmra.mxu0 %v3281
  %v3305 = vpop.f32.mrf.mxu0
  %v3306 = vadd.f32 0.0, %v3305
  %v3307 = vpop.f32.mrf.mxu0
  %3308 = vdwg.mxu0
  %v3309 = vadd.f32 %v3190, %v3293
  %v3310 = vadd.f32 %v3203, %v3306
  %s3311 = scalar_lea.vmem %s5, 288
  %v3312 = vld [vmem:[%s3311] sm:$0xff]
  %v3313 = vld [vmem:[%s3311 + $0x8] sm:$0xff]
  %v3314 = vld [vmem:[%s3311 + $0x10] sm:$0xff]
  %v3315 = vld [vmem:[%s3311 + $0x18] sm:$0xff]
  %v3316 = vld [vmem:[%s3311 + $0x20] sm:$0xff]
  %v3317 = vld [vmem:[%s3311 + $0x28] sm:$0xff]
  %v3318 = vld [vmem:[%s3311 + $0x30] sm:$0xff]
  %v3319 = vld [vmem:[%s3311 + $0x38] sm:$0xff]
  %v3320 = vld [vmem:[%s3311 + $0x40] sm:$0xff]
  %v3321 = vld [vmem:[%s3311 + $0x48] sm:$0xff]
  %v3322 = vld [vmem:[%s3311 + $0x50] sm:$0xff]
  %v3323 = vld [vmem:[%s3311 + $0x58] sm:$0xff]
  %v3324 = vrot.slane %v3025, 1
  %v3337 = vunpack.c.l.b16 %v3312
  %v3338 = vunpack.c.h.b16 %v3312
  %v3339 = vunpack.c.l.b16 %v3313
  %v3340 = vunpack.c.h.b16 %v3313
  %v3341 = vunpack.c.l.b16 %v3314
  %v3342 = vunpack.c.h.b16 %v3314
  %v3343 = vunpack.c.l.b16 %v3315
  %v3344 = vunpack.c.h.b16 %v3315
  %v3345 = vunpack.c.l.b16 %v3316
  %v3346 = vunpack.c.h.b16 %v3316
  %v3347 = vunpack.c.l.b16 %v3317
  %v3348 = vunpack.c.h.b16 %v3317
  %v3349 = vunpack.c.l.b16 %v3318
  %v3350 = vunpack.c.h.b16 %v3318
  %v3351 = vunpack.c.l.b16 %v3319
  %v3352 = vunpack.c.h.b16 %v3319
  %v3353 = vunpack.c.l.b16 %v3320
  %v3354 = vunpack.c.h.b16 %v3320
  %v3355 = vunpack.c.l.b16 %v3321
  %v3356 = vunpack.c.h.b16 %v3321
  %v3357 = vunpack.c.l.b16 %v3322
  %v3358 = vunpack.c.h.b16 %v3322
  %v3359 = vunpack.c.l.b16 %v3323
  %v3360 = vunpack.c.h.b16 %v3323
  %v3361 = vpack.c.b16 %v3339, %v3337
  %v3362 = vpack.c.b16 %v3340, %v3338
  %v3363 = vpack.c.b16 %v3343, %v3341
  %v3364 = vpack.c.b16 %v3344, %v3342
  %v3365 = vpack.c.b16 %v3347, %v3345
  %v3366 = vpack.c.b16 %v3348, %v3346
  %v3367 = vpack.c.b16 %v3351, %v3349
  %v3368 = vpack.c.b16 %v3352, %v3350
  %v3369 = vpack.c.b16 %v3355, %v3353
  %v3370 = vpack.c.b16 %v3356, %v3354
  %v3371 = vpack.c.b16 %v3359, %v3357
  %v3372 = vpack.c.b16 %v3360, %v3358
  %v3386 = vsel %vm3087, %v3324, 0
  %3388 = vmatpush.bf16.msra.mxu0 0
  %3389 = vmatpush.bf16.msra.mxu0 0
  %3390 = vmatpush.bf16.msra.mxu0 %v3371
  %3391 = vmatpush.bf16.msra.mxu0 %v3369
  %3392 = vmatpush.bf16.msra.mxu0 %v3367
  %3393 = vmatpush.bf16.msra.mxu0 %v3365
  %3394 = vmatpush.bf16.msra.mxu0 %v3363
  %3395 = vmatpush.bf16.msra.mxu0 %v3361
  %3396 = vmatmul.bf16.gmra.mxu0 %v3386
  %v3397 = vpop.f32.mrf.mxu0
  %v3398 = vadd.f32 0.0, %v3397
  %v3399 = vpop.f32.mrf.mxu0
  %3400 = vdwg.mxu0
  %3401 = vmatpush.bf16.msra.mxu0 0
  %3402 = vmatpush.bf16.msra.mxu0 0
  %3403 = vmatpush.bf16.msra.mxu0 %v3372
  %3404 = vmatpush.bf16.msra.mxu0 %v3370
  %3405 = vmatpush.bf16.msra.mxu0 %v3368
  %3406 = vmatpush.bf16.msra.mxu0 %v3366
  %3407 = vmatpush.bf16.msra.mxu0 %v3364
  %3408 = vmatpush.bf16.msra.mxu0 %v3362
  %3409 = vmatmul.bf16.gmra.mxu0 %v3386
  %v3410 = vpop.f32.mrf.mxu0
  %v3411 = vadd.f32 0.0, %v3410
  %v3412 = vpop.f32.mrf.mxu0
  %3413 = vdwg.mxu0
  %v3414 = vadd.f32 %v3309, %v3398
  %v3415 = vadd.f32 %v3310, %v3411
  %s3416 = scalar_lea.vmem %s5, 384
  %v3417 = vld [vmem:[%s3416] sm:$0xff]
  %v3418 = vld [vmem:[%s3416 + $0x8] sm:$0xff]
  %v3419 = vld [vmem:[%s3416 + $0x10] sm:$0xff]
  %v3420 = vld [vmem:[%s3416 + $0x18] sm:$0xff]
  %v3421 = vld [vmem:[%s3416 + $0x20] sm:$0xff]
  %v3422 = vld [vmem:[%s3416 + $0x28] sm:$0xff]
  %v3423 = vld [vmem:[%s3416 + $0x30] sm:$0xff]
  %v3424 = vld [vmem:[%s3416 + $0x38] sm:$0xff]
  %v3425 = vld [vmem:[%s3416 + $0x40] sm:$0xff]
  %v3426 = vld [vmem:[%s3416 + $0x48] sm:$0xff]
  %v3427 = vld [vmem:[%s3416 + $0x50] sm:$0xff]
  %v3428 = vld [vmem:[%s3416 + $0x58] sm:$0xff]
  %v3429 = vrot.slane %v3023, 2
  %v3442 = vunpack.c.l.b16 %v3417
  %v3443 = vunpack.c.h.b16 %v3417
  %v3444 = vunpack.c.l.b16 %v3418
  %v3445 = vunpack.c.h.b16 %v3418
  %v3446 = vunpack.c.l.b16 %v3419
  %v3447 = vunpack.c.h.b16 %v3419
  %v3448 = vunpack.c.l.b16 %v3420
  %v3449 = vunpack.c.h.b16 %v3420
  %v3450 = vunpack.c.l.b16 %v3421
  %v3451 = vunpack.c.h.b16 %v3421
  %v3452 = vunpack.c.l.b16 %v3422
  %v3453 = vunpack.c.h.b16 %v3422
  %v3454 = vunpack.c.l.b16 %v3423
  %v3455 = vunpack.c.h.b16 %v3423
  %v3456 = vunpack.c.l.b16 %v3424
  %v3457 = vunpack.c.h.b16 %v3424
  %v3458 = vunpack.c.l.b16 %v3425
  %v3459 = vunpack.c.h.b16 %v3425
  %v3460 = vunpack.c.l.b16 %v3426
  %v3461 = vunpack.c.h.b16 %v3426
  %v3462 = vunpack.c.l.b16 %v3427
  %v3463 = vunpack.c.h.b16 %v3427
  %v3464 = vunpack.c.l.b16 %v3428
  %v3465 = vunpack.c.h.b16 %v3428
  %v3466 = vpack.c.b16 %v3444, %v3442
  %v3467 = vpack.c.b16 %v3445, %v3443
  %v3468 = vpack.c.b16 %v3448, %v3446
  %v3469 = vpack.c.b16 %v3449, %v3447
  %v3470 = vpack.c.b16 %v3452, %v3450
  %v3471 = vpack.c.b16 %v3453, %v3451
  %v3472 = vpack.c.b16 %v3456, %v3454
  %v3473 = vpack.c.b16 %v3457, %v3455
  %v3474 = vpack.c.b16 %v3460, %v3458
  %v3475 = vpack.c.b16 %v3461, %v3459
  %v3476 = vpack.c.b16 %v3464, %v3462
  %v3477 = vpack.c.b16 %v3465, %v3463
  %v3491 = vsel %vm3087, %v3429, 0
  %3493 = vmatpush.bf16.msra.mxu0 0
  %3494 = vmatpush.bf16.msra.mxu0 0
  %3495 = vmatpush.bf16.msra.mxu0 %v3476
  %3496 = vmatpush.bf16.msra.mxu0 %v3474
  %3497 = vmatpush.bf16.msra.mxu0 %v3472
  %3498 = vmatpush.bf16.msra.mxu0 %v3470
  %3499 = vmatpush.bf16.msra.mxu0 %v3468
  %3500 = vmatpush.bf16.msra.mxu0 %v3466
  %3501 = vmatmul.bf16.gmra.mxu0 %v3491
  %v3502 = vpop.f32.mrf.mxu0
  %v3503 = vadd.f32 0.0, %v3502
  %v3504 = vpop.f32.mrf.mxu0
  %3505 = vdwg.mxu0
  %3506 = vmatpush.bf16.msra.mxu0 0
  %3507 = vmatpush.bf16.msra.mxu0 0
  %3508 = vmatpush.bf16.msra.mxu0 %v3477
  %3509 = vmatpush.bf16.msra.mxu0 %v3475
  %3510 = vmatpush.bf16.msra.mxu0 %v3473
  %3511 = vmatpush.bf16.msra.mxu0 %v3471
  %3512 = vmatpush.bf16.msra.mxu0 %v3469
  %3513 = vmatpush.bf16.msra.mxu0 %v3467
  %3514 = vmatmul.bf16.gmra.mxu0 %v3491
  %v3515 = vpop.f32.mrf.mxu0
  %v3516 = vadd.f32 0.0, %v3515
  %v3517 = vpop.f32.mrf.mxu0
  %3518 = vdwg.mxu0
  %v3519 = vadd.f32 %v3414, %v3503
  %v3520 = vadd.f32 %v3415, %v3516
  %s3521 = scalar_lea.vmem %s5, 480
  %v3522 = vld [vmem:[%s3521] sm:$0xff]
  %v3523 = vld [vmem:[%s3521 + $0x8] sm:$0xff]
  %v3524 = vld [vmem:[%s3521 + $0x10] sm:$0xff]
  %v3525 = vld [vmem:[%s3521 + $0x18] sm:$0xff]
  %v3526 = vld [vmem:[%s3521 + $0x20] sm:$0xff]
  %v3527 = vld [vmem:[%s3521 + $0x28] sm:$0xff]
  %v3528 = vld [vmem:[%s3521 + $0x30] sm:$0xff]
  %v3529 = vld [vmem:[%s3521 + $0x38] sm:$0xff]
  %v3530 = vld [vmem:[%s3521 + $0x40] sm:$0xff]
  %v3531 = vld [vmem:[%s3521 + $0x48] sm:$0xff]
  %v3532 = vld [vmem:[%s3521 + $0x50] sm:$0xff]
  %v3533 = vld [vmem:[%s3521 + $0x58] sm:$0xff]
  %v3534 = vrot.slane %v3025, 2
  %v3547 = vunpack.c.l.b16 %v3522
  %v3548 = vunpack.c.h.b16 %v3522
  %v3549 = vunpack.c.l.b16 %v3523
  %v3550 = vunpack.c.h.b16 %v3523
  %v3551 = vunpack.c.l.b16 %v3524
  %v3552 = vunpack.c.h.b16 %v3524
  %v3553 = vunpack.c.l.b16 %v3525
  %v3554 = vunpack.c.h.b16 %v3525
  %v3555 = vunpack.c.l.b16 %v3526
  %v3556 = vunpack.c.h.b16 %v3526
  %v3557 = vunpack.c.l.b16 %v3527
  %v3558 = vunpack.c.h.b16 %v3527
  %v3559 = vunpack.c.l.b16 %v3528
  %v3560 = vunpack.c.h.b16 %v3528
  %v3561 = vunpack.c.l.b16 %v3529
  %v3562 = vunpack.c.h.b16 %v3529
  %v3563 = vunpack.c.l.b16 %v3530
  %v3564 = vunpack.c.h.b16 %v3530
  %v3565 = vunpack.c.l.b16 %v3531
  %v3566 = vunpack.c.h.b16 %v3531
  %v3567 = vunpack.c.l.b16 %v3532
  %v3568 = vunpack.c.h.b16 %v3532
  %v3569 = vunpack.c.l.b16 %v3533
  %v3570 = vunpack.c.h.b16 %v3533
  %v3571 = vpack.c.b16 %v3549, %v3547
  %v3572 = vpack.c.b16 %v3550, %v3548
  %v3573 = vpack.c.b16 %v3553, %v3551
  %v3574 = vpack.c.b16 %v3554, %v3552
  %v3575 = vpack.c.b16 %v3557, %v3555
  %v3576 = vpack.c.b16 %v3558, %v3556
  %v3577 = vpack.c.b16 %v3561, %v3559
  %v3578 = vpack.c.b16 %v3562, %v3560
  %v3579 = vpack.c.b16 %v3565, %v3563
  %v3580 = vpack.c.b16 %v3566, %v3564
  %v3581 = vpack.c.b16 %v3569, %v3567
  %v3582 = vpack.c.b16 %v3570, %v3568
  %v3596 = vsel %vm3087, %v3534, 0
  %3598 = vmatpush.bf16.msra.mxu0 0
  %3599 = vmatpush.bf16.msra.mxu0 0
  %3600 = vmatpush.bf16.msra.mxu0 %v3581
  %3601 = vmatpush.bf16.msra.mxu0 %v3579
  %3602 = vmatpush.bf16.msra.mxu0 %v3577
  %3603 = vmatpush.bf16.msra.mxu0 %v3575
  %3604 = vmatpush.bf16.msra.mxu0 %v3573
  %3605 = vmatpush.bf16.msra.mxu0 %v3571
  %3606 = vmatmul.bf16.gmra.mxu0 %v3596
  %v3607 = vpop.f32.mrf.mxu0
  %v3608 = vadd.f32 0.0, %v3607
  %v3609 = vpop.f32.mrf.mxu0
  %3610 = vdwg.mxu0
  %3611 = vmatpush.bf16.msra.mxu0 0
  %3612 = vmatpush.bf16.msra.mxu0 0
  %3613 = vmatpush.bf16.msra.mxu0 %v3582
  %3614 = vmatpush.bf16.msra.mxu0 %v3580
  %3615 = vmatpush.bf16.msra.mxu0 %v3578
  %3616 = vmatpush.bf16.msra.mxu0 %v3576
  %3617 = vmatpush.bf16.msra.mxu0 %v3574
  %3618 = vmatpush.bf16.msra.mxu0 %v3572
  %3619 = vmatmul.bf16.gmra.mxu0 %v3596
  %v3620 = vpop.f32.mrf.mxu0
  %v3621 = vadd.f32 0.0, %v3620
  %v3622 = vpop.f32.mrf.mxu0
  %3623 = vdwg.mxu0
  %v3624 = vadd.f32 %v3519, %v3608
  %v3625 = vadd.f32 %v3520, %v3621
  %s3626 = scalar_lea.vmem %s5, 576
  %v3627 = vld [vmem:[%s3626] sm:$0xff]
  %v3628 = vld [vmem:[%s3626 + $0x8] sm:$0xff]
  %v3629 = vld [vmem:[%s3626 + $0x10] sm:$0xff]
  %v3630 = vld [vmem:[%s3626 + $0x18] sm:$0xff]
  %v3631 = vld [vmem:[%s3626 + $0x20] sm:$0xff]
  %v3632 = vld [vmem:[%s3626 + $0x28] sm:$0xff]
  %v3633 = vld [vmem:[%s3626 + $0x30] sm:$0xff]
  %v3634 = vld [vmem:[%s3626 + $0x38] sm:$0xff]
  %v3635 = vld [vmem:[%s3626 + $0x40] sm:$0xff]
  %v3636 = vld [vmem:[%s3626 + $0x48] sm:$0xff]
  %v3637 = vld [vmem:[%s3626 + $0x50] sm:$0xff]
  %v3638 = vld [vmem:[%s3626 + $0x58] sm:$0xff]
  %v3639 = vrot.slane %v3023, 3
  %v3652 = vunpack.c.l.b16 %v3627
  %v3653 = vunpack.c.h.b16 %v3627
  %v3654 = vunpack.c.l.b16 %v3628
  %v3655 = vunpack.c.h.b16 %v3628
  %v3656 = vunpack.c.l.b16 %v3629
  %v3657 = vunpack.c.h.b16 %v3629
  %v3658 = vunpack.c.l.b16 %v3630
  %v3659 = vunpack.c.h.b16 %v3630
  %v3660 = vunpack.c.l.b16 %v3631
  %v3661 = vunpack.c.h.b16 %v3631
  %v3662 = vunpack.c.l.b16 %v3632
  %v3663 = vunpack.c.h.b16 %v3632
  %v3664 = vunpack.c.l.b16 %v3633
  %v3665 = vunpack.c.h.b16 %v3633
  %v3666 = vunpack.c.l.b16 %v3634
  %v3667 = vunpack.c.h.b16 %v3634
  %v3668 = vunpack.c.l.b16 %v3635
  %v3669 = vunpack.c.h.b16 %v3635
  %v3670 = vunpack.c.l.b16 %v3636
  %v3671 = vunpack.c.h.b16 %v3636
  %v3672 = vunpack.c.l.b16 %v3637
  %v3673 = vunpack.c.h.b16 %v3637
  %v3674 = vunpack.c.l.b16 %v3638
  %v3675 = vunpack.c.h.b16 %v3638
  %v3676 = vpack.c.b16 %v3654, %v3652
  %v3677 = vpack.c.b16 %v3655, %v3653
  %v3678 = vpack.c.b16 %v3658, %v3656
  %v3679 = vpack.c.b16 %v3659, %v3657
  %v3680 = vpack.c.b16 %v3662, %v3660
  %v3681 = vpack.c.b16 %v3663, %v3661
  %v3682 = vpack.c.b16 %v3666, %v3664
  %v3683 = vpack.c.b16 %v3667, %v3665
  %v3684 = vpack.c.b16 %v3670, %v3668
  %v3685 = vpack.c.b16 %v3671, %v3669
  %v3686 = vpack.c.b16 %v3674, %v3672
  %v3687 = vpack.c.b16 %v3675, %v3673
  %v3701 = vsel %vm3087, %v3639, 0
  %3703 = vmatpush.bf16.msra.mxu0 0
  %3704 = vmatpush.bf16.msra.mxu0 0
  %3705 = vmatpush.bf16.msra.mxu0 %v3686
  %3706 = vmatpush.bf16.msra.mxu0 %v3684
  %3707 = vmatpush.bf16.msra.mxu0 %v3682
  %3708 = vmatpush.bf16.msra.mxu0 %v3680
  %3709 = vmatpush.bf16.msra.mxu0 %v3678
  %3710 = vmatpush.bf16.msra.mxu0 %v3676
  %3711 = vmatmul.bf16.gmra.mxu0 %v3701
  %v3712 = vpop.f32.mrf.mxu0
  %v3713 = vadd.f32 0.0, %v3712
  %v3714 = vpop.f32.mrf.mxu0
  %3715 = vdwg.mxu0
  %3716 = vmatpush.bf16.msra.mxu0 0
  %3717 = vmatpush.bf16.msra.mxu0 0
  %3718 = vmatpush.bf16.msra.mxu0 %v3687
  %3719 = vmatpush.bf16.msra.mxu0 %v3685
  %3720 = vmatpush.bf16.msra.mxu0 %v3683
  %3721 = vmatpush.bf16.msra.mxu0 %v3681
  %3722 = vmatpush.bf16.msra.mxu0 %v3679
  %3723 = vmatpush.bf16.msra.mxu0 %v3677
  %3724 = vmatmul.bf16.gmra.mxu0 %v3701
  %v3725 = vpop.f32.mrf.mxu0
  %v3726 = vadd.f32 0.0, %v3725
  %v3727 = vpop.f32.mrf.mxu0
  %3728 = vdwg.mxu0
  %v3729 = vadd.f32 %v3624, %v3713
  %v3730 = vadd.f32 %v3625, %v3726
  %s3731 = scalar_lea.vmem %s5, 672
  %v3732 = vld [vmem:[%s3731] sm:$0xff]
  %v3733 = vld [vmem:[%s3731 + $0x8] sm:$0xff]
  %v3734 = vld [vmem:[%s3731 + $0x10] sm:$0xff]
  %v3735 = vld [vmem:[%s3731 + $0x18] sm:$0xff]
  %v3736 = vld [vmem:[%s3731 + $0x20] sm:$0xff]
  %v3737 = vld [vmem:[%s3731 + $0x28] sm:$0xff]
  %v3738 = vld [vmem:[%s3731 + $0x30] sm:$0xff]
  %v3739 = vld [vmem:[%s3731 + $0x38] sm:$0xff]
  %v3740 = vld [vmem:[%s3731 + $0x40] sm:$0xff]
  %v3741 = vld [vmem:[%s3731 + $0x48] sm:$0xff]
  %v3742 = vld [vmem:[%s3731 + $0x50] sm:$0xff]
  %v3743 = vld [vmem:[%s3731 + $0x58] sm:$0xff]
  %v3744 = vrot.slane %v3025, 3
  %v3757 = vunpack.c.l.b16 %v3732
  %v3758 = vunpack.c.h.b16 %v3732
  %v3759 = vunpack.c.l.b16 %v3733
  %v3760 = vunpack.c.h.b16 %v3733
  %v3761 = vunpack.c.l.b16 %v3734
  %v3762 = vunpack.c.h.b16 %v3734
  %v3763 = vunpack.c.l.b16 %v3735
  %v3764 = vunpack.c.h.b16 %v3735
  %v3765 = vunpack.c.l.b16 %v3736
  %v3766 = vunpack.c.h.b16 %v3736
  %v3767 = vunpack.c.l.b16 %v3737
  %v3768 = vunpack.c.h.b16 %v3737
  %v3769 = vunpack.c.l.b16 %v3738
  %v3770 = vunpack.c.h.b16 %v3738
  %v3771 = vunpack.c.l.b16 %v3739
  %v3772 = vunpack.c.h.b16 %v3739
  %v3773 = vunpack.c.l.b16 %v3740
  %v3774 = vunpack.c.h.b16 %v3740
  %v3775 = vunpack.c.l.b16 %v3741
  %v3776 = vunpack.c.h.b16 %v3741
  %v3777 = vunpack.c.l.b16 %v3742
  %v3778 = vunpack.c.h.b16 %v3742
  %v3779 = vunpack.c.l.b16 %v3743
  %v3780 = vunpack.c.h.b16 %v3743
  %v3781 = vpack.c.b16 %v3759, %v3757
  %v3782 = vpack.c.b16 %v3760, %v3758
  %v3783 = vpack.c.b16 %v3763, %v3761
  %v3784 = vpack.c.b16 %v3764, %v3762
  %v3785 = vpack.c.b16 %v3767, %v3765
  %v3786 = vpack.c.b16 %v3768, %v3766
  %v3787 = vpack.c.b16 %v3771, %v3769
  %v3788 = vpack.c.b16 %v3772, %v3770
  %v3789 = vpack.c.b16 %v3775, %v3773
  %v3790 = vpack.c.b16 %v3776, %v3774
  %v3791 = vpack.c.b16 %v3779, %v3777
  %v3792 = vpack.c.b16 %v3780, %v3778
  %v3806 = vsel %vm3087, %v3744, 0
  %3808 = vmatpush.bf16.msra.mxu0 0
  %3809 = vmatpush.bf16.msra.mxu0 0
  %3810 = vmatpush.bf16.msra.mxu0 %v3791
  %3811 = vmatpush.bf16.msra.mxu0 %v3789
  %3812 = vmatpush.bf16.msra.mxu0 %v3787
  %3813 = vmatpush.bf16.msra.mxu0 %v3785
  %3814 = vmatpush.bf16.msra.mxu0 %v3783
  %3815 = vmatpush.bf16.msra.mxu0 %v3781
  %3816 = vmatmul.bf16.gmra.mxu0 %v3806
  %v3817 = vpop.f32.mrf.mxu0
  %v3818 = vadd.f32 0.0, %v3817
  %v3819 = vpop.f32.mrf.mxu0
  %3820 = vdwg.mxu0
  %3821 = vmatpush.bf16.msra.mxu0 0
  %3822 = vmatpush.bf16.msra.mxu0 0
  %3823 = vmatpush.bf16.msra.mxu0 %v3792
  %3824 = vmatpush.bf16.msra.mxu0 %v3790
  %3825 = vmatpush.bf16.msra.mxu0 %v3788
  %3826 = vmatpush.bf16.msra.mxu0 %v3786
  %3827 = vmatpush.bf16.msra.mxu0 %v3784
  %3828 = vmatpush.bf16.msra.mxu0 %v3782
  %3829 = vmatmul.bf16.gmra.mxu0 %v3806
  %v3830 = vpop.f32.mrf.mxu0
  %v3831 = vadd.f32 0.0, %v3830
  %v3832 = vpop.f32.mrf.mxu0
  %3833 = vdwg.mxu0
  %v3834 = vadd.f32 %v3729, %v3818
  %v3835 = vadd.f32 %v3730, %v3831
  %s3836 = scalar_lea.vmem %s5, 768
  %v3837 = vld [vmem:[%s3836] sm:$0xff]
  %v3838 = vld [vmem:[%s3836 + $0x8] sm:$0xff]
  %v3839 = vld [vmem:[%s3836 + $0x10] sm:$0xff]
  %v3840 = vld [vmem:[%s3836 + $0x18] sm:$0xff]
  %v3841 = vld [vmem:[%s3836 + $0x20] sm:$0xff]
  %v3842 = vld [vmem:[%s3836 + $0x28] sm:$0xff]
  %v3843 = vld [vmem:[%s3836 + $0x30] sm:$0xff]
  %v3844 = vld [vmem:[%s3836 + $0x38] sm:$0xff]
  %v3845 = vld [vmem:[%s3836 + $0x40] sm:$0xff]
  %v3846 = vld [vmem:[%s3836 + $0x48] sm:$0xff]
  %v3847 = vld [vmem:[%s3836 + $0x50] sm:$0xff]
  %v3848 = vld [vmem:[%s3836 + $0x58] sm:$0xff]
  %v3861 = vunpack.c.l.b16 %v3837
  %v3862 = vunpack.c.h.b16 %v3837
  %v3863 = vunpack.c.l.b16 %v3838
  %v3864 = vunpack.c.h.b16 %v3838
  %v3865 = vunpack.c.l.b16 %v3839
  %v3866 = vunpack.c.h.b16 %v3839
  %v3867 = vunpack.c.l.b16 %v3840
  %v3868 = vunpack.c.h.b16 %v3840
  %v3869 = vunpack.c.l.b16 %v3841
  %v3870 = vunpack.c.h.b16 %v3841
  %v3871 = vunpack.c.l.b16 %v3842
  %v3872 = vunpack.c.h.b16 %v3842
  %v3873 = vunpack.c.l.b16 %v3843
  %v3874 = vunpack.c.h.b16 %v3843
  %v3875 = vunpack.c.l.b16 %v3844
  %v3876 = vunpack.c.h.b16 %v3844
  %v3877 = vunpack.c.l.b16 %v3845
  %v3878 = vunpack.c.h.b16 %v3845
  %v3879 = vunpack.c.l.b16 %v3846
  %v3880 = vunpack.c.h.b16 %v3846
  %v3881 = vunpack.c.l.b16 %v3847
  %v3882 = vunpack.c.h.b16 %v3847
  %v3883 = vunpack.c.l.b16 %v3848
  %v3884 = vunpack.c.h.b16 %v3848
  %v3885 = vpack.c.b16 %v3863, %v3861
  %v3886 = vpack.c.b16 %v3864, %v3862
  %v3887 = vpack.c.b16 %v3867, %v3865
  %v3888 = vpack.c.b16 %v3868, %v3866
  %v3889 = vpack.c.b16 %v3871, %v3869
  %v3890 = vpack.c.b16 %v3872, %v3870
  %v3891 = vpack.c.b16 %v3875, %v3873
  %v3892 = vpack.c.b16 %v3876, %v3874
  %v3893 = vpack.c.b16 %v3879, %v3877
  %v3894 = vpack.c.b16 %v3880, %v3878
  %v3895 = vpack.c.b16 %v3883, %v3881
  %v3896 = vpack.c.b16 %v3884, %v3882
  %v3910 = vsel %vm3087, %v2993, 0
  %3912 = vmatpush.bf16.msra.mxu0 0
  %3913 = vmatpush.bf16.msra.mxu0 0
  %3914 = vmatpush.bf16.msra.mxu0 %v3895
  %3915 = vmatpush.bf16.msra.mxu0 %v3893
  %3916 = vmatpush.bf16.msra.mxu0 %v3891
  %3917 = vmatpush.bf16.msra.mxu0 %v3889
  %3918 = vmatpush.bf16.msra.mxu0 %v3887
  %3919 = vmatpush.bf16.msra.mxu0 %v3885
  %3920 = vmatmul.bf16.gmra.mxu0 %v3910
  %v3921 = vpop.f32.mrf.mxu0
  %v3922 = vadd.f32 0.0, %v3921
  %v3923 = vpop.f32.mrf.mxu0
  %3924 = vdwg.mxu0
  %3925 = vmatpush.bf16.msra.mxu0 0
  %3926 = vmatpush.bf16.msra.mxu0 0
  %3927 = vmatpush.bf16.msra.mxu0 %v3896
  %3928 = vmatpush.bf16.msra.mxu0 %v3894
  %3929 = vmatpush.bf16.msra.mxu0 %v3892
  %3930 = vmatpush.bf16.msra.mxu0 %v3890
  %3931 = vmatpush.bf16.msra.mxu0 %v3888
  %3932 = vmatpush.bf16.msra.mxu0 %v3886
  %3933 = vmatmul.bf16.gmra.mxu0 %v3910
  %v3934 = vpop.f32.mrf.mxu0
  %v3935 = vadd.f32 0.0, %v3934
  %v3936 = vpop.f32.mrf.mxu0
  %3937 = vdwg.mxu0
  %v3938 = vadd.f32 %v3834, %v3922
  %v3939 = vadd.f32 %v3835, %v3935
  %s3940 = scalar_lea.vmem %s5, 864
  %v3941 = vld [vmem:[%s3940] sm:$0xff]
  %v3942 = vld [vmem:[%s3940 + $0x8] sm:$0xff]
  %v3943 = vld [vmem:[%s3940 + $0x10] sm:$0xff]
  %v3944 = vld [vmem:[%s3940 + $0x18] sm:$0xff]
  %v3945 = vld [vmem:[%s3940 + $0x20] sm:$0xff]
  %v3946 = vld [vmem:[%s3940 + $0x28] sm:$0xff]
  %v3947 = vld [vmem:[%s3940 + $0x30] sm:$0xff]
  %v3948 = vld [vmem:[%s3940 + $0x38] sm:$0xff]
  %v3949 = vld [vmem:[%s3940 + $0x40] sm:$0xff]
  %v3950 = vld [vmem:[%s3940 + $0x48] sm:$0xff]
  %v3951 = vld [vmem:[%s3940 + $0x50] sm:$0xff]
  %v3952 = vld [vmem:[%s3940 + $0x58] sm:$0xff]
  %v3954 = vunpack.c.l.b16 %v2993
  %v3955 = vpack.c.b16 %v3954, %v3954
  %v3957 = vshrl.u32 %v3955, 16
  %v3971 = vunpack.c.l.b16 %v3941
  %v3972 = vunpack.c.h.b16 %v3941
  %v3973 = vunpack.c.l.b16 %v3942
  %v3974 = vunpack.c.h.b16 %v3942
  %v3975 = vunpack.c.l.b16 %v3943
  %v3976 = vunpack.c.h.b16 %v3943
  %v3977 = vunpack.c.l.b16 %v3944
  %v3978 = vunpack.c.h.b16 %v3944
  %v3979 = vunpack.c.l.b16 %v3945
  %v3980 = vunpack.c.h.b16 %v3945
  %v3981 = vunpack.c.l.b16 %v3946
  %v3982 = vunpack.c.h.b16 %v3946
  %v3983 = vunpack.c.l.b16 %v3947
  %v3984 = vunpack.c.h.b16 %v3947
  %v3985 = vunpack.c.l.b16 %v3948
  %v3986 = vunpack.c.h.b16 %v3948
  %v3987 = vunpack.c.l.b16 %v3949
  %v3988 = vunpack.c.h.b16 %v3949
  %v3989 = vunpack.c.l.b16 %v3950
  %v3990 = vunpack.c.h.b16 %v3950
  %v3991 = vunpack.c.l.b16 %v3951
  %v3992 = vunpack.c.h.b16 %v3951
  %v3993 = vunpack.c.l.b16 %v3952
  %v3994 = vunpack.c.h.b16 %v3952
  %v3995 = vpack.c.b16 %v3973, %v3971
  %v3996 = vpack.c.b16 %v3974, %v3972
  %v3997 = vpack.c.b16 %v3977, %v3975
  %v3998 = vpack.c.b16 %v3978, %v3976
  %v3999 = vpack.c.b16 %v3981, %v3979
  %v4000 = vpack.c.b16 %v3982, %v3980
  %v4001 = vpack.c.b16 %v3985, %v3983
  %v4002 = vpack.c.b16 %v3986, %v3984
  %v4003 = vpack.c.b16 %v3989, %v3987
  %v4004 = vpack.c.b16 %v3990, %v3988
  %v4005 = vpack.c.b16 %v3993, %v3991
  %v4006 = vpack.c.b16 %v3994, %v3992
  %v4020 = vsel %vm3087, %v3957, 0
  %4022 = vmatpush.bf16.msra.mxu0 0
  %4023 = vmatpush.bf16.msra.mxu0 0
  %4024 = vmatpush.bf16.msra.mxu0 %v4005
  %4025 = vmatpush.bf16.msra.mxu0 %v4003
  %4026 = vmatpush.bf16.msra.mxu0 %v4001
  %4027 = vmatpush.bf16.msra.mxu0 %v3999
  %4028 = vmatpush.bf16.msra.mxu0 %v3997
  %4029 = vmatpush.bf16.msra.mxu0 %v3995
  %4030 = vmatmul.bf16.gmra.mxu0 %v4020
  %v4031 = vpop.f32.mrf.mxu0
  %v4032 = vadd.f32 0.0, %v4031
  %v4033 = vpop.f32.mrf.mxu0
  %4034 = vdwg.mxu0
  %4035 = vmatpush.bf16.msra.mxu0 0
  %4036 = vmatpush.bf16.msra.mxu0 0
  %4037 = vmatpush.bf16.msra.mxu0 %v4006
  %4038 = vmatpush.bf16.msra.mxu0 %v4004
  %4039 = vmatpush.bf16.msra.mxu0 %v4002
  %4040 = vmatpush.bf16.msra.mxu0 %v4000
  %4041 = vmatpush.bf16.msra.mxu0 %v3998
  %4042 = vmatpush.bf16.msra.mxu0 %v3996
  %4043 = vmatmul.bf16.gmra.mxu0 %v4020
  %v4044 = vpop.f32.mrf.mxu0
  %v4045 = vadd.f32 0.0, %v4044
  %v4046 = vpop.f32.mrf.mxu0
  %4047 = vdwg.mxu0
  %v4048 = vadd.f32 %v3938, %v4032
  %v4049 = vadd.f32 %v3939, %v4045
  %s4050 = scalar_lea.vmem %s5, 960
  %v4051 = vld [vmem:[%s4050] sm:$0xff]
  %v4052 = vld [vmem:[%s4050 + $0x8] sm:$0xff]
  %v4053 = vld [vmem:[%s4050 + $0x10] sm:$0xff]
  %v4054 = vld [vmem:[%s4050 + $0x18] sm:$0xff]
  %v4055 = vld [vmem:[%s4050 + $0x20] sm:$0xff]
  %v4056 = vld [vmem:[%s4050 + $0x28] sm:$0xff]
  %v4057 = vld [vmem:[%s4050 + $0x30] sm:$0xff]
  %v4058 = vld [vmem:[%s4050 + $0x38] sm:$0xff]
  %v4059 = vld [vmem:[%s4050 + $0x40] sm:$0xff]
  %v4060 = vld [vmem:[%s4050 + $0x48] sm:$0xff]
  %v4061 = vld [vmem:[%s4050 + $0x50] sm:$0xff]
  %v4062 = vld [vmem:[%s4050 + $0x58] sm:$0xff]
  %v4063 = vrot.slane %v3955, 1
  %v4076 = vunpack.c.l.b16 %v4051
  %v4077 = vunpack.c.h.b16 %v4051
  %v4078 = vunpack.c.l.b16 %v4052
  %v4079 = vunpack.c.h.b16 %v4052
  %v4080 = vunpack.c.l.b16 %v4053
  %v4081 = vunpack.c.h.b16 %v4053
  %v4082 = vunpack.c.l.b16 %v4054
  %v4083 = vunpack.c.h.b16 %v4054
  %v4084 = vunpack.c.l.b16 %v4055
  %v4085 = vunpack.c.h.b16 %v4055
  %v4086 = vunpack.c.l.b16 %v4056
  %v4087 = vunpack.c.h.b16 %v4056
  %v4088 = vunpack.c.l.b16 %v4057
  %v4089 = vunpack.c.h.b16 %v4057
  %v4090 = vunpack.c.l.b16 %v4058
  %v4091 = vunpack.c.h.b16 %v4058
  %v4092 = vunpack.c.l.b16 %v4059
  %v4093 = vunpack.c.h.b16 %v4059
  %v4094 = vunpack.c.l.b16 %v4060
  %v4095 = vunpack.c.h.b16 %v4060
  %v4096 = vunpack.c.l.b16 %v4061
  %v4097 = vunpack.c.h.b16 %v4061
  %v4098 = vunpack.c.l.b16 %v4062
  %v4099 = vunpack.c.h.b16 %v4062
  %v4100 = vpack.c.b16 %v4078, %v4076
  %v4101 = vpack.c.b16 %v4079, %v4077
  %v4102 = vpack.c.b16 %v4082, %v4080
  %v4103 = vpack.c.b16 %v4083, %v4081
  %v4104 = vpack.c.b16 %v4086, %v4084
  %v4105 = vpack.c.b16 %v4087, %v4085
  %v4106 = vpack.c.b16 %v4090, %v4088
  %v4107 = vpack.c.b16 %v4091, %v4089
  %v4108 = vpack.c.b16 %v4094, %v4092
  %v4109 = vpack.c.b16 %v4095, %v4093
  %v4110 = vpack.c.b16 %v4098, %v4096
  %v4111 = vpack.c.b16 %v4099, %v4097
  %v4125 = vsel %vm3087, %v4063, 0
  %4127 = vmatpush.bf16.msra.mxu0 0
  %4128 = vmatpush.bf16.msra.mxu0 0
  %4129 = vmatpush.bf16.msra.mxu0 %v4110
  %4130 = vmatpush.bf16.msra.mxu0 %v4108
  %4131 = vmatpush.bf16.msra.mxu0 %v4106
  %4132 = vmatpush.bf16.msra.mxu0 %v4104
  %4133 = vmatpush.bf16.msra.mxu0 %v4102
  %4134 = vmatpush.bf16.msra.mxu0 %v4100
  %4135 = vmatmul.bf16.gmra.mxu0 %v4125
  %v4136 = vpop.f32.mrf.mxu0
  %v4137 = vadd.f32 0.0, %v4136
  %v4138 = vpop.f32.mrf.mxu0
  %4139 = vdwg.mxu0
  %4140 = vmatpush.bf16.msra.mxu0 0
  %4141 = vmatpush.bf16.msra.mxu0 0
  %4142 = vmatpush.bf16.msra.mxu0 %v4111
  %4143 = vmatpush.bf16.msra.mxu0 %v4109
  %4144 = vmatpush.bf16.msra.mxu0 %v4107
  %4145 = vmatpush.bf16.msra.mxu0 %v4105
  %4146 = vmatpush.bf16.msra.mxu0 %v4103
  %4147 = vmatpush.bf16.msra.mxu0 %v4101
  %4148 = vmatmul.bf16.gmra.mxu0 %v4125
  %v4149 = vpop.f32.mrf.mxu0
  %v4150 = vadd.f32 0.0, %v4149
  %v4151 = vpop.f32.mrf.mxu0
  %4152 = vdwg.mxu0
  %v4153 = vadd.f32 %v4048, %v4137
  %v4154 = vadd.f32 %v4049, %v4150
  %s4155 = scalar_lea.vmem %s5, 1056
  %v4156 = vld [vmem:[%s4155] sm:$0xff]
  %v4157 = vld [vmem:[%s4155 + $0x8] sm:$0xff]
  %v4158 = vld [vmem:[%s4155 + $0x10] sm:$0xff]
  %v4159 = vld [vmem:[%s4155 + $0x18] sm:$0xff]
  %v4160 = vld [vmem:[%s4155 + $0x20] sm:$0xff]
  %v4161 = vld [vmem:[%s4155 + $0x28] sm:$0xff]
  %v4162 = vld [vmem:[%s4155 + $0x30] sm:$0xff]
  %v4163 = vld [vmem:[%s4155 + $0x38] sm:$0xff]
  %v4164 = vld [vmem:[%s4155 + $0x40] sm:$0xff]
  %v4165 = vld [vmem:[%s4155 + $0x48] sm:$0xff]
  %v4166 = vld [vmem:[%s4155 + $0x50] sm:$0xff]
  %v4167 = vld [vmem:[%s4155 + $0x58] sm:$0xff]
  %v4168 = vrot.slane %v3957, 1
  %v4181 = vunpack.c.l.b16 %v4156
  %v4182 = vunpack.c.h.b16 %v4156
  %v4183 = vunpack.c.l.b16 %v4157
  %v4184 = vunpack.c.h.b16 %v4157
  %v4185 = vunpack.c.l.b16 %v4158
  %v4186 = vunpack.c.h.b16 %v4158
  %v4187 = vunpack.c.l.b16 %v4159
  %v4188 = vunpack.c.h.b16 %v4159
  %v4189 = vunpack.c.l.b16 %v4160
  %v4190 = vunpack.c.h.b16 %v4160
  %v4191 = vunpack.c.l.b16 %v4161
  %v4192 = vunpack.c.h.b16 %v4161
  %v4193 = vunpack.c.l.b16 %v4162
  %v4194 = vunpack.c.h.b16 %v4162
  %v4195 = vunpack.c.l.b16 %v4163
  %v4196 = vunpack.c.h.b16 %v4163
  %v4197 = vunpack.c.l.b16 %v4164
  %v4198 = vunpack.c.h.b16 %v4164
  %v4199 = vunpack.c.l.b16 %v4165
  %v4200 = vunpack.c.h.b16 %v4165
  %v4201 = vunpack.c.l.b16 %v4166
  %v4202 = vunpack.c.h.b16 %v4166
  %v4203 = vunpack.c.l.b16 %v4167
  %v4204 = vunpack.c.h.b16 %v4167
  %v4205 = vpack.c.b16 %v4183, %v4181
  %v4206 = vpack.c.b16 %v4184, %v4182
  %v4207 = vpack.c.b16 %v4187, %v4185
  %v4208 = vpack.c.b16 %v4188, %v4186
  %v4209 = vpack.c.b16 %v4191, %v4189
  %v4210 = vpack.c.b16 %v4192, %v4190
  %v4211 = vpack.c.b16 %v4195, %v4193
  %v4212 = vpack.c.b16 %v4196, %v4194
  %v4213 = vpack.c.b16 %v4199, %v4197
  %v4214 = vpack.c.b16 %v4200, %v4198
  %v4215 = vpack.c.b16 %v4203, %v4201
  %v4216 = vpack.c.b16 %v4204, %v4202
  %v4230 = vsel %vm3087, %v4168, 0
  %4232 = vmatpush.bf16.msra.mxu0 0
  %4233 = vmatpush.bf16.msra.mxu0 0
  %4234 = vmatpush.bf16.msra.mxu0 %v4215
  %4235 = vmatpush.bf16.msra.mxu0 %v4213
  %4236 = vmatpush.bf16.msra.mxu0 %v4211
  %4237 = vmatpush.bf16.msra.mxu0 %v4209
  %4238 = vmatpush.bf16.msra.mxu0 %v4207
  %4239 = vmatpush.bf16.msra.mxu0 %v4205
  %4240 = vmatmul.bf16.gmra.mxu0 %v4230
  %v4241 = vpop.f32.mrf.mxu0
  %v4242 = vadd.f32 0.0, %v4241
  %v4243 = vpop.f32.mrf.mxu0
  %4244 = vdwg.mxu0
  %4245 = vmatpush.bf16.msra.mxu0 0
  %4246 = vmatpush.bf16.msra.mxu0 0
  %4247 = vmatpush.bf16.msra.mxu0 %v4216
  %4248 = vmatpush.bf16.msra.mxu0 %v4214
  %4249 = vmatpush.bf16.msra.mxu0 %v4212
  %4250 = vmatpush.bf16.msra.mxu0 %v4210
  %4251 = vmatpush.bf16.msra.mxu0 %v4208
  %4252 = vmatpush.bf16.msra.mxu0 %v4206
  %4253 = vmatmul.bf16.gmra.mxu0 %v4230
  %v4254 = vpop.f32.mrf.mxu0
  %v4255 = vadd.f32 0.0, %v4254
  %v4256 = vpop.f32.mrf.mxu0
  %4257 = vdwg.mxu0
  %v4258 = vadd.f32 %v4153, %v4242
  %v4259 = vadd.f32 %v4154, %v4255
  %s4260 = scalar_lea.vmem %s5, 1152
  %v4261 = vld [vmem:[%s4260] sm:$0xff]
  %v4262 = vld [vmem:[%s4260 + $0x8] sm:$0xff]
  %v4263 = vld [vmem:[%s4260 + $0x10] sm:$0xff]
  %v4264 = vld [vmem:[%s4260 + $0x18] sm:$0xff]
  %v4265 = vld [vmem:[%s4260 + $0x20] sm:$0xff]
  %v4266 = vld [vmem:[%s4260 + $0x28] sm:$0xff]
  %v4267 = vld [vmem:[%s4260 + $0x30] sm:$0xff]
  %v4268 = vld [vmem:[%s4260 + $0x38] sm:$0xff]
  %v4269 = vld [vmem:[%s4260 + $0x40] sm:$0xff]
  %v4270 = vld [vmem:[%s4260 + $0x48] sm:$0xff]
  %v4271 = vld [vmem:[%s4260 + $0x50] sm:$0xff]
  %v4272 = vld [vmem:[%s4260 + $0x58] sm:$0xff]
  %v4273 = vrot.slane %v3955, 2
  %v4286 = vunpack.c.l.b16 %v4261
  %v4287 = vunpack.c.h.b16 %v4261
  %v4288 = vunpack.c.l.b16 %v4262
  %v4289 = vunpack.c.h.b16 %v4262
  %v4290 = vunpack.c.l.b16 %v4263
  %v4291 = vunpack.c.h.b16 %v4263
  %v4292 = vunpack.c.l.b16 %v4264
  %v4293 = vunpack.c.h.b16 %v4264
  %v4294 = vunpack.c.l.b16 %v4265
  %v4295 = vunpack.c.h.b16 %v4265
  %v4296 = vunpack.c.l.b16 %v4266
  %v4297 = vunpack.c.h.b16 %v4266
  %v4298 = vunpack.c.l.b16 %v4267
  %v4299 = vunpack.c.h.b16 %v4267
  %v4300 = vunpack.c.l.b16 %v4268
  %v4301 = vunpack.c.h.b16 %v4268
  %v4302 = vunpack.c.l.b16 %v4269
  %v4303 = vunpack.c.h.b16 %v4269
  %v4304 = vunpack.c.l.b16 %v4270
  %v4305 = vunpack.c.h.b16 %v4270
  %v4306 = vunpack.c.l.b16 %v4271
  %v4307 = vunpack.c.h.b16 %v4271
  %v4308 = vunpack.c.l.b16 %v4272
  %v4309 = vunpack.c.h.b16 %v4272
  %v4310 = vpack.c.b16 %v4288, %v4286
  %v4311 = vpack.c.b16 %v4289, %v4287
  %v4312 = vpack.c.b16 %v4292, %v4290
  %v4313 = vpack.c.b16 %v4293, %v4291
  %v4314 = vpack.c.b16 %v4296, %v4294
  %v4315 = vpack.c.b16 %v4297, %v4295
  %v4316 = vpack.c.b16 %v4300, %v4298
  %v4317 = vpack.c.b16 %v4301, %v4299
  %v4318 = vpack.c.b16 %v4304, %v4302
  %v4319 = vpack.c.b16 %v4305, %v4303
  %v4320 = vpack.c.b16 %v4308, %v4306
  %v4321 = vpack.c.b16 %v4309, %v4307
  %v4335 = vsel %vm3087, %v4273, 0
  %4337 = vmatpush.bf16.msra.mxu0 0
  %4338 = vmatpush.bf16.msra.mxu0 0
  %4339 = vmatpush.bf16.msra.mxu0 %v4320
  %4340 = vmatpush.bf16.msra.mxu0 %v4318
  %4341 = vmatpush.bf16.msra.mxu0 %v4316
  %4342 = vmatpush.bf16.msra.mxu0 %v4314
  %4343 = vmatpush.bf16.msra.mxu0 %v4312
  %4344 = vmatpush.bf16.msra.mxu0 %v4310
  %4345 = vmatmul.bf16.gmra.mxu0 %v4335
  %v4346 = vpop.f32.mrf.mxu0
  %v4347 = vadd.f32 0.0, %v4346
  %v4348 = vpop.f32.mrf.mxu0
  %4349 = vdwg.mxu0
  %4350 = vmatpush.bf16.msra.mxu0 0
  %4351 = vmatpush.bf16.msra.mxu0 0
  %4352 = vmatpush.bf16.msra.mxu0 %v4321
  %4353 = vmatpush.bf16.msra.mxu0 %v4319
  %4354 = vmatpush.bf16.msra.mxu0 %v4317
  %4355 = vmatpush.bf16.msra.mxu0 %v4315
  %4356 = vmatpush.bf16.msra.mxu0 %v4313
  %4357 = vmatpush.bf16.msra.mxu0 %v4311
  %4358 = vmatmul.bf16.gmra.mxu0 %v4335
  %v4359 = vpop.f32.mrf.mxu0
  %v4360 = vadd.f32 0.0, %v4359
  %v4361 = vpop.f32.mrf.mxu0
  %4362 = vdwg.mxu0
  %v4363 = vadd.f32 %v4258, %v4347
  %v4364 = vadd.f32 %v4259, %v4360
  %s4365 = scalar_lea.vmem %s5, 1248
  %v4366 = vld [vmem:[%s4365] sm:$0xff]
  %v4367 = vld [vmem:[%s4365 + $0x8] sm:$0xff]
  %v4368 = vld [vmem:[%s4365 + $0x10] sm:$0xff]
  %v4369 = vld [vmem:[%s4365 + $0x18] sm:$0xff]
  %v4370 = vld [vmem:[%s4365 + $0x20] sm:$0xff]
  %v4371 = vld [vmem:[%s4365 + $0x28] sm:$0xff]
  %v4372 = vld [vmem:[%s4365 + $0x30] sm:$0xff]
  %v4373 = vld [vmem:[%s4365 + $0x38] sm:$0xff]
  %v4374 = vld [vmem:[%s4365 + $0x40] sm:$0xff]
  %v4375 = vld [vmem:[%s4365 + $0x48] sm:$0xff]
  %v4376 = vld [vmem:[%s4365 + $0x50] sm:$0xff]
  %v4377 = vld [vmem:[%s4365 + $0x58] sm:$0xff]
  %v4378 = vrot.slane %v3957, 2
  %v4391 = vunpack.c.l.b16 %v4366
  %v4392 = vunpack.c.h.b16 %v4366
  %v4393 = vunpack.c.l.b16 %v4367
  %v4394 = vunpack.c.h.b16 %v4367
  %v4395 = vunpack.c.l.b16 %v4368
  %v4396 = vunpack.c.h.b16 %v4368
  %v4397 = vunpack.c.l.b16 %v4369
  %v4398 = vunpack.c.h.b16 %v4369
  %v4399 = vunpack.c.l.b16 %v4370
  %v4400 = vunpack.c.h.b16 %v4370
  %v4401 = vunpack.c.l.b16 %v4371
  %v4402 = vunpack.c.h.b16 %v4371
  %v4403 = vunpack.c.l.b16 %v4372
  %v4404 = vunpack.c.h.b16 %v4372
  %v4405 = vunpack.c.l.b16 %v4373
  %v4406 = vunpack.c.h.b16 %v4373
  %v4407 = vunpack.c.l.b16 %v4374
  %v4408 = vunpack.c.h.b16 %v4374
  %v4409 = vunpack.c.l.b16 %v4375
  %v4410 = vunpack.c.h.b16 %v4375
  %v4411 = vunpack.c.l.b16 %v4376
  %v4412 = vunpack.c.h.b16 %v4376
  %v4413 = vunpack.c.l.b16 %v4377
  %v4414 = vunpack.c.h.b16 %v4377
  %v4415 = vpack.c.b16 %v4393, %v4391
  %v4416 = vpack.c.b16 %v4394, %v4392
  %v4417 = vpack.c.b16 %v4397, %v4395
  %v4418 = vpack.c.b16 %v4398, %v4396
  %v4419 = vpack.c.b16 %v4401, %v4399
  %v4420 = vpack.c.b16 %v4402, %v4400
  %v4421 = vpack.c.b16 %v4405, %v4403
  %v4422 = vpack.c.b16 %v4406, %v4404
  %v4423 = vpack.c.b16 %v4409, %v4407
  %v4424 = vpack.c.b16 %v4410, %v4408
  %v4425 = vpack.c.b16 %v4413, %v4411
  %v4426 = vpack.c.b16 %v4414, %v4412
  %v4440 = vsel %vm3087, %v4378, 0
  %4442 = vmatpush.bf16.msra.mxu0 0
  %4443 = vmatpush.bf16.msra.mxu0 0
  %4444 = vmatpush.bf16.msra.mxu0 %v4425
  %4445 = vmatpush.bf16.msra.mxu0 %v4423
  %4446 = vmatpush.bf16.msra.mxu0 %v4421
  %4447 = vmatpush.bf16.msra.mxu0 %v4419
  %4448 = vmatpush.bf16.msra.mxu0 %v4417
  %4449 = vmatpush.bf16.msra.mxu0 %v4415
  %4450 = vmatmul.bf16.gmra.mxu0 %v4440
  %v4451 = vpop.f32.mrf.mxu0
  %v4452 = vadd.f32 0.0, %v4451
  %v4453 = vpop.f32.mrf.mxu0
  %4454 = vdwg.mxu0
  %4455 = vmatpush.bf16.msra.mxu0 0
  %4456 = vmatpush.bf16.msra.mxu0 0
  %4457 = vmatpush.bf16.msra.mxu0 %v4426
  %4458 = vmatpush.bf16.msra.mxu0 %v4424
  %4459 = vmatpush.bf16.msra.mxu0 %v4422
  %4460 = vmatpush.bf16.msra.mxu0 %v4420
  %4461 = vmatpush.bf16.msra.mxu0 %v4418
  %4462 = vmatpush.bf16.msra.mxu0 %v4416
  %4463 = vmatmul.bf16.gmra.mxu0 %v4440
  %v4464 = vpop.f32.mrf.mxu0
  %v4465 = vadd.f32 0.0, %v4464
  %v4466 = vpop.f32.mrf.mxu0
  %4467 = vdwg.mxu0
  %v4468 = vadd.f32 %v4363, %v4452
  %v4469 = vadd.f32 %v4364, %v4465
  %s4470 = scalar_lea.vmem %s5, 1344
  %v4471 = vld [vmem:[%s4470] sm:$0xff]
  %v4472 = vld [vmem:[%s4470 + $0x8] sm:$0xff]
  %v4473 = vld [vmem:[%s4470 + $0x10] sm:$0xff]
  %v4474 = vld [vmem:[%s4470 + $0x18] sm:$0xff]
  %v4475 = vld [vmem:[%s4470 + $0x20] sm:$0xff]
  %v4476 = vld [vmem:[%s4470 + $0x28] sm:$0xff]
  %v4477 = vld [vmem:[%s4470 + $0x30] sm:$0xff]
  %v4478 = vld [vmem:[%s4470 + $0x38] sm:$0xff]
  %v4479 = vld [vmem:[%s4470 + $0x40] sm:$0xff]
  %v4480 = vld [vmem:[%s4470 + $0x48] sm:$0xff]
  %v4481 = vld [vmem:[%s4470 + $0x50] sm:$0xff]
  %v4482 = vld [vmem:[%s4470 + $0x58] sm:$0xff]
  %v4483 = vrot.slane %v3955, 3
  %v4496 = vunpack.c.l.b16 %v4471
  %v4497 = vunpack.c.h.b16 %v4471
  %v4498 = vunpack.c.l.b16 %v4472
  %v4499 = vunpack.c.h.b16 %v4472
  %v4500 = vunpack.c.l.b16 %v4473
  %v4501 = vunpack.c.h.b16 %v4473
  %v4502 = vunpack.c.l.b16 %v4474
  %v4503 = vunpack.c.h.b16 %v4474
  %v4504 = vunpack.c.l.b16 %v4475
  %v4505 = vunpack.c.h.b16 %v4475
  %v4506 = vunpack.c.l.b16 %v4476
  %v4507 = vunpack.c.h.b16 %v4476
  %v4508 = vunpack.c.l.b16 %v4477
  %v4509 = vunpack.c.h.b16 %v4477
  %v4510 = vunpack.c.l.b16 %v4478
  %v4511 = vunpack.c.h.b16 %v4478
  %v4512 = vunpack.c.l.b16 %v4479
  %v4513 = vunpack.c.h.b16 %v4479
  %v4514 = vunpack.c.l.b16 %v4480
  %v4515 = vunpack.c.h.b16 %v4480
  %v4516 = vunpack.c.l.b16 %v4481
  %v4517 = vunpack.c.h.b16 %v4481
  %v4518 = vunpack.c.l.b16 %v4482
  %v4519 = vunpack.c.h.b16 %v4482
  %v4520 = vpack.c.b16 %v4498, %v4496
  %v4521 = vpack.c.b16 %v4499, %v4497
  %v4522 = vpack.c.b16 %v4502, %v4500
  %v4523 = vpack.c.b16 %v4503, %v4501
  %v4524 = vpack.c.b16 %v4506, %v4504
  %v4525 = vpack.c.b16 %v4507, %v4505
  %v4526 = vpack.c.b16 %v4510, %v4508
  %v4527 = vpack.c.b16 %v4511, %v4509
  %v4528 = vpack.c.b16 %v4514, %v4512
  %v4529 = vpack.c.b16 %v4515, %v4513
  %v4530 = vpack.c.b16 %v4518, %v4516
  %v4531 = vpack.c.b16 %v4519, %v4517
  %v4545 = vsel %vm3087, %v4483, 0
  %4547 = vmatpush.bf16.msra.mxu0 0
  %4548 = vmatpush.bf16.msra.mxu0 0
  %4549 = vmatpush.bf16.msra.mxu0 %v4530
  %4550 = vmatpush.bf16.msra.mxu0 %v4528
  %4551 = vmatpush.bf16.msra.mxu0 %v4526
  %4552 = vmatpush.bf16.msra.mxu0 %v4524
  %4553 = vmatpush.bf16.msra.mxu0 %v4522
  %4554 = vmatpush.bf16.msra.mxu0 %v4520
  %4555 = vmatmul.bf16.gmra.mxu0 %v4545
  %v4556 = vpop.f32.mrf.mxu0
  %v4557 = vadd.f32 0.0, %v4556
  %v4558 = vpop.f32.mrf.mxu0
  %4559 = vdwg.mxu0
  %4560 = vmatpush.bf16.msra.mxu0 0
  %4561 = vmatpush.bf16.msra.mxu0 0
  %4562 = vmatpush.bf16.msra.mxu0 %v4531
  %4563 = vmatpush.bf16.msra.mxu0 %v4529
  %4564 = vmatpush.bf16.msra.mxu0 %v4527
  %4565 = vmatpush.bf16.msra.mxu0 %v4525
  %4566 = vmatpush.bf16.msra.mxu0 %v4523
  %4567 = vmatpush.bf16.msra.mxu0 %v4521
  %4568 = vmatmul.bf16.gmra.mxu0 %v4545
  %v4569 = vpop.f32.mrf.mxu0
  %v4570 = vadd.f32 0.0, %v4569
  %v4571 = vpop.f32.mrf.mxu0
  %4572 = vdwg.mxu0
  %v4573 = vadd.f32 %v4468, %v4557
  %v4574 = vadd.f32 %v4469, %v4570
  %s4575 = scalar_lea.vmem %s5, 1440
  %v4576 = vld [vmem:[%s4575] sm:$0xff]
  %v4577 = vld [vmem:[%s4575 + $0x8] sm:$0xff]
  %v4578 = vld [vmem:[%s4575 + $0x10] sm:$0xff]
  %v4579 = vld [vmem:[%s4575 + $0x18] sm:$0xff]
  %v4580 = vld [vmem:[%s4575 + $0x20] sm:$0xff]
  %v4581 = vld [vmem:[%s4575 + $0x28] sm:$0xff]
  %v4582 = vld [vmem:[%s4575 + $0x30] sm:$0xff]
  %v4583 = vld [vmem:[%s4575 + $0x38] sm:$0xff]
  %v4584 = vld [vmem:[%s4575 + $0x40] sm:$0xff]
  %v4585 = vld [vmem:[%s4575 + $0x48] sm:$0xff]
  %v4586 = vld [vmem:[%s4575 + $0x50] sm:$0xff]
  %v4587 = vld [vmem:[%s4575 + $0x58] sm:$0xff]
  %v4588 = vrot.slane %v3957, 3
  %v4601 = vunpack.c.l.b16 %v4576
  %v4602 = vunpack.c.h.b16 %v4576
  %v4603 = vunpack.c.l.b16 %v4577
  %v4604 = vunpack.c.h.b16 %v4577
  %v4605 = vunpack.c.l.b16 %v4578
  %v4606 = vunpack.c.h.b16 %v4578
  %v4607 = vunpack.c.l.b16 %v4579
  %v4608 = vunpack.c.h.b16 %v4579
  %v4609 = vunpack.c.l.b16 %v4580
  %v4610 = vunpack.c.h.b16 %v4580
  %v4611 = vunpack.c.l.b16 %v4581
  %v4612 = vunpack.c.h.b16 %v4581
  %v4613 = vunpack.c.l.b16 %v4582
  %v4614 = vunpack.c.h.b16 %v4582
  %v4615 = vunpack.c.l.b16 %v4583
  %v4616 = vunpack.c.h.b16 %v4583
  %v4617 = vunpack.c.l.b16 %v4584
  %v4618 = vunpack.c.h.b16 %v4584
  %v4619 = vunpack.c.l.b16 %v4585
  %v4620 = vunpack.c.h.b16 %v4585
  %v4621 = vunpack.c.l.b16 %v4586
  %v4622 = vunpack.c.h.b16 %v4586
  %v4623 = vunpack.c.l.b16 %v4587
  %v4624 = vunpack.c.h.b16 %v4587
  %v4625 = vpack.c.b16 %v4603, %v4601
  %v4626 = vpack.c.b16 %v4604, %v4602
  %v4627 = vpack.c.b16 %v4607, %v4605
  %v4628 = vpack.c.b16 %v4608, %v4606
  %v4629 = vpack.c.b16 %v4611, %v4609
  %v4630 = vpack.c.b16 %v4612, %v4610
  %v4631 = vpack.c.b16 %v4615, %v4613
  %v4632 = vpack.c.b16 %v4616, %v4614
  %v4633 = vpack.c.b16 %v4619, %v4617
  %v4634 = vpack.c.b16 %v4620, %v4618
  %v4635 = vpack.c.b16 %v4623, %v4621
  %v4636 = vpack.c.b16 %v4624, %v4622
  %v4650 = vsel %vm3087, %v4588, 0
  %4652 = vmatpush.bf16.msra.mxu0 0
  %4653 = vmatpush.bf16.msra.mxu0 0
  %4654 = vmatpush.bf16.msra.mxu0 %v4635
  %4655 = vmatpush.bf16.msra.mxu0 %v4633
  %4656 = vmatpush.bf16.msra.mxu0 %v4631
  %4657 = vmatpush.bf16.msra.mxu0 %v4629
  %4658 = vmatpush.bf16.msra.mxu0 %v4627
  %4659 = vmatpush.bf16.msra.mxu0 %v4625
  %4660 = vmatmul.bf16.gmra.mxu0 %v4650
  %v4661 = vpop.f32.mrf.mxu0
  %v4662 = vadd.f32 0.0, %v4661
  %v4663 = vpop.f32.mrf.mxu0
  %4664 = vdwg.mxu0
  %4665 = vmatpush.bf16.msra.mxu0 0
  %4666 = vmatpush.bf16.msra.mxu0 0
  %4667 = vmatpush.bf16.msra.mxu0 %v4636
  %4668 = vmatpush.bf16.msra.mxu0 %v4634
  %4669 = vmatpush.bf16.msra.mxu0 %v4632
  %4670 = vmatpush.bf16.msra.mxu0 %v4630
  %4671 = vmatpush.bf16.msra.mxu0 %v4628
  %4672 = vmatpush.bf16.msra.mxu0 %v4626
  %4673 = vmatmul.bf16.gmra.mxu0 %v4650
  %v4674 = vpop.f32.mrf.mxu0
  %v4675 = vadd.f32 0.0, %v4674
  %v4676 = vpop.f32.mrf.mxu0
  %4677 = vdwg.mxu0
  %v4678 = vadd.f32 %v4573, %v4662
  %v4679 = vadd.f32 %v4574, %v4675
  %s4680 = scalar_lea.vmem %s5, 1536
  %v4681 = vld [vmem:[%s4680] sm:$0xff]
  %v4682 = vld [vmem:[%s4680 + $0x8] sm:$0xff]
  %v4683 = vld [vmem:[%s4680 + $0x10] sm:$0xff]
  %v4684 = vld [vmem:[%s4680 + $0x18] sm:$0xff]
  %v4685 = vld [vmem:[%s4680 + $0x20] sm:$0xff]
  %v4686 = vld [vmem:[%s4680 + $0x28] sm:$0xff]
  %v4687 = vld [vmem:[%s4680 + $0x30] sm:$0xff]
  %v4688 = vld [vmem:[%s4680 + $0x38] sm:$0xff]
  %v4689 = vld [vmem:[%s4680 + $0x40] sm:$0xff]
  %v4690 = vld [vmem:[%s4680 + $0x48] sm:$0xff]
  %v4691 = vld [vmem:[%s4680 + $0x50] sm:$0xff]
  %v4692 = vld [vmem:[%s4680 + $0x58] sm:$0xff]
  %v4705 = vunpack.c.l.b16 %v4681
  %v4706 = vunpack.c.h.b16 %v4681
  %v4707 = vunpack.c.l.b16 %v4682
  %v4708 = vunpack.c.h.b16 %v4682
  %v4709 = vunpack.c.l.b16 %v4683
  %v4710 = vunpack.c.h.b16 %v4683
  %v4711 = vunpack.c.l.b16 %v4684
  %v4712 = vunpack.c.h.b16 %v4684
  %v4713 = vunpack.c.l.b16 %v4685
  %v4714 = vunpack.c.h.b16 %v4685
  %v4715 = vunpack.c.l.b16 %v4686
  %v4716 = vunpack.c.h.b16 %v4686
  %v4717 = vunpack.c.l.b16 %v4687
  %v4718 = vunpack.c.h.b16 %v4687
  %v4719 = vunpack.c.l.b16 %v4688
  %v4720 = vunpack.c.h.b16 %v4688
  %v4721 = vunpack.c.l.b16 %v4689
  %v4722 = vunpack.c.h.b16 %v4689
  %v4723 = vunpack.c.l.b16 %v4690
  %v4724 = vunpack.c.h.b16 %v4690
  %v4725 = vunpack.c.l.b16 %v4691
  %v4726 = vunpack.c.h.b16 %v4691
  %v4727 = vunpack.c.l.b16 %v4692
  %v4728 = vunpack.c.h.b16 %v4692
  %v4729 = vpack.c.b16 %v4707, %v4705
  %v4730 = vpack.c.b16 %v4708, %v4706
  %v4731 = vpack.c.b16 %v4711, %v4709
  %v4732 = vpack.c.b16 %v4712, %v4710
  %v4733 = vpack.c.b16 %v4715, %v4713
  %v4734 = vpack.c.b16 %v4716, %v4714
  %v4735 = vpack.c.b16 %v4719, %v4717
  %v4736 = vpack.c.b16 %v4720, %v4718
  %v4737 = vpack.c.b16 %v4723, %v4721
  %v4738 = vpack.c.b16 %v4724, %v4722
  %v4739 = vpack.c.b16 %v4727, %v4725
  %v4740 = vpack.c.b16 %v4728, %v4726
  %v4754 = vsel %vm3087, %v2994, 0
  %4756 = vmatpush.bf16.msra.mxu0 0
  %4757 = vmatpush.bf16.msra.mxu0 0
  %4758 = vmatpush.bf16.msra.mxu0 %v4739
  %4759 = vmatpush.bf16.msra.mxu0 %v4737
  %4760 = vmatpush.bf16.msra.mxu0 %v4735
  %4761 = vmatpush.bf16.msra.mxu0 %v4733
  %4762 = vmatpush.bf16.msra.mxu0 %v4731
  %4763 = vmatpush.bf16.msra.mxu0 %v4729
  %4764 = vmatmul.bf16.gmra.mxu0 %v4754
  %v4765 = vpop.f32.mrf.mxu0
  %v4766 = vadd.f32 0.0, %v4765
  %v4767 = vpop.f32.mrf.mxu0
  %4768 = vdwg.mxu0
  %4769 = vmatpush.bf16.msra.mxu0 0
  %4770 = vmatpush.bf16.msra.mxu0 0
  %4771 = vmatpush.bf16.msra.mxu0 %v4740
  %4772 = vmatpush.bf16.msra.mxu0 %v4738
  %4773 = vmatpush.bf16.msra.mxu0 %v4736
  %4774 = vmatpush.bf16.msra.mxu0 %v4734
  %4775 = vmatpush.bf16.msra.mxu0 %v4732
  %4776 = vmatpush.bf16.msra.mxu0 %v4730
  %4777 = vmatmul.bf16.gmra.mxu0 %v4754
  %v4778 = vpop.f32.mrf.mxu0
  %v4779 = vadd.f32 0.0, %v4778
  %v4780 = vpop.f32.mrf.mxu0
  %4781 = vdwg.mxu0
  %v4782 = vadd.f32 %v4678, %v4766
  %v4783 = vadd.f32 %v4679, %v4779
  %s4784 = scalar_lea.vmem %s5, 1632
  %v4785 = vld [vmem:[%s4784] sm:$0xff]
  %v4786 = vld [vmem:[%s4784 + $0x8] sm:$0xff]
  %v4787 = vld [vmem:[%s4784 + $0x10] sm:$0xff]
  %v4788 = vld [vmem:[%s4784 + $0x18] sm:$0xff]
  %v4789 = vld [vmem:[%s4784 + $0x20] sm:$0xff]
  %v4790 = vld [vmem:[%s4784 + $0x28] sm:$0xff]
  %v4791 = vld [vmem:[%s4784 + $0x30] sm:$0xff]
  %v4792 = vld [vmem:[%s4784 + $0x38] sm:$0xff]
  %v4793 = vld [vmem:[%s4784 + $0x40] sm:$0xff]
  %v4794 = vld [vmem:[%s4784 + $0x48] sm:$0xff]
  %v4795 = vld [vmem:[%s4784 + $0x50] sm:$0xff]
  %v4796 = vld [vmem:[%s4784 + $0x58] sm:$0xff]
  %v4798 = vunpack.c.l.b16 %v2994
  %v4799 = vpack.c.b16 %v4798, %v4798
  %v4801 = vshrl.u32 %v4799, 16
  %v4815 = vunpack.c.l.b16 %v4785
  %v4816 = vunpack.c.h.b16 %v4785
  %v4817 = vunpack.c.l.b16 %v4786
  %v4818 = vunpack.c.h.b16 %v4786
  %v4819 = vunpack.c.l.b16 %v4787
  %v4820 = vunpack.c.h.b16 %v4787
  %v4821 = vunpack.c.l.b16 %v4788
  %v4822 = vunpack.c.h.b16 %v4788
  %v4823 = vunpack.c.l.b16 %v4789
  %v4824 = vunpack.c.h.b16 %v4789
  %v4825 = vunpack.c.l.b16 %v4790
  %v4826 = vunpack.c.h.b16 %v4790
  %v4827 = vunpack.c.l.b16 %v4791
  %v4828 = vunpack.c.h.b16 %v4791
  %v4829 = vunpack.c.l.b16 %v4792
  %v4830 = vunpack.c.h.b16 %v4792
  %v4831 = vunpack.c.l.b16 %v4793
  %v4832 = vunpack.c.h.b16 %v4793
  %v4833 = vunpack.c.l.b16 %v4794
  %v4834 = vunpack.c.h.b16 %v4794
  %v4835 = vunpack.c.l.b16 %v4795
  %v4836 = vunpack.c.h.b16 %v4795
  %v4837 = vunpack.c.l.b16 %v4796
  %v4838 = vunpack.c.h.b16 %v4796
  %v4839 = vpack.c.b16 %v4817, %v4815
  %v4840 = vpack.c.b16 %v4818, %v4816
  %v4841 = vpack.c.b16 %v4821, %v4819
  %v4842 = vpack.c.b16 %v4822, %v4820
  %v4843 = vpack.c.b16 %v4825, %v4823
  %v4844 = vpack.c.b16 %v4826, %v4824
  %v4845 = vpack.c.b16 %v4829, %v4827
  %v4846 = vpack.c.b16 %v4830, %v4828
  %v4847 = vpack.c.b16 %v4833, %v4831
  %v4848 = vpack.c.b16 %v4834, %v4832
  %v4849 = vpack.c.b16 %v4837, %v4835
  %v4850 = vpack.c.b16 %v4838, %v4836
  %v4864 = vsel %vm3087, %v4801, 0
  %4866 = vmatpush.bf16.msra.mxu0 0
  %4867 = vmatpush.bf16.msra.mxu0 0
  %4868 = vmatpush.bf16.msra.mxu0 %v4849
  %4869 = vmatpush.bf16.msra.mxu0 %v4847
  %4870 = vmatpush.bf16.msra.mxu0 %v4845
  %4871 = vmatpush.bf16.msra.mxu0 %v4843
  %4872 = vmatpush.bf16.msra.mxu0 %v4841
  %4873 = vmatpush.bf16.msra.mxu0 %v4839
  %4874 = vmatmul.bf16.gmra.mxu0 %v4864
  %v4875 = vpop.f32.mrf.mxu0
  %v4876 = vadd.f32 0.0, %v4875
  %v4877 = vpop.f32.mrf.mxu0
  %4878 = vdwg.mxu0
  %4879 = vmatpush.bf16.msra.mxu0 0
  %4880 = vmatpush.bf16.msra.mxu0 0
  %4881 = vmatpush.bf16.msra.mxu0 %v4850
  %4882 = vmatpush.bf16.msra.mxu0 %v4848
  %4883 = vmatpush.bf16.msra.mxu0 %v4846
  %4884 = vmatpush.bf16.msra.mxu0 %v4844
  %4885 = vmatpush.bf16.msra.mxu0 %v4842
  %4886 = vmatpush.bf16.msra.mxu0 %v4840
  %4887 = vmatmul.bf16.gmra.mxu0 %v4864
  %v4888 = vpop.f32.mrf.mxu0
  %v4889 = vadd.f32 0.0, %v4888
  %v4890 = vpop.f32.mrf.mxu0
  %4891 = vdwg.mxu0
  %v4892 = vadd.f32 %v4782, %v4876
  %v4893 = vadd.f32 %v4783, %v4889
  %s4894 = scalar_lea.vmem %s5, 1728
  %v4895 = vld [vmem:[%s4894] sm:$0xff]
  %v4896 = vld [vmem:[%s4894 + $0x8] sm:$0xff]
  %v4897 = vld [vmem:[%s4894 + $0x10] sm:$0xff]
  %v4898 = vld [vmem:[%s4894 + $0x18] sm:$0xff]
  %v4899 = vld [vmem:[%s4894 + $0x20] sm:$0xff]
  %v4900 = vld [vmem:[%s4894 + $0x28] sm:$0xff]
  %v4901 = vld [vmem:[%s4894 + $0x30] sm:$0xff]
  %v4902 = vld [vmem:[%s4894 + $0x38] sm:$0xff]
  %v4903 = vld [vmem:[%s4894 + $0x40] sm:$0xff]
  %v4904 = vld [vmem:[%s4894 + $0x48] sm:$0xff]
  %v4905 = vld [vmem:[%s4894 + $0x50] sm:$0xff]
  %v4906 = vld [vmem:[%s4894 + $0x58] sm:$0xff]
  %v4907 = vrot.slane %v4799, 1
  %v4920 = vunpack.c.l.b16 %v4895
  %v4921 = vunpack.c.h.b16 %v4895
  %v4922 = vunpack.c.l.b16 %v4896
  %v4923 = vunpack.c.h.b16 %v4896
  %v4924 = vunpack.c.l.b16 %v4897
  %v4925 = vunpack.c.h.b16 %v4897
  %v4926 = vunpack.c.l.b16 %v4898
  %v4927 = vunpack.c.h.b16 %v4898
  %v4928 = vunpack.c.l.b16 %v4899
  %v4929 = vunpack.c.h.b16 %v4899
  %v4930 = vunpack.c.l.b16 %v4900
  %v4931 = vunpack.c.h.b16 %v4900
  %v4932 = vunpack.c.l.b16 %v4901
  %v4933 = vunpack.c.h.b16 %v4901
  %v4934 = vunpack.c.l.b16 %v4902
  %v4935 = vunpack.c.h.b16 %v4902
  %v4936 = vunpack.c.l.b16 %v4903
  %v4937 = vunpack.c.h.b16 %v4903
  %v4938 = vunpack.c.l.b16 %v4904
  %v4939 = vunpack.c.h.b16 %v4904
  %v4940 = vunpack.c.l.b16 %v4905
  %v4941 = vunpack.c.h.b16 %v4905
  %v4942 = vunpack.c.l.b16 %v4906
  %v4943 = vunpack.c.h.b16 %v4906
  %v4944 = vpack.c.b16 %v4922, %v4920
  %v4945 = vpack.c.b16 %v4923, %v4921
  %v4946 = vpack.c.b16 %v4926, %v4924
  %v4947 = vpack.c.b16 %v4927, %v4925
  %v4948 = vpack.c.b16 %v4930, %v4928
  %v4949 = vpack.c.b16 %v4931, %v4929
  %v4950 = vpack.c.b16 %v4934, %v4932
  %v4951 = vpack.c.b16 %v4935, %v4933
  %v4952 = vpack.c.b16 %v4938, %v4936
  %v4953 = vpack.c.b16 %v4939, %v4937
  %v4954 = vpack.c.b16 %v4942, %v4940
  %v4955 = vpack.c.b16 %v4943, %v4941
  %v4969 = vsel %vm3087, %v4907, 0
  %4971 = vmatpush.bf16.msra.mxu0 0
  %4972 = vmatpush.bf16.msra.mxu0 0
  %4973 = vmatpush.bf16.msra.mxu0 %v4954
  %4974 = vmatpush.bf16.msra.mxu0 %v4952
  %4975 = vmatpush.bf16.msra.mxu0 %v4950
  %4976 = vmatpush.bf16.msra.mxu0 %v4948
  %4977 = vmatpush.bf16.msra.mxu0 %v4946
  %4978 = vmatpush.bf16.msra.mxu0 %v4944
  %4979 = vmatmul.bf16.gmra.mxu0 %v4969
  %v4980 = vpop.f32.mrf.mxu0
  %v4981 = vadd.f32 0.0, %v4980
  %v4982 = vpop.f32.mrf.mxu0
  %4983 = vdwg.mxu0
  %4984 = vmatpush.bf16.msra.mxu0 0
  %4985 = vmatpush.bf16.msra.mxu0 0
  %4986 = vmatpush.bf16.msra.mxu0 %v4955
  %4987 = vmatpush.bf16.msra.mxu0 %v4953
  %4988 = vmatpush.bf16.msra.mxu0 %v4951
  %4989 = vmatpush.bf16.msra.mxu0 %v4949
  %4990 = vmatpush.bf16.msra.mxu0 %v4947
  %4991 = vmatpush.bf16.msra.mxu0 %v4945
  %4992 = vmatmul.bf16.gmra.mxu0 %v4969
  %v4993 = vpop.f32.mrf.mxu0
  %v4994 = vadd.f32 0.0, %v4993
  %v4995 = vpop.f32.mrf.mxu0
  %4996 = vdwg.mxu0
  %v4997 = vadd.f32 %v4892, %v4981
  %v4998 = vadd.f32 %v4893, %v4994
  %s4999 = scalar_lea.vmem %s5, 1824
  %v5000 = vld [vmem:[%s4999] sm:$0xff]
  %v5001 = vld [vmem:[%s4999 + $0x8] sm:$0xff]
  %v5002 = vld [vmem:[%s4999 + $0x10] sm:$0xff]
  %v5003 = vld [vmem:[%s4999 + $0x18] sm:$0xff]
  %v5004 = vld [vmem:[%s4999 + $0x20] sm:$0xff]
  %v5005 = vld [vmem:[%s4999 + $0x28] sm:$0xff]
  %v5006 = vld [vmem:[%s4999 + $0x30] sm:$0xff]
  %v5007 = vld [vmem:[%s4999 + $0x38] sm:$0xff]
  %v5008 = vld [vmem:[%s4999 + $0x40] sm:$0xff]
  %v5009 = vld [vmem:[%s4999 + $0x48] sm:$0xff]
  %v5010 = vld [vmem:[%s4999 + $0x50] sm:$0xff]
  %v5011 = vld [vmem:[%s4999 + $0x58] sm:$0xff]
  %v5012 = vrot.slane %v4801, 1
  %v5025 = vunpack.c.l.b16 %v5000
  %v5026 = vunpack.c.h.b16 %v5000
  %v5027 = vunpack.c.l.b16 %v5001
  %v5028 = vunpack.c.h.b16 %v5001
  %v5029 = vunpack.c.l.b16 %v5002
  %v5030 = vunpack.c.h.b16 %v5002
  %v5031 = vunpack.c.l.b16 %v5003
  %v5032 = vunpack.c.h.b16 %v5003
  %v5033 = vunpack.c.l.b16 %v5004
  %v5034 = vunpack.c.h.b16 %v5004
  %v5035 = vunpack.c.l.b16 %v5005
  %v5036 = vunpack.c.h.b16 %v5005
  %v5037 = vunpack.c.l.b16 %v5006
  %v5038 = vunpack.c.h.b16 %v5006
  %v5039 = vunpack.c.l.b16 %v5007
  %v5040 = vunpack.c.h.b16 %v5007
  %v5041 = vunpack.c.l.b16 %v5008
  %v5042 = vunpack.c.h.b16 %v5008
  %v5043 = vunpack.c.l.b16 %v5009
  %v5044 = vunpack.c.h.b16 %v5009
  %v5045 = vunpack.c.l.b16 %v5010
  %v5046 = vunpack.c.h.b16 %v5010
  %v5047 = vunpack.c.l.b16 %v5011
  %v5048 = vunpack.c.h.b16 %v5011
  %v5049 = vpack.c.b16 %v5027, %v5025
  %v5050 = vpack.c.b16 %v5028, %v5026
  %v5051 = vpack.c.b16 %v5031, %v5029
  %v5052 = vpack.c.b16 %v5032, %v5030
  %v5053 = vpack.c.b16 %v5035, %v5033
  %v5054 = vpack.c.b16 %v5036, %v5034
  %v5055 = vpack.c.b16 %v5039, %v5037
  %v5056 = vpack.c.b16 %v5040, %v5038
  %v5057 = vpack.c.b16 %v5043, %v5041
  %v5058 = vpack.c.b16 %v5044, %v5042
  %v5059 = vpack.c.b16 %v5047, %v5045
  %v5060 = vpack.c.b16 %v5048, %v5046
  %v5074 = vsel %vm3087, %v5012, 0
  %5076 = vmatpush.bf16.msra.mxu0 0
  %5077 = vmatpush.bf16.msra.mxu0 0
  %5078 = vmatpush.bf16.msra.mxu0 %v5059
  %5079 = vmatpush.bf16.msra.mxu0 %v5057
  %5080 = vmatpush.bf16.msra.mxu0 %v5055
  %5081 = vmatpush.bf16.msra.mxu0 %v5053
  %5082 = vmatpush.bf16.msra.mxu0 %v5051
  %5083 = vmatpush.bf16.msra.mxu0 %v5049
  %5084 = vmatmul.bf16.gmra.mxu0 %v5074
  %v5085 = vpop.f32.mrf.mxu0
  %v5086 = vadd.f32 0.0, %v5085
  %v5087 = vpop.f32.mrf.mxu0
  %5088 = vdwg.mxu0
  %5089 = vmatpush.bf16.msra.mxu0 0
  %5090 = vmatpush.bf16.msra.mxu0 0
  %5091 = vmatpush.bf16.msra.mxu0 %v5060
  %5092 = vmatpush.bf16.msra.mxu0 %v5058
  %5093 = vmatpush.bf16.msra.mxu0 %v5056
  %5094 = vmatpush.bf16.msra.mxu0 %v5054
  %5095 = vmatpush.bf16.msra.mxu0 %v5052
  %5096 = vmatpush.bf16.msra.mxu0 %v5050
  %5097 = vmatmul.bf16.gmra.mxu0 %v5074
  %v5098 = vpop.f32.mrf.mxu0
  %v5099 = vadd.f32 0.0, %v5098
  %v5100 = vpop.f32.mrf.mxu0
  %5101 = vdwg.mxu0
  %v5102 = vadd.f32 %v4997, %v5086
  %v5103 = vadd.f32 %v4998, %v5099
  %s5104 = scalar_lea.vmem %s5, 1920
  %v5105 = vld [vmem:[%s5104] sm:$0xff]
  %v5106 = vld [vmem:[%s5104 + $0x8] sm:$0xff]
  %v5107 = vld [vmem:[%s5104 + $0x10] sm:$0xff]
  %v5108 = vld [vmem:[%s5104 + $0x18] sm:$0xff]
  %v5109 = vld [vmem:[%s5104 + $0x20] sm:$0xff]
  %v5110 = vld [vmem:[%s5104 + $0x28] sm:$0xff]
  %v5111 = vld [vmem:[%s5104 + $0x30] sm:$0xff]
  %v5112 = vld [vmem:[%s5104 + $0x38] sm:$0xff]
  %v5113 = vld [vmem:[%s5104 + $0x40] sm:$0xff]
  %v5114 = vld [vmem:[%s5104 + $0x48] sm:$0xff]
  %v5115 = vld [vmem:[%s5104 + $0x50] sm:$0xff]
  %v5116 = vld [vmem:[%s5104 + $0x58] sm:$0xff]
  %v5117 = vrot.slane %v4799, 2
  %v5130 = vunpack.c.l.b16 %v5105
  %v5131 = vunpack.c.h.b16 %v5105
  %v5132 = vunpack.c.l.b16 %v5106
  %v5133 = vunpack.c.h.b16 %v5106
  %v5134 = vunpack.c.l.b16 %v5107
  %v5135 = vunpack.c.h.b16 %v5107
  %v5136 = vunpack.c.l.b16 %v5108
  %v5137 = vunpack.c.h.b16 %v5108
  %v5138 = vunpack.c.l.b16 %v5109
  %v5139 = vunpack.c.h.b16 %v5109
  %v5140 = vunpack.c.l.b16 %v5110
  %v5141 = vunpack.c.h.b16 %v5110
  %v5142 = vunpack.c.l.b16 %v5111
  %v5143 = vunpack.c.h.b16 %v5111
  %v5144 = vunpack.c.l.b16 %v5112
  %v5145 = vunpack.c.h.b16 %v5112
  %v5146 = vunpack.c.l.b16 %v5113
  %v5147 = vunpack.c.h.b16 %v5113
  %v5148 = vunpack.c.l.b16 %v5114
  %v5149 = vunpack.c.h.b16 %v5114
  %v5150 = vunpack.c.l.b16 %v5115
  %v5151 = vunpack.c.h.b16 %v5115
  %v5152 = vunpack.c.l.b16 %v5116
  %v5153 = vunpack.c.h.b16 %v5116
  %v5154 = vpack.c.b16 %v5132, %v5130
  %v5155 = vpack.c.b16 %v5133, %v5131
  %v5156 = vpack.c.b16 %v5136, %v5134
  %v5157 = vpack.c.b16 %v5137, %v5135
  %v5158 = vpack.c.b16 %v5140, %v5138
  %v5159 = vpack.c.b16 %v5141, %v5139
  %v5160 = vpack.c.b16 %v5144, %v5142
  %v5161 = vpack.c.b16 %v5145, %v5143
  %v5162 = vpack.c.b16 %v5148, %v5146
  %v5163 = vpack.c.b16 %v5149, %v5147
  %v5164 = vpack.c.b16 %v5152, %v5150
  %v5165 = vpack.c.b16 %v5153, %v5151
  %v5179 = vsel %vm3087, %v5117, 0
  %5181 = vmatpush.bf16.msra.mxu0 0
  %5182 = vmatpush.bf16.msra.mxu0 0
  %5183 = vmatpush.bf16.msra.mxu0 %v5164
  %5184 = vmatpush.bf16.msra.mxu0 %v5162
  %5185 = vmatpush.bf16.msra.mxu0 %v5160
  %5186 = vmatpush.bf16.msra.mxu0 %v5158
  %5187 = vmatpush.bf16.msra.mxu0 %v5156
  %5188 = vmatpush.bf16.msra.mxu0 %v5154
  %5189 = vmatmul.bf16.gmra.mxu0 %v5179
  %v5190 = vpop.f32.mrf.mxu0
  %v5191 = vadd.f32 0.0, %v5190
  %v5192 = vpop.f32.mrf.mxu0
  %5193 = vdwg.mxu0
  %5194 = vmatpush.bf16.msra.mxu0 0
  %5195 = vmatpush.bf16.msra.mxu0 0
  %5196 = vmatpush.bf16.msra.mxu0 %v5165
  %5197 = vmatpush.bf16.msra.mxu0 %v5163
  %5198 = vmatpush.bf16.msra.mxu0 %v5161
  %5199 = vmatpush.bf16.msra.mxu0 %v5159
  %5200 = vmatpush.bf16.msra.mxu0 %v5157
  %5201 = vmatpush.bf16.msra.mxu0 %v5155
  %5202 = vmatmul.bf16.gmra.mxu0 %v5179
  %v5203 = vpop.f32.mrf.mxu0
  %v5204 = vadd.f32 0.0, %v5203
  %v5205 = vpop.f32.mrf.mxu0
  %5206 = vdwg.mxu0
  %v5207 = vadd.f32 %v5102, %v5191
  %v5208 = vadd.f32 %v5103, %v5204
  %s5209 = scalar_lea.vmem %s5, 2016
  %v5210 = vld [vmem:[%s5209] sm:$0xff]
  %v5211 = vld [vmem:[%s5209 + $0x8] sm:$0xff]
  %v5212 = vld [vmem:[%s5209 + $0x10] sm:$0xff]
  %v5213 = vld [vmem:[%s5209 + $0x18] sm:$0xff]
  %v5214 = vld [vmem:[%s5209 + $0x20] sm:$0xff]
  %v5215 = vld [vmem:[%s5209 + $0x28] sm:$0xff]
  %v5216 = vld [vmem:[%s5209 + $0x30] sm:$0xff]
  %v5217 = vld [vmem:[%s5209 + $0x38] sm:$0xff]
  %v5218 = vld [vmem:[%s5209 + $0x40] sm:$0xff]
  %v5219 = vld [vmem:[%s5209 + $0x48] sm:$0xff]
  %v5220 = vld [vmem:[%s5209 + $0x50] sm:$0xff]
  %v5221 = vld [vmem:[%s5209 + $0x58] sm:$0xff]
  %v5222 = vrot.slane %v4801, 2
  %v5235 = vunpack.c.l.b16 %v5210
  %v5236 = vunpack.c.h.b16 %v5210
  %v5237 = vunpack.c.l.b16 %v5211
  %v5238 = vunpack.c.h.b16 %v5211
  %v5239 = vunpack.c.l.b16 %v5212
  %v5240 = vunpack.c.h.b16 %v5212
  %v5241 = vunpack.c.l.b16 %v5213
  %v5242 = vunpack.c.h.b16 %v5213
  %v5243 = vunpack.c.l.b16 %v5214
  %v5244 = vunpack.c.h.b16 %v5214
  %v5245 = vunpack.c.l.b16 %v5215
  %v5246 = vunpack.c.h.b16 %v5215
  %v5247 = vunpack.c.l.b16 %v5216
  %v5248 = vunpack.c.h.b16 %v5216
  %v5249 = vunpack.c.l.b16 %v5217
  %v5250 = vunpack.c.h.b16 %v5217
  %v5251 = vunpack.c.l.b16 %v5218
  %v5252 = vunpack.c.h.b16 %v5218
  %v5253 = vunpack.c.l.b16 %v5219
  %v5254 = vunpack.c.h.b16 %v5219
  %v5255 = vunpack.c.l.b16 %v5220
  %v5256 = vunpack.c.h.b16 %v5220
  %v5257 = vunpack.c.l.b16 %v5221
  %v5258 = vunpack.c.h.b16 %v5221
  %v5259 = vpack.c.b16 %v5237, %v5235
  %v5260 = vpack.c.b16 %v5238, %v5236
  %v5261 = vpack.c.b16 %v5241, %v5239
  %v5262 = vpack.c.b16 %v5242, %v5240
  %v5263 = vpack.c.b16 %v5245, %v5243
  %v5264 = vpack.c.b16 %v5246, %v5244
  %v5265 = vpack.c.b16 %v5249, %v5247
  %v5266 = vpack.c.b16 %v5250, %v5248
  %v5267 = vpack.c.b16 %v5253, %v5251
  %v5268 = vpack.c.b16 %v5254, %v5252
  %v5269 = vpack.c.b16 %v5257, %v5255
  %v5270 = vpack.c.b16 %v5258, %v5256
  %v5284 = vsel %vm3087, %v5222, 0
  %5286 = vmatpush.bf16.msra.mxu0 0
  %5287 = vmatpush.bf16.msra.mxu0 0
  %5288 = vmatpush.bf16.msra.mxu0 %v5269
  %5289 = vmatpush.bf16.msra.mxu0 %v5267
  %5290 = vmatpush.bf16.msra.mxu0 %v5265
  %5291 = vmatpush.bf16.msra.mxu0 %v5263
  %5292 = vmatpush.bf16.msra.mxu0 %v5261
  %5293 = vmatpush.bf16.msra.mxu0 %v5259
  %5294 = vmatmul.bf16.gmra.mxu0 %v5284
  %v5295 = vpop.f32.mrf.mxu0
  %v5296 = vadd.f32 0.0, %v5295
  %v5297 = vpop.f32.mrf.mxu0
  %5298 = vdwg.mxu0
  %5299 = vmatpush.bf16.msra.mxu0 0
  %5300 = vmatpush.bf16.msra.mxu0 0
  %5301 = vmatpush.bf16.msra.mxu0 %v5270
  %5302 = vmatpush.bf16.msra.mxu0 %v5268
  %5303 = vmatpush.bf16.msra.mxu0 %v5266
  %5304 = vmatpush.bf16.msra.mxu0 %v5264
  %5305 = vmatpush.bf16.msra.mxu0 %v5262
  %5306 = vmatpush.bf16.msra.mxu0 %v5260
  %5307 = vmatmul.bf16.gmra.mxu0 %v5284
  %v5308 = vpop.f32.mrf.mxu0
  %v5309 = vadd.f32 0.0, %v5308
  %v5310 = vpop.f32.mrf.mxu0
  %5311 = vdwg.mxu0
  %v5312 = vadd.f32 %v5207, %v5296
  %v5313 = vadd.f32 %v5208, %v5309
  %s5314 = scalar_lea.vmem %s5, 2112
  %v5315 = vld [vmem:[%s5314] sm:$0xff]
  %v5316 = vld [vmem:[%s5314 + $0x8] sm:$0xff]
  %v5317 = vld [vmem:[%s5314 + $0x10] sm:$0xff]
  %v5318 = vld [vmem:[%s5314 + $0x18] sm:$0xff]
  %v5319 = vld [vmem:[%s5314 + $0x20] sm:$0xff]
  %v5320 = vld [vmem:[%s5314 + $0x28] sm:$0xff]
  %v5321 = vld [vmem:[%s5314 + $0x30] sm:$0xff]
  %v5322 = vld [vmem:[%s5314 + $0x38] sm:$0xff]
  %v5323 = vld [vmem:[%s5314 + $0x40] sm:$0xff]
  %v5324 = vld [vmem:[%s5314 + $0x48] sm:$0xff]
  %v5325 = vld [vmem:[%s5314 + $0x50] sm:$0xff]
  %v5326 = vld [vmem:[%s5314 + $0x58] sm:$0xff]
  %v5327 = vrot.slane %v4799, 3
  %v5340 = vunpack.c.l.b16 %v5315
  %v5341 = vunpack.c.h.b16 %v5315
  %v5342 = vunpack.c.l.b16 %v5316
  %v5343 = vunpack.c.h.b16 %v5316
  %v5344 = vunpack.c.l.b16 %v5317
  %v5345 = vunpack.c.h.b16 %v5317
  %v5346 = vunpack.c.l.b16 %v5318
  %v5347 = vunpack.c.h.b16 %v5318
  %v5348 = vunpack.c.l.b16 %v5319
  %v5349 = vunpack.c.h.b16 %v5319
  %v5350 = vunpack.c.l.b16 %v5320
  %v5351 = vunpack.c.h.b16 %v5320
  %v5352 = vunpack.c.l.b16 %v5321
  %v5353 = vunpack.c.h.b16 %v5321
  %v5354 = vunpack.c.l.b16 %v5322
  %v5355 = vunpack.c.h.b16 %v5322
  %v5356 = vunpack.c.l.b16 %v5323
  %v5357 = vunpack.c.h.b16 %v5323
  %v5358 = vunpack.c.l.b16 %v5324
  %v5359 = vunpack.c.h.b16 %v5324
  %v5360 = vunpack.c.l.b16 %v5325
  %v5361 = vunpack.c.h.b16 %v5325
  %v5362 = vunpack.c.l.b16 %v5326
  %v5363 = vunpack.c.h.b16 %v5326
  %v5364 = vpack.c.b16 %v5342, %v5340
  %v5365 = vpack.c.b16 %v5343, %v5341
  %v5366 = vpack.c.b16 %v5346, %v5344
  %v5367 = vpack.c.b16 %v5347, %v5345
  %v5368 = vpack.c.b16 %v5350, %v5348
  %v5369 = vpack.c.b16 %v5351, %v5349
  %v5370 = vpack.c.b16 %v5354, %v5352
  %v5371 = vpack.c.b16 %v5355, %v5353
  %v5372 = vpack.c.b16 %v5358, %v5356
  %v5373 = vpack.c.b16 %v5359, %v5357
  %v5374 = vpack.c.b16 %v5362, %v5360
  %v5375 = vpack.c.b16 %v5363, %v5361
  %v5389 = vsel %vm3087, %v5327, 0
  %5391 = vmatpush.bf16.msra.mxu0 0
  %5392 = vmatpush.bf16.msra.mxu0 0
  %5393 = vmatpush.bf16.msra.mxu0 %v5374
  %5394 = vmatpush.bf16.msra.mxu0 %v5372
  %5395 = vmatpush.bf16.msra.mxu0 %v5370
  %5396 = vmatpush.bf16.msra.mxu0 %v5368
  %5397 = vmatpush.bf16.msra.mxu0 %v5366
  %5398 = vmatpush.bf16.msra.mxu0 %v5364
  %5399 = vmatmul.bf16.gmra.mxu0 %v5389
  %v5400 = vpop.f32.mrf.mxu0
  %v5401 = vadd.f32 0.0, %v5400
  %v5402 = vpop.f32.mrf.mxu0
  %5403 = vdwg.mxu0
  %5404 = vmatpush.bf16.msra.mxu0 0
  %5405 = vmatpush.bf16.msra.mxu0 0
  %5406 = vmatpush.bf16.msra.mxu0 %v5375
  %5407 = vmatpush.bf16.msra.mxu0 %v5373
  %5408 = vmatpush.bf16.msra.mxu0 %v5371
  %5409 = vmatpush.bf16.msra.mxu0 %v5369
  %5410 = vmatpush.bf16.msra.mxu0 %v5367
  %5411 = vmatpush.bf16.msra.mxu0 %v5365
  %5412 = vmatmul.bf16.gmra.mxu0 %v5389
  %v5413 = vpop.f32.mrf.mxu0
  %v5414 = vadd.f32 0.0, %v5413
  %v5415 = vpop.f32.mrf.mxu0
  %5416 = vdwg.mxu0
  %v5417 = vadd.f32 %v5312, %v5401
  %v5418 = vadd.f32 %v5313, %v5414
  %s5419 = scalar_lea.vmem %s5, 2208
  %v5420 = vld [vmem:[%s5419] sm:$0xff]
  %v5421 = vld [vmem:[%s5419 + $0x8] sm:$0xff]
  %v5422 = vld [vmem:[%s5419 + $0x10] sm:$0xff]
  %v5423 = vld [vmem:[%s5419 + $0x18] sm:$0xff]
  %v5424 = vld [vmem:[%s5419 + $0x20] sm:$0xff]
  %v5425 = vld [vmem:[%s5419 + $0x28] sm:$0xff]
  %v5426 = vld [vmem:[%s5419 + $0x30] sm:$0xff]
  %v5427 = vld [vmem:[%s5419 + $0x38] sm:$0xff]
  %v5428 = vld [vmem:[%s5419 + $0x40] sm:$0xff]
  %v5429 = vld [vmem:[%s5419 + $0x48] sm:$0xff]
  %v5430 = vld [vmem:[%s5419 + $0x50] sm:$0xff]
  %v5431 = vld [vmem:[%s5419 + $0x58] sm:$0xff]
  %v5432 = vrot.slane %v4801, 3
  %v5445 = vunpack.c.l.b16 %v5420
  %v5446 = vunpack.c.h.b16 %v5420
  %v5447 = vunpack.c.l.b16 %v5421
  %v5448 = vunpack.c.h.b16 %v5421
  %v5449 = vunpack.c.l.b16 %v5422
  %v5450 = vunpack.c.h.b16 %v5422
  %v5451 = vunpack.c.l.b16 %v5423
  %v5452 = vunpack.c.h.b16 %v5423
  %v5453 = vunpack.c.l.b16 %v5424
  %v5454 = vunpack.c.h.b16 %v5424
  %v5455 = vunpack.c.l.b16 %v5425
  %v5456 = vunpack.c.h.b16 %v5425
  %v5457 = vunpack.c.l.b16 %v5426
  %v5458 = vunpack.c.h.b16 %v5426
  %v5459 = vunpack.c.l.b16 %v5427
  %v5460 = vunpack.c.h.b16 %v5427
  %v5461 = vunpack.c.l.b16 %v5428
  %v5462 = vunpack.c.h.b16 %v5428
  %v5463 = vunpack.c.l.b16 %v5429
  %v5464 = vunpack.c.h.b16 %v5429
  %v5465 = vunpack.c.l.b16 %v5430
  %v5466 = vunpack.c.h.b16 %v5430
  %v5467 = vunpack.c.l.b16 %v5431
  %v5468 = vunpack.c.h.b16 %v5431
  %v5469 = vpack.c.b16 %v5447, %v5445
  %v5470 = vpack.c.b16 %v5448, %v5446
  %v5471 = vpack.c.b16 %v5451, %v5449
  %v5472 = vpack.c.b16 %v5452, %v5450
  %v5473 = vpack.c.b16 %v5455, %v5453
  %v5474 = vpack.c.b16 %v5456, %v5454
  %v5475 = vpack.c.b16 %v5459, %v5457
  %v5476 = vpack.c.b16 %v5460, %v5458
  %v5477 = vpack.c.b16 %v5463, %v5461
  %v5478 = vpack.c.b16 %v5464, %v5462
  %v5479 = vpack.c.b16 %v5467, %v5465
  %v5480 = vpack.c.b16 %v5468, %v5466
  %v5494 = vsel %vm3087, %v5432, 0
  %5496 = vmatpush.bf16.msra.mxu0 0
  %5497 = vmatpush.bf16.msra.mxu0 0
  %5498 = vmatpush.bf16.msra.mxu0 %v5479
  %5499 = vmatpush.bf16.msra.mxu0 %v5477
  %5500 = vmatpush.bf16.msra.mxu0 %v5475
  %5501 = vmatpush.bf16.msra.mxu0 %v5473
  %5502 = vmatpush.bf16.msra.mxu0 %v5471
  %5503 = vmatpush.bf16.msra.mxu0 %v5469
  %5504 = vmatmul.bf16.gmra.mxu0 %v5494
  %v5505 = vpop.f32.mrf.mxu0
  %v5506 = vadd.f32 0.0, %v5505
  %v5507 = vpop.f32.mrf.mxu0
  %5508 = vdwg.mxu0
  %5509 = vmatpush.bf16.msra.mxu0 0
  %5510 = vmatpush.bf16.msra.mxu0 0
  %5511 = vmatpush.bf16.msra.mxu0 %v5480
  %5512 = vmatpush.bf16.msra.mxu0 %v5478
  %5513 = vmatpush.bf16.msra.mxu0 %v5476
  %5514 = vmatpush.bf16.msra.mxu0 %v5474
  %5515 = vmatpush.bf16.msra.mxu0 %v5472
  %5516 = vmatpush.bf16.msra.mxu0 %v5470
  %5517 = vmatmul.bf16.gmra.mxu0 %v5494
  %v5518 = vpop.f32.mrf.mxu0
  %v5519 = vadd.f32 0.0, %v5518
  %v5520 = vpop.f32.mrf.mxu0
  %5521 = vdwg.mxu0
  %v5522 = vadd.f32 %v5417, %v5506
  %v5523 = vadd.f32 %v5418, %v5519
  %s5524 = scalar_lea.vmem %s5, 2304
  %v5525 = vld [vmem:[%s5524] sm:$0xff]
  %v5526 = vld [vmem:[%s5524 + $0x8] sm:$0xff]
  %v5527 = vld [vmem:[%s5524 + $0x10] sm:$0xff]
  %v5528 = vld [vmem:[%s5524 + $0x18] sm:$0xff]
  %v5529 = vld [vmem:[%s5524 + $0x20] sm:$0xff]
  %v5530 = vld [vmem:[%s5524 + $0x28] sm:$0xff]
  %v5531 = vld [vmem:[%s5524 + $0x30] sm:$0xff]
  %v5532 = vld [vmem:[%s5524 + $0x38] sm:$0xff]
  %v5533 = vld [vmem:[%s5524 + $0x40] sm:$0xff]
  %v5534 = vld [vmem:[%s5524 + $0x48] sm:$0xff]
  %v5535 = vld [vmem:[%s5524 + $0x50] sm:$0xff]
  %v5536 = vld [vmem:[%s5524 + $0x58] sm:$0xff]
  %v5549 = vunpack.c.l.b16 %v5525
  %v5550 = vunpack.c.h.b16 %v5525
  %v5551 = vunpack.c.l.b16 %v5526
  %v5552 = vunpack.c.h.b16 %v5526
  %v5553 = vunpack.c.l.b16 %v5527
  %v5554 = vunpack.c.h.b16 %v5527
  %v5555 = vunpack.c.l.b16 %v5528
  %v5556 = vunpack.c.h.b16 %v5528
  %v5557 = vunpack.c.l.b16 %v5529
  %v5558 = vunpack.c.h.b16 %v5529
  %v5559 = vunpack.c.l.b16 %v5530
  %v5560 = vunpack.c.h.b16 %v5530
  %v5561 = vunpack.c.l.b16 %v5531
  %v5562 = vunpack.c.h.b16 %v5531
  %v5563 = vunpack.c.l.b16 %v5532
  %v5564 = vunpack.c.h.b16 %v5532
  %v5565 = vunpack.c.l.b16 %v5533
  %v5566 = vunpack.c.h.b16 %v5533
  %v5567 = vunpack.c.l.b16 %v5534
  %v5568 = vunpack.c.h.b16 %v5534
  %v5569 = vunpack.c.l.b16 %v5535
  %v5570 = vunpack.c.h.b16 %v5535
  %v5571 = vunpack.c.l.b16 %v5536
  %v5572 = vunpack.c.h.b16 %v5536
  %v5573 = vpack.c.b16 %v5551, %v5549
  %v5574 = vpack.c.b16 %v5552, %v5550
  %v5575 = vpack.c.b16 %v5555, %v5553
  %v5576 = vpack.c.b16 %v5556, %v5554
  %v5577 = vpack.c.b16 %v5559, %v5557
  %v5578 = vpack.c.b16 %v5560, %v5558
  %v5579 = vpack.c.b16 %v5563, %v5561
  %v5580 = vpack.c.b16 %v5564, %v5562
  %v5581 = vpack.c.b16 %v5567, %v5565
  %v5582 = vpack.c.b16 %v5568, %v5566
  %v5583 = vpack.c.b16 %v5571, %v5569
  %v5584 = vpack.c.b16 %v5572, %v5570
  %v5598 = vsel %vm3087, %v2995, 0
  %5600 = vmatpush.bf16.msra.mxu0 0
  %5601 = vmatpush.bf16.msra.mxu0 0
  %5602 = vmatpush.bf16.msra.mxu0 %v5583
  %5603 = vmatpush.bf16.msra.mxu0 %v5581
  %5604 = vmatpush.bf16.msra.mxu0 %v5579
  %5605 = vmatpush.bf16.msra.mxu0 %v5577
  %5606 = vmatpush.bf16.msra.mxu0 %v5575
  %5607 = vmatpush.bf16.msra.mxu0 %v5573
  %5608 = vmatmul.bf16.gmra.mxu0 %v5598
  %v5609 = vpop.f32.mrf.mxu0
  %v5610 = vadd.f32 0.0, %v5609
  %v5611 = vpop.f32.mrf.mxu0
  %5612 = vdwg.mxu0
  %5613 = vmatpush.bf16.msra.mxu0 0
  %5614 = vmatpush.bf16.msra.mxu0 0
  %5615 = vmatpush.bf16.msra.mxu0 %v5584
  %5616 = vmatpush.bf16.msra.mxu0 %v5582
  %5617 = vmatpush.bf16.msra.mxu0 %v5580
  %5618 = vmatpush.bf16.msra.mxu0 %v5578
  %5619 = vmatpush.bf16.msra.mxu0 %v5576
  %5620 = vmatpush.bf16.msra.mxu0 %v5574
  %5621 = vmatmul.bf16.gmra.mxu0 %v5598
  %v5622 = vpop.f32.mrf.mxu0
  %v5623 = vadd.f32 0.0, %v5622
  %v5624 = vpop.f32.mrf.mxu0
  %5625 = vdwg.mxu0
  %v5626 = vadd.f32 %v5522, %v5610
  %v5627 = vadd.f32 %v5523, %v5623
  %s5628 = scalar_lea.vmem %s5, 2400
  %v5629 = vld [vmem:[%s5628] sm:$0xff]
  %v5630 = vld [vmem:[%s5628 + $0x8] sm:$0xff]
  %v5631 = vld [vmem:[%s5628 + $0x10] sm:$0xff]
  %v5632 = vld [vmem:[%s5628 + $0x18] sm:$0xff]
  %v5633 = vld [vmem:[%s5628 + $0x20] sm:$0xff]
  %v5634 = vld [vmem:[%s5628 + $0x28] sm:$0xff]
  %v5635 = vld [vmem:[%s5628 + $0x30] sm:$0xff]
  %v5636 = vld [vmem:[%s5628 + $0x38] sm:$0xff]
  %v5637 = vld [vmem:[%s5628 + $0x40] sm:$0xff]
  %v5638 = vld [vmem:[%s5628 + $0x48] sm:$0xff]
  %v5639 = vld [vmem:[%s5628 + $0x50] sm:$0xff]
  %v5640 = vld [vmem:[%s5628 + $0x58] sm:$0xff]
  %v5642 = vunpack.c.l.b16 %v2995
  %v5643 = vpack.c.b16 %v5642, %v5642
  %v5645 = vshrl.u32 %v5643, 16
  %v5659 = vunpack.c.l.b16 %v5629
  %v5660 = vunpack.c.h.b16 %v5629
  %v5661 = vunpack.c.l.b16 %v5630
  %v5662 = vunpack.c.h.b16 %v5630
  %v5663 = vunpack.c.l.b16 %v5631
  %v5664 = vunpack.c.h.b16 %v5631
  %v5665 = vunpack.c.l.b16 %v5632
  %v5666 = vunpack.c.h.b16 %v5632
  %v5667 = vunpack.c.l.b16 %v5633
  %v5668 = vunpack.c.h.b16 %v5633
  %v5669 = vunpack.c.l.b16 %v5634
  %v5670 = vunpack.c.h.b16 %v5634
  %v5671 = vunpack.c.l.b16 %v5635
  %v5672 = vunpack.c.h.b16 %v5635
  %v5673 = vunpack.c.l.b16 %v5636
  %v5674 = vunpack.c.h.b16 %v5636
  %v5675 = vunpack.c.l.b16 %v5637
  %v5676 = vunpack.c.h.b16 %v5637
  %v5677 = vunpack.c.l.b16 %v5638
  %v5678 = vunpack.c.h.b16 %v5638
  %v5679 = vunpack.c.l.b16 %v5639
  %v5680 = vunpack.c.h.b16 %v5639
  %v5681 = vunpack.c.l.b16 %v5640
  %v5682 = vunpack.c.h.b16 %v5640
  %v5683 = vpack.c.b16 %v5661, %v5659
  %v5684 = vpack.c.b16 %v5662, %v5660
  %v5685 = vpack.c.b16 %v5665, %v5663
  %v5686 = vpack.c.b16 %v5666, %v5664
  %v5687 = vpack.c.b16 %v5669, %v5667
  %v5688 = vpack.c.b16 %v5670, %v5668
  %v5689 = vpack.c.b16 %v5673, %v5671
  %v5690 = vpack.c.b16 %v5674, %v5672
  %v5691 = vpack.c.b16 %v5677, %v5675
  %v5692 = vpack.c.b16 %v5678, %v5676
  %v5693 = vpack.c.b16 %v5681, %v5679
  %v5694 = vpack.c.b16 %v5682, %v5680
  %v5708 = vsel %vm3087, %v5645, 0
  %5710 = vmatpush.bf16.msra.mxu0 0
  %5711 = vmatpush.bf16.msra.mxu0 0
  %5712 = vmatpush.bf16.msra.mxu0 %v5693
  %5713 = vmatpush.bf16.msra.mxu0 %v5691
  %5714 = vmatpush.bf16.msra.mxu0 %v5689
  %5715 = vmatpush.bf16.msra.mxu0 %v5687
  %5716 = vmatpush.bf16.msra.mxu0 %v5685
  %5717 = vmatpush.bf16.msra.mxu0 %v5683
  %5718 = vmatmul.bf16.gmra.mxu0 %v5708
  %v5719 = vpop.f32.mrf.mxu0
  %v5720 = vadd.f32 0.0, %v5719
  %v5721 = vpop.f32.mrf.mxu0
  %5722 = vdwg.mxu0
  %5723 = vmatpush.bf16.msra.mxu0 0
  %5724 = vmatpush.bf16.msra.mxu0 0
  %5725 = vmatpush.bf16.msra.mxu0 %v5694
  %5726 = vmatpush.bf16.msra.mxu0 %v5692
  %5727 = vmatpush.bf16.msra.mxu0 %v5690
  %5728 = vmatpush.bf16.msra.mxu0 %v5688
  %5729 = vmatpush.bf16.msra.mxu0 %v5686
  %5730 = vmatpush.bf16.msra.mxu0 %v5684
  %5731 = vmatmul.bf16.gmra.mxu0 %v5708
  %v5732 = vpop.f32.mrf.mxu0
  %v5733 = vadd.f32 0.0, %v5732
  %v5734 = vpop.f32.mrf.mxu0
  %5735 = vdwg.mxu0
  %v5736 = vadd.f32 %v5626, %v5720
  %v5737 = vadd.f32 %v5627, %v5733
  %s5738 = scalar_lea.vmem %s5, 2496
  %v5739 = vld [vmem:[%s5738] sm:$0xff]
  %v5740 = vld [vmem:[%s5738 + $0x8] sm:$0xff]
  %v5741 = vld [vmem:[%s5738 + $0x10] sm:$0xff]
  %v5742 = vld [vmem:[%s5738 + $0x18] sm:$0xff]
  %v5743 = vld [vmem:[%s5738 + $0x20] sm:$0xff]
  %v5744 = vld [vmem:[%s5738 + $0x28] sm:$0xff]
  %v5745 = vld [vmem:[%s5738 + $0x30] sm:$0xff]
  %v5746 = vld [vmem:[%s5738 + $0x38] sm:$0xff]
  %v5747 = vld [vmem:[%s5738 + $0x40] sm:$0xff]
  %v5748 = vld [vmem:[%s5738 + $0x48] sm:$0xff]
  %v5749 = vld [vmem:[%s5738 + $0x50] sm:$0xff]
  %v5750 = vld [vmem:[%s5738 + $0x58] sm:$0xff]
  %v5751 = vrot.slane %v5643, 1
  %v5764 = vunpack.c.l.b16 %v5739
  %v5765 = vunpack.c.h.b16 %v5739
  %v5766 = vunpack.c.l.b16 %v5740
  %v5767 = vunpack.c.h.b16 %v5740
  %v5768 = vunpack.c.l.b16 %v5741
  %v5769 = vunpack.c.h.b16 %v5741
  %v5770 = vunpack.c.l.b16 %v5742
  %v5771 = vunpack.c.h.b16 %v5742
  %v5772 = vunpack.c.l.b16 %v5743
  %v5773 = vunpack.c.h.b16 %v5743
  %v5774 = vunpack.c.l.b16 %v5744
  %v5775 = vunpack.c.h.b16 %v5744
  %v5776 = vunpack.c.l.b16 %v5745
  %v5777 = vunpack.c.h.b16 %v5745
  %v5778 = vunpack.c.l.b16 %v5746
  %v5779 = vunpack.c.h.b16 %v5746
  %v5780 = vunpack.c.l.b16 %v5747
  %v5781 = vunpack.c.h.b16 %v5747
  %v5782 = vunpack.c.l.b16 %v5748
  %v5783 = vunpack.c.h.b16 %v5748
  %v5784 = vunpack.c.l.b16 %v5749
  %v5785 = vunpack.c.h.b16 %v5749
  %v5786 = vunpack.c.l.b16 %v5750
  %v5787 = vunpack.c.h.b16 %v5750
  %v5788 = vpack.c.b16 %v5766, %v5764
  %v5789 = vpack.c.b16 %v5767, %v5765
  %v5790 = vpack.c.b16 %v5770, %v5768
  %v5791 = vpack.c.b16 %v5771, %v5769
  %v5792 = vpack.c.b16 %v5774, %v5772
  %v5793 = vpack.c.b16 %v5775, %v5773
  %v5794 = vpack.c.b16 %v5778, %v5776
  %v5795 = vpack.c.b16 %v5779, %v5777
  %v5796 = vpack.c.b16 %v5782, %v5780
  %v5797 = vpack.c.b16 %v5783, %v5781
  %v5798 = vpack.c.b16 %v5786, %v5784
  %v5799 = vpack.c.b16 %v5787, %v5785
  %v5813 = vsel %vm3087, %v5751, 0
  %5815 = vmatpush.bf16.msra.mxu0 0
  %5816 = vmatpush.bf16.msra.mxu0 0
  %5817 = vmatpush.bf16.msra.mxu0 %v5798
  %5818 = vmatpush.bf16.msra.mxu0 %v5796
  %5819 = vmatpush.bf16.msra.mxu0 %v5794
  %5820 = vmatpush.bf16.msra.mxu0 %v5792
  %5821 = vmatpush.bf16.msra.mxu0 %v5790
  %5822 = vmatpush.bf16.msra.mxu0 %v5788
  %5823 = vmatmul.bf16.gmra.mxu0 %v5813
  %v5824 = vpop.f32.mrf.mxu0
  %v5825 = vadd.f32 0.0, %v5824
  %v5826 = vpop.f32.mrf.mxu0
  %5827 = vdwg.mxu0
  %5828 = vmatpush.bf16.msra.mxu0 0
  %5829 = vmatpush.bf16.msra.mxu0 0
  %5830 = vmatpush.bf16.msra.mxu0 %v5799
  %5831 = vmatpush.bf16.msra.mxu0 %v5797
  %5832 = vmatpush.bf16.msra.mxu0 %v5795
  %5833 = vmatpush.bf16.msra.mxu0 %v5793
  %5834 = vmatpush.bf16.msra.mxu0 %v5791
  %5835 = vmatpush.bf16.msra.mxu0 %v5789
  %5836 = vmatmul.bf16.gmra.mxu0 %v5813
  %v5837 = vpop.f32.mrf.mxu0
  %v5838 = vadd.f32 0.0, %v5837
  %v5839 = vpop.f32.mrf.mxu0
  %5840 = vdwg.mxu0
  %v5841 = vadd.f32 %v5736, %v5825
  %v5842 = vadd.f32 %v5737, %v5838
  %s5843 = scalar_lea.vmem %s5, 2592
  %v5844 = vld [vmem:[%s5843] sm:$0xff]
  %v5845 = vld [vmem:[%s5843 + $0x8] sm:$0xff]
  %v5846 = vld [vmem:[%s5843 + $0x10] sm:$0xff]
  %v5847 = vld [vmem:[%s5843 + $0x18] sm:$0xff]
  %v5848 = vld [vmem:[%s5843 + $0x20] sm:$0xff]
  %v5849 = vld [vmem:[%s5843 + $0x28] sm:$0xff]
  %v5850 = vld [vmem:[%s5843 + $0x30] sm:$0xff]
  %v5851 = vld [vmem:[%s5843 + $0x38] sm:$0xff]
  %v5852 = vld [vmem:[%s5843 + $0x40] sm:$0xff]
  %v5853 = vld [vmem:[%s5843 + $0x48] sm:$0xff]
  %v5854 = vld [vmem:[%s5843 + $0x50] sm:$0xff]
  %v5855 = vld [vmem:[%s5843 + $0x58] sm:$0xff]
  %v5856 = vrot.slane %v5645, 1
  %v5869 = vunpack.c.l.b16 %v5844
  %v5870 = vunpack.c.h.b16 %v5844
  %v5871 = vunpack.c.l.b16 %v5845
  %v5872 = vunpack.c.h.b16 %v5845
  %v5873 = vunpack.c.l.b16 %v5846
  %v5874 = vunpack.c.h.b16 %v5846
  %v5875 = vunpack.c.l.b16 %v5847
  %v5876 = vunpack.c.h.b16 %v5847
  %v5877 = vunpack.c.l.b16 %v5848
  %v5878 = vunpack.c.h.b16 %v5848
  %v5879 = vunpack.c.l.b16 %v5849
  %v5880 = vunpack.c.h.b16 %v5849
  %v5881 = vunpack.c.l.b16 %v5850
  %v5882 = vunpack.c.h.b16 %v5850
  %v5883 = vunpack.c.l.b16 %v5851
  %v5884 = vunpack.c.h.b16 %v5851
  %v5885 = vunpack.c.l.b16 %v5852
  %v5886 = vunpack.c.h.b16 %v5852
  %v5887 = vunpack.c.l.b16 %v5853
  %v5888 = vunpack.c.h.b16 %v5853
  %v5889 = vunpack.c.l.b16 %v5854
  %v5890 = vunpack.c.h.b16 %v5854
  %v5891 = vunpack.c.l.b16 %v5855
  %v5892 = vunpack.c.h.b16 %v5855
  %v5893 = vpack.c.b16 %v5871, %v5869
  %v5894 = vpack.c.b16 %v5872, %v5870
  %v5895 = vpack.c.b16 %v5875, %v5873
  %v5896 = vpack.c.b16 %v5876, %v5874
  %v5897 = vpack.c.b16 %v5879, %v5877
  %v5898 = vpack.c.b16 %v5880, %v5878
  %v5899 = vpack.c.b16 %v5883, %v5881
  %v5900 = vpack.c.b16 %v5884, %v5882
  %v5901 = vpack.c.b16 %v5887, %v5885
  %v5902 = vpack.c.b16 %v5888, %v5886
  %v5903 = vpack.c.b16 %v5891, %v5889
  %v5904 = vpack.c.b16 %v5892, %v5890
  %v5918 = vsel %vm3087, %v5856, 0
  %5920 = vmatpush.bf16.msra.mxu0 0
  %5921 = vmatpush.bf16.msra.mxu0 0
  %5922 = vmatpush.bf16.msra.mxu0 %v5903
  %5923 = vmatpush.bf16.msra.mxu0 %v5901
  %5924 = vmatpush.bf16.msra.mxu0 %v5899
  %5925 = vmatpush.bf16.msra.mxu0 %v5897
  %5926 = vmatpush.bf16.msra.mxu0 %v5895
  %5927 = vmatpush.bf16.msra.mxu0 %v5893
  %5928 = vmatmul.bf16.gmra.mxu0 %v5918
  %v5929 = vpop.f32.mrf.mxu0
  %v5930 = vadd.f32 0.0, %v5929
  %v5931 = vpop.f32.mrf.mxu0
  %5932 = vdwg.mxu0
  %5933 = vmatpush.bf16.msra.mxu0 0
  %5934 = vmatpush.bf16.msra.mxu0 0
  %5935 = vmatpush.bf16.msra.mxu0 %v5904
  %5936 = vmatpush.bf16.msra.mxu0 %v5902
  %5937 = vmatpush.bf16.msra.mxu0 %v5900
  %5938 = vmatpush.bf16.msra.mxu0 %v5898
  %5939 = vmatpush.bf16.msra.mxu0 %v5896
  %5940 = vmatpush.bf16.msra.mxu0 %v5894
  %5941 = vmatmul.bf16.gmra.mxu0 %v5918
  %v5942 = vpop.f32.mrf.mxu0
  %v5943 = vadd.f32 0.0, %v5942
  %v5944 = vpop.f32.mrf.mxu0
  %5945 = vdwg.mxu0
  %v5946 = vadd.f32 %v5841, %v5930
  %v5947 = vadd.f32 %v5842, %v5943
  %s5948 = scalar_lea.vmem %s5, 2688
  %v5949 = vld [vmem:[%s5948] sm:$0xff]
  %v5950 = vld [vmem:[%s5948 + $0x8] sm:$0xff]
  %v5951 = vld [vmem:[%s5948 + $0x10] sm:$0xff]
  %v5952 = vld [vmem:[%s5948 + $0x18] sm:$0xff]
  %v5953 = vld [vmem:[%s5948 + $0x20] sm:$0xff]
  %v5954 = vld [vmem:[%s5948 + $0x28] sm:$0xff]
  %v5955 = vld [vmem:[%s5948 + $0x30] sm:$0xff]
  %v5956 = vld [vmem:[%s5948 + $0x38] sm:$0xff]
  %v5957 = vld [vmem:[%s5948 + $0x40] sm:$0xff]
  %v5958 = vld [vmem:[%s5948 + $0x48] sm:$0xff]
  %v5959 = vld [vmem:[%s5948 + $0x50] sm:$0xff]
  %v5960 = vld [vmem:[%s5948 + $0x58] sm:$0xff]
  %v5961 = vrot.slane %v5643, 2
  %v5974 = vunpack.c.l.b16 %v5949
  %v5975 = vunpack.c.h.b16 %v5949
  %v5976 = vunpack.c.l.b16 %v5950
  %v5977 = vunpack.c.h.b16 %v5950
  %v5978 = vunpack.c.l.b16 %v5951
  %v5979 = vunpack.c.h.b16 %v5951
  %v5980 = vunpack.c.l.b16 %v5952
  %v5981 = vunpack.c.h.b16 %v5952
  %v5982 = vunpack.c.l.b16 %v5953
  %v5983 = vunpack.c.h.b16 %v5953
  %v5984 = vunpack.c.l.b16 %v5954
  %v5985 = vunpack.c.h.b16 %v5954
  %v5986 = vunpack.c.l.b16 %v5955
  %v5987 = vunpack.c.h.b16 %v5955
  %v5988 = vunpack.c.l.b16 %v5956
  %v5989 = vunpack.c.h.b16 %v5956
  %v5990 = vunpack.c.l.b16 %v5957
  %v5991 = vunpack.c.h.b16 %v5957
  %v5992 = vunpack.c.l.b16 %v5958
  %v5993 = vunpack.c.h.b16 %v5958
  %v5994 = vunpack.c.l.b16 %v5959
  %v5995 = vunpack.c.h.b16 %v5959
  %v5996 = vunpack.c.l.b16 %v5960
  %v5997 = vunpack.c.h.b16 %v5960
  %v5998 = vpack.c.b16 %v5976, %v5974
  %v5999 = vpack.c.b16 %v5977, %v5975
  %v6000 = vpack.c.b16 %v5980, %v5978
  %v6001 = vpack.c.b16 %v5981, %v5979
  %v6002 = vpack.c.b16 %v5984, %v5982
  %v6003 = vpack.c.b16 %v5985, %v5983
  %v6004 = vpack.c.b16 %v5988, %v5986
  %v6005 = vpack.c.b16 %v5989, %v5987
  %v6006 = vpack.c.b16 %v5992, %v5990
  %v6007 = vpack.c.b16 %v5993, %v5991
  %v6008 = vpack.c.b16 %v5996, %v5994
  %v6009 = vpack.c.b16 %v5997, %v5995
  %v6023 = vsel %vm3087, %v5961, 0
  %6025 = vmatpush.bf16.msra.mxu0 0
  %6026 = vmatpush.bf16.msra.mxu0 0
  %6027 = vmatpush.bf16.msra.mxu0 %v6008
  %6028 = vmatpush.bf16.msra.mxu0 %v6006
  %6029 = vmatpush.bf16.msra.mxu0 %v6004
  %6030 = vmatpush.bf16.msra.mxu0 %v6002
  %6031 = vmatpush.bf16.msra.mxu0 %v6000
  %6032 = vmatpush.bf16.msra.mxu0 %v5998
  %6033 = vmatmul.bf16.gmra.mxu0 %v6023
  %v6034 = vpop.f32.mrf.mxu0
  %v6035 = vadd.f32 0.0, %v6034
  %v6036 = vpop.f32.mrf.mxu0
  %6037 = vdwg.mxu0
  %6038 = vmatpush.bf16.msra.mxu0 0
  %6039 = vmatpush.bf16.msra.mxu0 0
  %6040 = vmatpush.bf16.msra.mxu0 %v6009
  %6041 = vmatpush.bf16.msra.mxu0 %v6007
  %6042 = vmatpush.bf16.msra.mxu0 %v6005
  %6043 = vmatpush.bf16.msra.mxu0 %v6003
  %6044 = vmatpush.bf16.msra.mxu0 %v6001
  %6045 = vmatpush.bf16.msra.mxu0 %v5999
  %6046 = vmatmul.bf16.gmra.mxu0 %v6023
  %v6047 = vpop.f32.mrf.mxu0
  %v6048 = vadd.f32 0.0, %v6047
  %v6049 = vpop.f32.mrf.mxu0
  %6050 = vdwg.mxu0
  %v6051 = vadd.f32 %v5946, %v6035
  %v6052 = vadd.f32 %v5947, %v6048
  %s6053 = scalar_lea.vmem %s5, 2784
  %v6054 = vld [vmem:[%s6053] sm:$0xff]
  %v6055 = vld [vmem:[%s6053 + $0x8] sm:$0xff]
  %v6056 = vld [vmem:[%s6053 + $0x10] sm:$0xff]
  %v6057 = vld [vmem:[%s6053 + $0x18] sm:$0xff]
  %v6058 = vld [vmem:[%s6053 + $0x20] sm:$0xff]
  %v6059 = vld [vmem:[%s6053 + $0x28] sm:$0xff]
  %v6060 = vld [vmem:[%s6053 + $0x30] sm:$0xff]
  %v6061 = vld [vmem:[%s6053 + $0x38] sm:$0xff]
  %v6062 = vld [vmem:[%s6053 + $0x40] sm:$0xff]
  %v6063 = vld [vmem:[%s6053 + $0x48] sm:$0xff]
  %v6064 = vld [vmem:[%s6053 + $0x50] sm:$0xff]
  %v6065 = vld [vmem:[%s6053 + $0x58] sm:$0xff]
  %v6066 = vrot.slane %v5645, 2
  %v6079 = vunpack.c.l.b16 %v6054
  %v6080 = vunpack.c.h.b16 %v6054
  %v6081 = vunpack.c.l.b16 %v6055
  %v6082 = vunpack.c.h.b16 %v6055
  %v6083 = vunpack.c.l.b16 %v6056
  %v6084 = vunpack.c.h.b16 %v6056
  %v6085 = vunpack.c.l.b16 %v6057
  %v6086 = vunpack.c.h.b16 %v6057
  %v6087 = vunpack.c.l.b16 %v6058
  %v6088 = vunpack.c.h.b16 %v6058
  %v6089 = vunpack.c.l.b16 %v6059
  %v6090 = vunpack.c.h.b16 %v6059
  %v6091 = vunpack.c.l.b16 %v6060
  %v6092 = vunpack.c.h.b16 %v6060
  %v6093 = vunpack.c.l.b16 %v6061
  %v6094 = vunpack.c.h.b16 %v6061
  %v6095 = vunpack.c.l.b16 %v6062
  %v6096 = vunpack.c.h.b16 %v6062
  %v6097 = vunpack.c.l.b16 %v6063
  %v6098 = vunpack.c.h.b16 %v6063
  %v6099 = vunpack.c.l.b16 %v6064
  %v6100 = vunpack.c.h.b16 %v6064
  %v6101 = vunpack.c.l.b16 %v6065
  %v6102 = vunpack.c.h.b16 %v6065
  %v6103 = vpack.c.b16 %v6081, %v6079
  %v6104 = vpack.c.b16 %v6082, %v6080
  %v6105 = vpack.c.b16 %v6085, %v6083
  %v6106 = vpack.c.b16 %v6086, %v6084
  %v6107 = vpack.c.b16 %v6089, %v6087
  %v6108 = vpack.c.b16 %v6090, %v6088
  %v6109 = vpack.c.b16 %v6093, %v6091
  %v6110 = vpack.c.b16 %v6094, %v6092
  %v6111 = vpack.c.b16 %v6097, %v6095
  %v6112 = vpack.c.b16 %v6098, %v6096
  %v6113 = vpack.c.b16 %v6101, %v6099
  %v6114 = vpack.c.b16 %v6102, %v6100
  %v6128 = vsel %vm3087, %v6066, 0
  %6130 = vmatpush.bf16.msra.mxu0 0
  %6131 = vmatpush.bf16.msra.mxu0 0
  %6132 = vmatpush.bf16.msra.mxu0 %v6113
  %6133 = vmatpush.bf16.msra.mxu0 %v6111
  %6134 = vmatpush.bf16.msra.mxu0 %v6109
  %6135 = vmatpush.bf16.msra.mxu0 %v6107
  %6136 = vmatpush.bf16.msra.mxu0 %v6105
  %6137 = vmatpush.bf16.msra.mxu0 %v6103
  %6138 = vmatmul.bf16.gmra.mxu0 %v6128
  %v6139 = vpop.f32.mrf.mxu0
  %v6140 = vadd.f32 0.0, %v6139
  %v6141 = vpop.f32.mrf.mxu0
  %6142 = vdwg.mxu0
  %6143 = vmatpush.bf16.msra.mxu0 0
  %6144 = vmatpush.bf16.msra.mxu0 0
  %6145 = vmatpush.bf16.msra.mxu0 %v6114
  %6146 = vmatpush.bf16.msra.mxu0 %v6112
  %6147 = vmatpush.bf16.msra.mxu0 %v6110
  %6148 = vmatpush.bf16.msra.mxu0 %v6108
  %6149 = vmatpush.bf16.msra.mxu0 %v6106
  %6150 = vmatpush.bf16.msra.mxu0 %v6104
  %6151 = vmatmul.bf16.gmra.mxu0 %v6128
  %v6152 = vpop.f32.mrf.mxu0
  %v6153 = vadd.f32 0.0, %v6152
  %v6154 = vpop.f32.mrf.mxu0
  %6155 = vdwg.mxu0
  %v6156 = vadd.f32 %v6051, %v6140
  %v6157 = vadd.f32 %v6052, %v6153
  %s6158 = scalar_lea.vmem %s5, 2880
  %v6159 = vld [vmem:[%s6158] sm:$0xff]
  %v6160 = vld [vmem:[%s6158 + $0x8] sm:$0xff]
  %v6161 = vld [vmem:[%s6158 + $0x10] sm:$0xff]
  %v6162 = vld [vmem:[%s6158 + $0x18] sm:$0xff]
  %v6163 = vld [vmem:[%s6158 + $0x20] sm:$0xff]
  %v6164 = vld [vmem:[%s6158 + $0x28] sm:$0xff]
  %v6165 = vld [vmem:[%s6158 + $0x30] sm:$0xff]
  %v6166 = vld [vmem:[%s6158 + $0x38] sm:$0xff]
  %v6167 = vld [vmem:[%s6158 + $0x40] sm:$0xff]
  %v6168 = vld [vmem:[%s6158 + $0x48] sm:$0xff]
  %v6169 = vld [vmem:[%s6158 + $0x50] sm:$0xff]
  %v6170 = vld [vmem:[%s6158 + $0x58] sm:$0xff]
  %v6171 = vrot.slane %v5643, 3
  %v6184 = vunpack.c.l.b16 %v6159
  %v6185 = vunpack.c.h.b16 %v6159
  %v6186 = vunpack.c.l.b16 %v6160
  %v6187 = vunpack.c.h.b16 %v6160
  %v6188 = vunpack.c.l.b16 %v6161
  %v6189 = vunpack.c.h.b16 %v6161
  %v6190 = vunpack.c.l.b16 %v6162
  %v6191 = vunpack.c.h.b16 %v6162
  %v6192 = vunpack.c.l.b16 %v6163
  %v6193 = vunpack.c.h.b16 %v6163
  %v6194 = vunpack.c.l.b16 %v6164
  %v6195 = vunpack.c.h.b16 %v6164
  %v6196 = vunpack.c.l.b16 %v6165
  %v6197 = vunpack.c.h.b16 %v6165
  %v6198 = vunpack.c.l.b16 %v6166
  %v6199 = vunpack.c.h.b16 %v6166
  %v6200 = vunpack.c.l.b16 %v6167
  %v6201 = vunpack.c.h.b16 %v6167
  %v6202 = vunpack.c.l.b16 %v6168
  %v6203 = vunpack.c.h.b16 %v6168
  %v6204 = vunpack.c.l.b16 %v6169
  %v6205 = vunpack.c.h.b16 %v6169
  %v6206 = vunpack.c.l.b16 %v6170
  %v6207 = vunpack.c.h.b16 %v6170
  %v6208 = vpack.c.b16 %v6186, %v6184
  %v6209 = vpack.c.b16 %v6187, %v6185
  %v6210 = vpack.c.b16 %v6190, %v6188
  %v6211 = vpack.c.b16 %v6191, %v6189
  %v6212 = vpack.c.b16 %v6194, %v6192
  %v6213 = vpack.c.b16 %v6195, %v6193
  %v6214 = vpack.c.b16 %v6198, %v6196
  %v6215 = vpack.c.b16 %v6199, %v6197
  %v6216 = vpack.c.b16 %v6202, %v6200
  %v6217 = vpack.c.b16 %v6203, %v6201
  %v6218 = vpack.c.b16 %v6206, %v6204
  %v6219 = vpack.c.b16 %v6207, %v6205
  %v6233 = vsel %vm3087, %v6171, 0
  %6235 = vmatpush.bf16.msra.mxu0 0
  %6236 = vmatpush.bf16.msra.mxu0 0
  %6237 = vmatpush.bf16.msra.mxu0 %v6218
  %6238 = vmatpush.bf16.msra.mxu0 %v6216
  %6239 = vmatpush.bf16.msra.mxu0 %v6214
  %6240 = vmatpush.bf16.msra.mxu0 %v6212
  %6241 = vmatpush.bf16.msra.mxu0 %v6210
  %6242 = vmatpush.bf16.msra.mxu0 %v6208
  %6243 = vmatmul.bf16.gmra.mxu0 %v6233
  %v6244 = vpop.f32.mrf.mxu0
  %v6245 = vadd.f32 0.0, %v6244
  %v6246 = vpop.f32.mrf.mxu0
  %6247 = vdwg.mxu0
  %6248 = vmatpush.bf16.msra.mxu0 0
  %6249 = vmatpush.bf16.msra.mxu0 0
  %6250 = vmatpush.bf16.msra.mxu0 %v6219
  %6251 = vmatpush.bf16.msra.mxu0 %v6217
  %6252 = vmatpush.bf16.msra.mxu0 %v6215
  %6253 = vmatpush.bf16.msra.mxu0 %v6213
  %6254 = vmatpush.bf16.msra.mxu0 %v6211
  %6255 = vmatpush.bf16.msra.mxu0 %v6209
  %6256 = vmatmul.bf16.gmra.mxu0 %v6233
  %v6257 = vpop.f32.mrf.mxu0
  %v6258 = vadd.f32 0.0, %v6257
  %v6259 = vpop.f32.mrf.mxu0
  %6260 = vdwg.mxu0
  %v6261 = vadd.f32 %v6156, %v6245
  %v6262 = vadd.f32 %v6157, %v6258
  %s6263 = scalar_lea.vmem %s5, 2976
  %v6264 = vld [vmem:[%s6263] sm:$0xff]
  %v6265 = vld [vmem:[%s6263 + $0x8] sm:$0xff]
  %v6266 = vld [vmem:[%s6263 + $0x10] sm:$0xff]
  %v6267 = vld [vmem:[%s6263 + $0x18] sm:$0xff]
  %v6268 = vld [vmem:[%s6263 + $0x20] sm:$0xff]
  %v6269 = vld [vmem:[%s6263 + $0x28] sm:$0xff]
  %v6270 = vld [vmem:[%s6263 + $0x30] sm:$0xff]
  %v6271 = vld [vmem:[%s6263 + $0x38] sm:$0xff]
  %v6272 = vld [vmem:[%s6263 + $0x40] sm:$0xff]
  %v6273 = vld [vmem:[%s6263 + $0x48] sm:$0xff]
  %v6274 = vld [vmem:[%s6263 + $0x50] sm:$0xff]
  %v6275 = vld [vmem:[%s6263 + $0x58] sm:$0xff]
  %v6276 = vrot.slane %v5645, 3
  %v6289 = vunpack.c.l.b16 %v6264
  %v6290 = vunpack.c.h.b16 %v6264
  %v6291 = vunpack.c.l.b16 %v6265
  %v6292 = vunpack.c.h.b16 %v6265
  %v6293 = vunpack.c.l.b16 %v6266
  %v6294 = vunpack.c.h.b16 %v6266
  %v6295 = vunpack.c.l.b16 %v6267
  %v6296 = vunpack.c.h.b16 %v6267
  %v6297 = vunpack.c.l.b16 %v6268
  %v6298 = vunpack.c.h.b16 %v6268
  %v6299 = vunpack.c.l.b16 %v6269
  %v6300 = vunpack.c.h.b16 %v6269
  %v6301 = vunpack.c.l.b16 %v6270
  %v6302 = vunpack.c.h.b16 %v6270
  %v6303 = vunpack.c.l.b16 %v6271
  %v6304 = vunpack.c.h.b16 %v6271
  %v6305 = vunpack.c.l.b16 %v6272
  %v6306 = vunpack.c.h.b16 %v6272
  %v6307 = vunpack.c.l.b16 %v6273
  %v6308 = vunpack.c.h.b16 %v6273
  %v6309 = vunpack.c.l.b16 %v6274
  %v6310 = vunpack.c.h.b16 %v6274
  %v6311 = vunpack.c.l.b16 %v6275
  %v6312 = vunpack.c.h.b16 %v6275
  %v6313 = vpack.c.b16 %v6291, %v6289
  %v6314 = vpack.c.b16 %v6292, %v6290
  %v6315 = vpack.c.b16 %v6295, %v6293
  %v6316 = vpack.c.b16 %v6296, %v6294
  %v6317 = vpack.c.b16 %v6299, %v6297
  %v6318 = vpack.c.b16 %v6300, %v6298
  %v6319 = vpack.c.b16 %v6303, %v6301
  %v6320 = vpack.c.b16 %v6304, %v6302
  %v6321 = vpack.c.b16 %v6307, %v6305
  %v6322 = vpack.c.b16 %v6308, %v6306
  %v6323 = vpack.c.b16 %v6311, %v6309
  %v6324 = vpack.c.b16 %v6312, %v6310
  %v6338 = vsel %vm3087, %v6276, 0
  %6340 = vmatpush.bf16.msra.mxu0 0
  %6341 = vmatpush.bf16.msra.mxu0 0
  %6342 = vmatpush.bf16.msra.mxu0 %v6323
  %6343 = vmatpush.bf16.msra.mxu0 %v6321
  %6344 = vmatpush.bf16.msra.mxu0 %v6319
  %6345 = vmatpush.bf16.msra.mxu0 %v6317
  %6346 = vmatpush.bf16.msra.mxu0 %v6315
  %6347 = vmatpush.bf16.msra.mxu0 %v6313
  %6348 = vmatmul.bf16.gmra.mxu0 %v6338
  %v6349 = vpop.f32.mrf.mxu0
  %v6350 = vadd.f32 0.0, %v6349
  %v6351 = vpop.f32.mrf.mxu0
  %6352 = vdwg.mxu0
  %6353 = vmatpush.bf16.msra.mxu0 0
  %6354 = vmatpush.bf16.msra.mxu0 0
  %6355 = vmatpush.bf16.msra.mxu0 %v6324
  %6356 = vmatpush.bf16.msra.mxu0 %v6322
  %6357 = vmatpush.bf16.msra.mxu0 %v6320
  %6358 = vmatpush.bf16.msra.mxu0 %v6318
  %6359 = vmatpush.bf16.msra.mxu0 %v6316
  %6360 = vmatpush.bf16.msra.mxu0 %v6314
  %6361 = vmatmul.bf16.gmra.mxu0 %v6338
  %v6362 = vpop.f32.mrf.mxu0
  %v6363 = vadd.f32 0.0, %v6362
  %v6364 = vpop.f32.mrf.mxu0
  %6365 = vdwg.mxu0
  %v6366 = vadd.f32 %v6261, %v6350
  %v6367 = vadd.f32 %v6262, %v6363
  %v6368 = vld [vmem:[%s6] sm:$0x3]
  %v6370 = vperm.slane %v6368, 0
  %v6371 = vperm.slane %v6368, 1
  %v6374 = vadd.f32 %v6366, %v6370
  %v6375 = vadd.f32 %v6367, %v6371
  %v6376 = vmax.f32 %v6374, 0.0
  %v6377 = vmax.f32 %v6375, 0.0
  %v6378 = vpack.c.bf16 %v6376, %v6376
  %v6379 = vpack.c.bf16 %v6377, %v6377
  %v6380 = vld [vmem:[%s7] sm:$0xf]
  %v6381 = vld [vmem:[%s7 + $0x4] sm:$0xf]
  %v6382 = vld [vmem:[%s7 + $0x8] sm:$0xf]
  %v6383 = vld [vmem:[%s7 + $0xc] sm:$0xf]
  %v6384 = vld [vmem:[%s7 + $0x10] sm:$0xf]
  %v6385 = vld [vmem:[%s7 + $0x14] sm:$0xf]
  %v6386 = vld [vmem:[%s7 + $0x18] sm:$0xf]
  %v6387 = vld [vmem:[%s7 + $0x1c] sm:$0xf]
  %v6388 = vld [vmem:[%s7 + $0x20] sm:$0xf]
  %v6389 = vld [vmem:[%s7 + $0x24] sm:$0xf]
  %v6390 = vld [vmem:[%s7 + $0x28] sm:$0xf]
  %v6391 = vld [vmem:[%s7 + $0x2c] sm:$0xf]
  %v6392 = vld [vmem:[%s7 + $0x30] sm:$0xf]
  %v6393 = vld [vmem:[%s7 + $0x34] sm:$0xf]
  %v6394 = vld [vmem:[%s7 + $0x38] sm:$0xf]
  %v6395 = vld [vmem:[%s7 + $0x3c] sm:$0xf]
  %v6396 = vld [vmem:[%s7 + $0x40] sm:$0xf]
  %v6397 = vld [vmem:[%s7 + $0x44] sm:$0xf]
  %v6398 = vld [vmem:[%s7 + $0x48] sm:$0xf]
  %v6399 = vld [vmem:[%s7 + $0x4c] sm:$0xf]
  %v6400 = vld [vmem:[%s7 + $0x50] sm:$0xf]
  %v6401 = vld [vmem:[%s7 + $0x54] sm:$0xf]
  %v6402 = vld [vmem:[%s7 + $0x58] sm:$0xf]
  %v6403 = vld [vmem:[%s7 + $0x5c] sm:$0xf]
  %v6404 = vld [vmem:[%s7 + $0x60] sm:$0xf]
  %v6405 = vld [vmem:[%s7 + $0x64] sm:$0xf]
  %v6406 = vld [vmem:[%s7 + $0x68] sm:$0xf]
  %v6407 = vld [vmem:[%s7 + $0x6c] sm:$0xf]
  %v6408 = vld [vmem:[%s7 + $0x70] sm:$0xf]
  %v6409 = vld [vmem:[%s7 + $0x74] sm:$0xf]
  %v6410 = vld [vmem:[%s7 + $0x78] sm:$0xf]
  %v6411 = vld [vmem:[%s7 + $0x7c] sm:$0xf]
  %v6412 = vld [vmem:[%s8] sm:$0x1]
  %v6445 = vunpack.c.l.b16 %v6380
  %v6446 = vunpack.c.l.b16 %v6381
  %v6447 = vunpack.c.l.b16 %v6382
  %v6448 = vunpack.c.l.b16 %v6383
  %v6449 = vunpack.c.l.b16 %v6384
  %v6450 = vunpack.c.l.b16 %v6385
  %v6451 = vunpack.c.l.b16 %v6386
  %v6452 = vunpack.c.l.b16 %v6387
  %v6453 = vunpack.c.l.b16 %v6388
  %v6454 = vunpack.c.l.b16 %v6389
  %v6455 = vunpack.c.l.b16 %v6390
  %v6456 = vunpack.c.l.b16 %v6391
  %v6457 = vunpack.c.l.b16 %v6392
  %v6458 = vunpack.c.l.b16 %v6393
  %v6459 = vunpack.c.l.b16 %v6394
  %v6460 = vunpack.c.l.b16 %v6395
  %v6461 = vunpack.c.l.b16 %v6396
  %v6462 = vunpack.c.l.b16 %v6397
  %v6463 = vunpack.c.l.b16 %v6398
  %v6464 = vunpack.c.l.b16 %v6399
  %v6465 = vunpack.c.l.b16 %v6400
  %v6466 = vunpack.c.l.b16 %v6401
  %v6467 = vunpack.c.l.b16 %v6402
  %v6468 = vunpack.c.l.b16 %v6403
  %v6469 = vunpack.c.l.b16 %v6404
  %v6470 = vunpack.c.l.b16 %v6405
  %v6471 = vunpack.c.l.b16 %v6406
  %v6472 = vunpack.c.l.b16 %v6407
  %v6473 = vunpack.c.l.b16 %v6408
  %v6474 = vunpack.c.l.b16 %v6409
  %v6475 = vunpack.c.l.b16 %v6410
  %v6476 = vunpack.c.l.b16 %v6411
  %v6477 = vpack.c.b16 %v6446, %v6445
  %v6478 = vpack.c.b16 %v6448, %v6447
  %v6479 = vpack.c.b16 %v6450, %v6449
  %v6480 = vpack.c.b16 %v6452, %v6451
  %v6481 = vpack.c.b16 %v6454, %v6453
  %v6482 = vpack.c.b16 %v6456, %v6455
  %v6483 = vpack.c.b16 %v6458, %v6457
  %v6484 = vpack.c.b16 %v6460, %v6459
  %v6485 = vpack.c.b16 %v6462, %v6461
  %v6486 = vpack.c.b16 %v6464, %v6463
  %v6487 = vpack.c.b16 %v6466, %v6465
  %v6488 = vpack.c.b16 %v6468, %v6467
  %v6489 = vpack.c.b16 %v6470, %v6469
  %v6490 = vpack.c.b16 %v6472, %v6471
  %v6491 = vpack.c.b16 %v6474, %v6473
  %v6492 = vpack.c.b16 %v6476, %v6475
  %6509 = vmatpush.bf16.msra.mxu0 %v6484
  %6510 = vmatpush.bf16.msra.mxu0 %v6483
  %6511 = vmatpush.bf16.msra.mxu0 %v6482
  %6512 = vmatpush.bf16.msra.mxu0 %v6481
  %6513 = vmatpush.bf16.msra.mxu0 %v6480
  %6514 = vmatpush.bf16.msra.mxu0 %v6479
  %6515 = vmatpush.bf16.msra.mxu0 %v6478
  %6516 = vmatpush.bf16.msra.mxu0 %v6477
  %6517 = vmatmul.bf16.gmra.mxu0 %v6378
  %v6518 = vpop.f32.mrf.mxu0
  %v6519 = vadd.f32 %v6412, %v6518
  %v6520 = vpop.f32.mrf.mxu0
  %6521 = vdwg.mxu0
  %6522 = vmatpush.bf16.msra.mxu0 %v6492
  %6523 = vmatpush.bf16.msra.mxu0 %v6491
  %6524 = vmatpush.bf16.msra.mxu0 %v6490
  %6525 = vmatpush.bf16.msra.mxu0 %v6489
  %6526 = vmatpush.bf16.msra.mxu0 %v6488
  %6527 = vmatpush.bf16.msra.mxu0 %v6487
  %6528 = vmatpush.bf16.msra.mxu0 %v6486
  %6529 = vmatpush.bf16.msra.mxu0 %v6485
  %6530 = vmatmul.bf16.gmra.mxu0 %v6379
  %v6531 = vpop.f32.mrf.mxu0
  %v6532 = vadd.f32 %v6519, %v6531
  %v6533 = vpop.f32.mrf.mxu0
  %6534 = vdwg.mxu0
  %6535 = vst [vmem:[%s9] sm:$0x1] %v6532
  // Predicated region
  $region38: #{q_module_forward.1} parent=0 // pred_check
    _
  $region39: #{q_module_forward.1} parent=0 // pred_check_branch
    %6537 = sbr.rel (0) target = $region41
  $region40: #{q_module_forward.1} parent=0 // pred_region
    _
  $region41: #{q_module_forward.1} parent=0 // pred_fallthru
    _
  // Predicated region
  $region42: #{q_module_forward.1} parent=0 // pred_check
    _
  $region43: #{q_module_forward.1} parent=0 // pred_check_branch
    %6539 = sbr.rel (0) target = $region45
  $region44: #{q_module_forward.1} parent=0 // pred_region
    _
  $region45: #{q_module_forward.1} parent=0 // pred_fallthru
    _

</llo_original>
